<compile_context>
chip_gen: v7x
topology: tpu7x:2x2x1
jax: 0.10.0
libtpu: 0.0.40
codegen_flags: <defaults>
</compile_context>

<pallas_src>
import functools

import jax
import jax.numpy as jnp
from jax import lax
from jax.experimental import pallas as pl
from jax.experimental.pallas import tpu as pltpu

_LANE = 128                       # channel padding multiple (lane width)
_RES_NONE, _RES_ADD, _RES_MATMUL = 0, 1, 2


def _round_up(x, m):
    return (x + m - 1) // m * m


# --------------------------------------------------------------------------
# Kernel: stride-1 KHxKW conv + folded-BN (+ fused shortcut) (+ ReLU)
# --------------------------------------------------------------------------
def _conv_bn_kernel(KH, KW, TR, relu, res_mode, *refs):
    """One (batch, row-strip) grid step.

    Refs (batch dim squeezed by BlockSpec):
      x_ref   : (Hin, Win, Cin)    bf16, full padded spatial extent for this n
      w_ref   : (KH*KW, Cin, Cout) bf16 taps, BN scale already folded in
      b_ref   : (1, Cout)          f32 folded BN bias
      [r_ref  : (TR, Wo, Cres)     bf16 residual strip]
      [wsc_ref: (Cres, Cout)       bf16 1x1 shortcut weight (BN folded)]
      [bsc_ref: (1, Cout)          f32 shortcut BN bias]
      o_ref   : (TR, Wo, Cout)
    """
    if res_mode == _RES_MATMUL:
        x_ref, w_ref, b_ref, r_ref, wsc_ref, bsc_ref, o_ref = refs
    elif res_mode == _RES_ADD:
        x_ref, w_ref, b_ref, r_ref, o_ref = refs
        wsc_ref = bsc_ref = None
    else:
        x_ref, w_ref, b_ref, o_ref = refs
        r_ref = wsc_ref = bsc_ref = None

    _, Wo, Cout = o_ref.shape
    Cin = x_ref.shape[-1]
    M = TR * Wo
    row0 = pl.multiple_of(pl.program_id(1) * TR, TR)

    acc = jnp.zeros((M, Cout), jnp.float32)
    for ky in range(KH):
        # Contiguous full-width row window; the only dynamic offset is on the
        # untiled leading H axis.  Slices / reshapes are done in f32 (layout
        # safe); the MXU operands are cast back to bf16 right before the dot.
        rows = x_ref[pl.ds(row0 + ky, TR), :, :].astype(jnp.float32)
        for kx in range(KW):
            tap = rows[:, kx:kx + Wo, :].reshape(M, Cin)
            acc += jnp.dot(tap.astype(jnp.bfloat16), w_ref[ky * KW + kx],
                           preferred_element_type=jnp.float32)
    acc += b_ref[...]                                        # folded BN bias

    if res_mode == _RES_MATMUL:                              # fused 1x1 shortcut
        res = r_ref[...].astype(jnp.float32).reshape(M, r_ref.shape[-1])
        acc += jnp.dot(res.astype(jnp.bfloat16), wsc_ref[...],
                       preferred_element_type=jnp.float32)
        acc += bsc_ref[...]
    elif res_mode == _RES_ADD:                               # identity shortcut
        acc += r_ref[...].astype(jnp.float32).reshape(M, Cout)

    if relu:
        acc = jnp.maximum(acc, 0.0)
    o_ref[...] = acc.reshape(TR, Wo, Cout).astype(o_ref.dtype)


# --------------------------------------------------------------------------
# pallas_call wrapper
# --------------------------------------------------------------------------
def _pick_rows(Ho, Wo, target_m=128, max_rows=32):
    """Largest divisor of Ho such that the matmul M = TR*Wo stays modest."""
    cap = max(1, min(Ho, max_rows, max(1, target_m // max(Wo, 1))))
    best = 1
    for t in range(1, cap + 1):
        if Ho % t == 0:
            best = t
    return best


def _conv_bn_call(x_in, w_taps, bias, *, KH, KW, Ho, Wo, relu, out_dtype,
                  residual=None, res_w=None, res_b=None):
    N, Hin, Win, Cin = x_in.shape
    KHW, _, Cout = w_taps.shape
    assert KHW == KH * KW and Hin == Ho + KH - 1 and Win == Wo + KW - 1

    TR = _pick_rows(Ho, Wo)
    n_strips = Ho // TR

    if residual is None:
        res_mode = _RES_NONE
    elif res_w is not None:
        res_mode = _RES_MATMUL
    else:
        res_mode = _RES_ADD

    # Input block = full padded spatial extent per batch element; its block
    # index does not depend on the strip axis, so it is DMA'd once per n.
    in_specs = [
        pl.BlockSpec((None, Hin, Win, Cin), lambda n, r: (n, 0, 0, 0)),
        pl.BlockSpec((KHW, Cin, Cout), lambda n, r: (0, 0, 0)),
        pl.BlockSpec((1, Cout), lambda n, r: (0, 0)),
    ]
    args = [x_in, w_taps, bias.reshape(1, Cout)]
    if res_mode != _RES_NONE:
        Cres = residual.shape[-1]
        in_specs.append(
            pl.BlockSpec((None, TR, Wo, Cres), lambda n, r: (n, r, 0, 0)))
        args.append(residual)
        if res_mode == _RES_MATMUL:
            in_specs.append(pl.BlockSpec((Cres, Cout), lambda n, r: (0, 0)))
            in_specs.append(pl.BlockSpec((1, Cout), lambda n, r: (0, 0)))
            args += [res_w, res_b.reshape(1, Cout)]

    out_spec = pl.BlockSpec((None, TR, Wo, Cout), lambda n, r: (n, r, 0, 0))
    kernel = functools.partial(_conv_bn_kernel, KH, KW, TR, relu, res_mode)

    # Advisory cost estimate + explicit VMEM budget (v7x: 64 MiB physical).
    flops = 2 * N * Ho * Wo * (KH * KW * Cin) * Cout
    if res_mode == _RES_MATMUL:
        flops += 2 * N * Ho * Wo * residual.shape[-1] * Cout
    out_bytes = N * Ho * Wo * Cout * jnp.dtype(out_dtype).itemsize
    bytes_accessed = out_bytes + sum(int(a.size) * a.dtype.itemsize for a in args)

    in_blk = Hin * Win * Cin * x_in.dtype.itemsize
    out_blk = TR * Wo * Cout * jnp.dtype(out_dtype).itemsize
    res_blk = (TR * Wo * residual.shape[-1] * residual.dtype.itemsize
               if residual is not None else 0)
    w_bytes = int(w_taps.size) * w_taps.dtype.itemsize
    vmem_need = 2 * (in_blk + out_blk + res_blk) + w_bytes + (2 << 20)
    vmem_limit = int(min(max(2 * vmem_need, 16 << 20), 48 << 20))

    return pl.pallas_call(
        kernel,
        out_shape=jax.ShapeDtypeStruct((N, Ho, Wo, Cout), out_dtype),
        grid_spec=pltpu.PrefetchScalarGridSpec(
            num_scalar_prefetch=0,
            grid=(N, n_strips),
            in_specs=in_specs,
            out_specs=out_spec,
        ),
        compiler_params=pltpu.CompilerParams(
            dimension_semantics=("parallel", "parallel"),
            vmem_limit_bytes=vmem_limit),
        cost_estimate=pl.CostEstimate(flops=int(flops), transcendentals=0,
                                      bytes_accessed=int(bytes_accessed)),
    )(*args)


# --------------------------------------------------------------------------
# Weight / BN preparation (wrapper side, tiny tensors)
# --------------------------------------------------------------------------
def _fold_bn(bn, eps=1e-5):
    gamma, beta, mean, var = bn
    scale = gamma / jnp.sqrt(var + eps)
    bias = beta - mean * scale
    return scale.astype(jnp.float32), bias.astype(jnp.float32)


def _pad_axis(a, axis, new_size):
    pad = [(0, 0)] * a.ndim
    pad[axis] = (0, new_size - a.shape[axis])
    return jnp.pad(a, pad)


def _prep_conv3x3_weights(w_oihw, scale, Cip, Cop):
    """torch OIHW -> (3, 3, Cip, Cop), channel-padded, BN scale folded in."""
    w = jnp.transpose(w_oihw, (2, 3, 1, 0)).astype(jnp.float32)    # (3,3,Ci,Co)
    w = w * scale[None, None, None, :]
    return _pad_axis(_pad_axis(w, 2, Cip), 3, Cop)


def _space_to_depth_weights(w33, Cip, Cop):
    """(3,3,Cip,Cop) stride-2 kernel -> (4, 4*Cip, Cop) stride-1 2x2 taps."""
    w = jnp.zeros((2, 2, 2, 2, Cip, Cop), jnp.float32)
    for ky in range(3):
        dy, py = divmod(ky, 2)
        for kx in range(3):
            dx, px = divmod(kx, 2)
            w = w.at[dy, dx, py, px].set(w33[ky, kx])
    return w.reshape(4, 4 * Cip, Cop)


# --------------------------------------------------------------------------
# BasicBlock forward
# --------------------------------------------------------------------------
def basic_block_forward(x_nchw, params, *, stride):
    """Pallas implementation of BasicBlock.forward (inference-mode BN).

    Input/output are NCHW to match the PyTorch module.
    """
    assert stride in (1, 2)
    N, Ci, H, W = x_nchw.shape
    Co = params["conv1_w"].shape[0]
    Cip, Cop = _round_up(Ci, _LANE), _round_up(Co, _LANE)
    Ho = (H - 1) // stride + 1
    Wo = (W - 1) // stride + 1
    out_dtype = x_nchw.dtype

    x = jnp.transpose(x_nchw, (0, 2, 3, 1))                  # NCHW -> NHWC
    xb = _pad_axis(x, 3, Cip).astype(jnp.bfloat16)           # pad C + bf16

    s1, b1 = _fold_bn(params["bn1"])
    s2, b2 = _fold_bn(params["bn2"])
    w1 = _prep_conv3x3_weights(params["conv1_w"], s1, Cip, Cop)
    w2 = _prep_conv3x3_weights(params["conv2_w"], s2, Cop, Cop)
    b1p = _pad_axis(b1, 0, Cop)
    b2p = _pad_axis(b2, 0, Cop)

    # ---- conv1 + bn1 + relu ------------------------------------------------
    if stride == 1:
        x1_in = jnp.pad(xb, ((0, 0), (1, 1), (1, 1), (0, 0)))
        w1_taps = w1.reshape(9, Cip, Cop)
        KH1 = KW1 = 3
    else:
        # Space-to-depth: stride-2 3x3 conv == stride-1 2x2 conv on 4*Cip ch.
        Hp, Wp = 2 * (Ho + 1), 2 * (Wo + 1)
        xp = jnp.pad(xb, ((0, 0), (1, Hp - H - 1), (1, Wp - W - 1), (0, 0)))
        x1_in = (xp.reshape(N, Hp // 2, 2, Wp // 2, 2, Cip)
                   .transpose(0, 1, 3, 2, 4, 5)
                   .reshape(N, Hp // 2, Wp // 2, 4 * Cip))
        w1_taps = _space_to_depth_weights(w1, Cip, Cop)
        KH1 = KW1 = 2

    y1 = _conv_bn_call(x1_in, w1_taps.astype(jnp.bfloat16), b1p,
                       KH=KH1, KW=KW1, Ho=Ho, Wo=Wo,
                       relu=True, out_dtype=jnp.bfloat16)

    # ---- conv2 + bn2 + shortcut + relu (single fused kernel) ----------------
    y1p = jnp.pad(y1, ((0, 0), (1, 1), (1, 1), (0, 0)))
    w2_taps = w2.reshape(9, Cop, Cop).astype(jnp.bfloat16)

    if "sc_conv_w" in params:                                 # 1x1 downsample
        ssc, bsc = _fold_bn(params["sc_bn"])
        wsc = params["sc_conv_w"][:, :, 0, 0].T.astype(jnp.float32) * ssc[None, :]
        wsc = _pad_axis(_pad_axis(wsc, 0, Cip), 1, Cop).astype(jnp.bfloat16)
        bscp = _pad_axis(bsc, 0, Cop)
        xs = xb[:, ::stride, ::stride, :]                     # (N, Ho, Wo, Cip)
        out = _conv_bn_call(y1p, w2_taps, b2p, KH=3, KW=3, Ho=Ho, Wo=Wo,
                            relu=True, out_dtype=out_dtype,
                            residual=xs, res_w=wsc, res_b=bscp)
    else:                                                     # identity shortcut
        assert stride == 1 and Cip == Cop
        out = _conv_bn_call(y1p, w2_taps, b2p, KH=3, KW=3, Ho=Ho, Wo=Wo,
                            relu=True, out_dtype=out_dtype,
                            residual=xb)

    out = out[..., :Co]
    return jnp.transpose(out, (0, 3, 1, 2))                   # NHWC -> NCHW


# --------------------------------------------------------------------------
# Pure-JAX reference (for correctness check)
# --------------------------------------------------------------------------
def _ref_conv(x, w, stride, pad):
    return lax.conv_general_dilated(
        x, w, (stride, stride), [(pad, pad), (pad, pad)],
        dimension_numbers=("NCHW", "OIHW", "NCHW"))


def _ref_bn(x, bn):
    gamma, beta, mean, var = bn
    sh = (1, -1, 1, 1)
    return (x - mean.reshape(sh)) / jnp.sqrt(var.reshape(sh) + 1e-5) \
        * gamma.reshape(sh) + beta.reshape(sh)


def basic_block_ref(x, params, *, stride):
    out = jax.nn.relu(_ref_bn(_ref_conv(x, params["conv1_w"], stride, 1),
                              params["bn1"]))
    out = _ref_bn(_ref_conv(out, params["conv2_w"], 1, 1), params["bn2"])
    if "sc_conv_w" in params:
        sc = _ref_bn(_ref_conv(x, params["sc_conv_w"], stride, 0),
                     params["sc_bn"])
    else:
        sc = x
    return jax.nn.relu(out + sc)


# --------------------------------------------------------------------------
# Main
# --------------------------------------------------------------------------
def _bn_params(key, c):
    k0, k1, k2, k3 = jax.random.split(key, 4)
    gamma = 1.0 + 0.1 * jax.random.normal(k0, (c,), jnp.float32)
    beta = 0.1 * jax.random.normal(k1, (c,), jnp.float32)
    mean = 0.1 * jax.random.normal(k2, (c,), jnp.float32)
    var = 1.0 + 0.5 * jax.random.uniform(k3, (c,), jnp.float32)
    return (gamma, beta, mean, var)


def _make_block_params(key, in_planes, planes, stride):
    ks = jax.random.split(key, 6)
    params = {
        "conv1_w": 0.1 * jax.random.normal(ks[0], (planes, in_planes, 3, 3),
                                           jnp.float32),
        "bn1": _bn_params(ks[1], planes),
        "conv2_w": 0.1 * jax.random.normal(ks[2], (planes, planes, 3, 3),
                                           jnp.float32),
        "bn2": _bn_params(ks[3], planes),
    }
    if stride != 1 or in_planes != planes:
        params["sc_conv_w"] = 0.1 * jax.random.normal(
            ks[4], (planes, in_planes, 1, 1), jnp.float32)
        params["sc_bn"] = _bn_params(ks[5], planes)
    return params


if __name__ == "__main__":
    key = jax.random.PRNGKey(0)
    configs = [
        # (N, in_planes, planes, H, W, stride)
        (2, 4, 8, 16, 16, 2),    # downsample (1x1 conv + BN) shortcut path
        (2, 8, 8, 16, 16, 1),    # identity shortcut path
    ]
    for i, (N, cin, cout, H, W, stride) in enumerate(configs):
        kp, kx = jax.random.split(jax.random.fold_in(key, i))
        params = _make_block_params(kp, cin, cout, stride)
        x = jax.random.normal(kx, (N, cin, H, W), jnp.float32)

        fwd = jax.jit(functools.partial(basic_block_forward, stride=stride))
        out = jax.block_until_ready(fwd(x, params))
        ref = jax.block_until_ready(basic_block_ref(x, params, stride=stride))

        Ho, Wo = (H - 1) // stride + 1, (W - 1) // stride + 1
        assert out.shape == ref.shape == (N, cout, Ho, Wo), (out.shape, ref.shape)
        err = float(jnp.max(jnp.abs(out - ref)))
        # bf16 matmul operands (f32 accumulation/epilogue) -> loose tolerance.
        assert jnp.allclose(out, ref, atol=5e-2, rtol=5e-2), err

    print("KERNEL_OK")
</pallas_src>

<mosaic_0001>
module attributes {stable_mosaic.version = 11 : i64} {
  func.func @_conv_bn_kernel(%arg0: i32, %arg1: i32, %arg2: memref<1x9x9x512xbf16, #tpu.memory_space<vmem>>, %arg3: memref<4x512x128xbf16, #tpu.memory_space<vmem>>, %arg4: memref<1x128xf32, #tpu.memory_space<vmem>>, %arg5: memref<1x8x8x128xbf16, #tpu.memory_space<vmem>>) attributes {dimension_semantics = [#tpu.dimension_semantics<parallel>, #tpu.dimension_semantics<parallel>], iteration_bounds = array<i64: 2, 1>, scalar_prefetch = 0 : i64, scratch_operands = 0 : i64, tpu.core_type = #tpu.core_type<tc>, window_params = [{transform_indices = @transform_0, window_bounds = array<i64: 1, 9, 9, 512>}, {pipeline_mode = #tpu.pipeline_mode<synchronous>, transform_indices = @transform_1, window_bounds = array<i64: 4, 512, 128>}, {pipeline_mode = #tpu.pipeline_mode<synchronous>, transform_indices = @transform_2, window_bounds = array<i64: 1, 128>}, {transform_indices = @transform_3, window_bounds = array<i64: 1, 8, 8, 128>}]} {
    %c8_i32 = arith.constant 8 : i32
    %0 = arith.muli %arg1, %c8_i32 : i32
    %1 = tpu.assume_multiple %0, 8 : i32
    %cst = arith.constant 0.000000e+00 : f32
    %2 = vector.broadcast %cst : f32 to vector<64x128xf32>
    %c0_i32 = arith.constant 0 : i32
    %3 = arith.addi %1, %c0_i32 : i32
    %c0 = arith.constant 0 : index
    %4 = arith.index_cast %3 : i32 to index
    %c0_0 = arith.constant 0 : index
    %c0_1 = arith.constant 0 : index
    %5 = vector.load %arg2[%c0, %4, %c0_0, %c0_1] : memref<1x9x9x512xbf16, #tpu.memory_space<vmem>>, vector<1x8x9x512xbf16>
    %6 = vector.shape_cast %5 : vector<1x8x9x512xbf16> to vector<8x9x512xbf16>
    %7 = arith.extf %6 : vector<8x9x512xbf16> to vector<8x9x512xf32>
    %8 = vector.extract_strided_slice %7 {offsets = [0, 0, 0], sizes = [8, 8, 512], strides = [1, 1, 1]} : vector<8x9x512xf32> to vector<8x8x512xf32>
    %9 = vector.shape_cast %8 : vector<8x8x512xf32> to vector<64x512xf32>
    %10 = arith.truncf %9 : vector<64x512xf32> to vector<64x512xbf16>
    %c0_2 = arith.constant 0 : index
    %c0_3 = arith.constant 0 : index
    %c0_4 = arith.constant 0 : index
    %11 = vector.load %arg3[%c0_2, %c0_3, %c0_4] : memref<4x512x128xbf16, #tpu.memory_space<vmem>>, vector<1x512x128xbf16>
    %12 = vector.shape_cast %11 : vector<1x512x128xbf16> to vector<512x128xbf16>
    %cst_5 = arith.constant dense<0.000000e+00> : vector<64x128xf32>
    %13 = tpu.matmul %10, %12, %cst_5 {dimension_numbers = #tpu.dot_dimension_numbers<[1], [0], [0], [1], [0, 0, 1, 1], [], []>} : vector<64x512xbf16>, vector<512x128xbf16>, vector<64x128xf32> -> vector<64x128xf32>
    %14 = arith.addf %2, %13 : vector<64x128xf32>
    %15 = vector.extract_strided_slice %7 {offsets = [0, 1, 0], sizes = [8, 8, 512], strides = [1, 1, 1]} : vector<8x9x512xf32> to vector<8x8x512xf32>
    %16 = vector.shape_cast %15 : vector<8x8x512xf32> to vector<64x512xf32>
    %17 = arith.truncf %16 : vector<64x512xf32> to vector<64x512xbf16>
    %c1 = arith.constant 1 : index
    %c0_6 = arith.constant 0 : index
    %c0_7 = arith.constant 0 : index
    %18 = vector.load %arg3[%c1, %c0_6, %c0_7] : memref<4x512x128xbf16, #tpu.memory_space<vmem>>, vector<1x512x128xbf16>
    %19 = vector.shape_cast %18 : vector<1x512x128xbf16> to vector<512x128xbf16>
    %cst_8 = arith.constant dense<0.000000e+00> : vector<64x128xf32>
    %20 = tpu.matmul %17, %19, %cst_8 {dimension_numbers = #tpu.dot_dimension_numbers<[1], [0], [0], [1], [0, 0, 1, 1], [], []>} : vector<64x512xbf16>, vector<512x128xbf16>, vector<64x128xf32> -> vector<64x128xf32>
    %21 = arith.addf %14, %20 : vector<64x128xf32>
    %c1_i32 = arith.constant 1 : i32
    %22 = arith.addi %1, %c1_i32 : i32
    %c0_9 = arith.constant 0 : index
    %23 = arith.index_cast %22 : i32 to index
    %c0_10 = arith.constant 0 : index
    %c0_11 = arith.constant 0 : index
    %24 = vector.load %arg2[%c0_9, %23, %c0_10, %c0_11] : memref<1x9x9x512xbf16, #tpu.memory_space<vmem>>, vector<1x8x9x512xbf16>
    %25 = vector.shape_cast %24 : vector<1x8x9x512xbf16> to vector<8x9x512xbf16>
    %26 = arith.extf %25 : vector<8x9x512xbf16> to vector<8x9x512xf32>
    %27 = vector.extract_strided_slice %26 {offsets = [0, 0, 0], sizes = [8, 8, 512], strides = [1, 1, 1]} : vector<8x9x512xf32> to vector<8x8x512xf32>
    %28 = vector.shape_cast %27 : vector<8x8x512xf32> to vector<64x512xf32>
    %29 = arith.truncf %28 : vector<64x512xf32> to vector<64x512xbf16>
    %c2 = arith.constant 2 : index
    %c0_12 = arith.constant 0 : index
    %c0_13 = arith.constant 0 : index
    %30 = vector.load %arg3[%c2, %c0_12, %c0_13] : memref<4x512x128xbf16, #tpu.memory_space<vmem>>, vector<1x512x128xbf16>
    %31 = vector.shape_cast %30 : vector<1x512x128xbf16> to vector<512x128xbf16>
    %cst_14 = arith.constant dense<0.000000e+00> : vector<64x128xf32>
    %32 = tpu.matmul %29, %31, %cst_14 {dimension_numbers = #tpu.dot_dimension_numbers<[1], [0], [0], [1], [0, 0, 1, 1], [], []>} : vector<64x512xbf16>, vector<512x128xbf16>, vector<64x128xf32> -> vector<64x128xf32>
    %33 = arith.addf %21, %32 : vector<64x128xf32>
    %34 = vector.extract_strided_slice %26 {offsets = [0, 1, 0], sizes = [8, 8, 512], strides = [1, 1, 1]} : vector<8x9x512xf32> to vector<8x8x512xf32>
    %35 = vector.shape_cast %34 : vector<8x8x512xf32> to vector<64x512xf32>
    %36 = arith.truncf %35 : vector<64x512xf32> to vector<64x512xbf16>
    %c3 = arith.constant 3 : index
    %c0_15 = arith.constant 0 : index
    %c0_16 = arith.constant 0 : index
    %37 = vector.load %arg3[%c3, %c0_15, %c0_16] : memref<4x512x128xbf16, #tpu.memory_space<vmem>>, vector<1x512x128xbf16>
    %38 = vector.shape_cast %37 : vector<1x512x128xbf16> to vector<512x128xbf16>
    %cst_17 = arith.constant dense<0.000000e+00> : vector<64x128xf32>
    %39 = tpu.matmul %36, %38, %cst_17 {dimension_numbers = #tpu.dot_dimension_numbers<[1], [0], [0], [1], [0, 0, 1, 1], [], []>} : vector<64x512xbf16>, vector<512x128xbf16>, vector<64x128xf32> -> vector<64x128xf32>
    %40 = arith.addf %33, %39 : vector<64x128xf32>
    %c0_18 = arith.constant 0 : index
    %c0_19 = arith.constant 0 : index
    %41 = vector.load %arg4[%c0_18, %c0_19] : memref<1x128xf32, #tpu.memory_space<vmem>>, vector<1x128xf32>
    %42 = vector.broadcast %41 : vector<1x128xf32> to vector<64x128xf32>
    %43 = arith.addf %40, %42 : vector<64x128xf32>
    %cst_20 = arith.constant 0.000000e+00 : f32
    %44 = vector.broadcast %cst_20 : f32 to vector<64x128xf32>
    %45 = arith.maximumf %43, %44 : vector<64x128xf32>
    %46 = vector.shape_cast %45 : vector<64x128xf32> to vector<8x8x128xf32>
    %47 = arith.truncf %46 : vector<8x8x128xf32> to vector<8x8x128xbf16>
    %c0_21 = arith.constant 0 : index
    %c0_22 = arith.constant 0 : index
    %c0_23 = arith.constant 0 : index
    %c0_24 = arith.constant 0 : index
    %48 = vector.load %arg5[%c0_21, %c0_22, %c0_23, %c0_24] : memref<1x8x8x128xbf16, #tpu.memory_space<vmem>>, vector<1x8x8x128xbf16>
    %49 = vector.shape_cast %48 : vector<1x8x8x128xbf16> to vector<8x8x128xbf16>
    %50 = vector.shape_cast %47 : vector<8x8x128xbf16> to vector<1x8x8x128xbf16>
    tpu.vector_store %arg5[%c0_21, %c0_22, %c0_23, %c0_24], %50 {strides = array<i32>} : memref<1x8x8x128xbf16, #tpu.memory_space<vmem>>, vector<1x8x8x128xbf16>,
    return
  }
  func.func @transform_0(%arg0: i32, %arg1: i32) -> (i32, i32, i32, i32) {
    %c0_i32 = arith.constant 0 : i32
    %c0_i32_0 = arith.constant 0 : i32
    %c0_i32_1 = arith.constant 0 : i32
    %c0_i32_2 = arith.constant 0 : i32
    return %arg0, %c0_i32, %c0_i32_0, %c0_i32_1 : i32, i32, i32, i32
  }
  func.func @transform_1(%arg0: i32, %arg1: i32) -> (i32, i32, i32) {
    %c0_i32 = arith.constant 0 : i32
    %c0_i32_0 = arith.constant 0 : i32
    %c0_i32_1 = arith.constant 0 : i32
    %c0_i32_2 = arith.constant 0 : i32
    return %c0_i32, %c0_i32_0, %c0_i32_1 : i32, i32, i32
  }
  func.func @transform_2(%arg0: i32, %arg1: i32) -> (i32, i32) {
    %c0_i32 = arith.constant 0 : i32
    %c0_i32_0 = arith.constant 0 : i32
    %c0_i32_1 = arith.constant 0 : i32
    return %c0_i32, %c0_i32_0 : i32, i32
  }
  func.func @transform_3(%arg0: i32, %arg1: i32) -> (i32, i32, i32, i32) {
    %c0_i32 = arith.constant 0 : i32
    %c0_i32_0 = arith.constant 0 : i32
    %c0_i32_1 = arith.constant 0 : i32
    return %arg0, %arg1, %c0_i32, %c0_i32_0 : i32, i32, i32, i32
  }
}

module attributes {stable_mosaic.version = 11 : i64} {
  func.func @_conv_bn_kernel(%arg0: i32, %arg1: i32, %arg2: memref<1x10x10x128xbf16, #tpu.memory_space<vmem>>, %arg3: memref<9x128x128xbf16, #tpu.memory_space<vmem>>, %arg4: memref<1x128xf32, #tpu.memory_space<vmem>>, %arg5: memref<1x8x8x128xbf16, #tpu.memory_space<vmem>>, %arg6: memref<128x128xbf16, #tpu.memory_space<vmem>>, %arg7: memref<1x128xf32, #tpu.memory_space<vmem>>, %arg8: memref<1x8x8x128xf32, #tpu.memory_space<vmem>>) attributes {dimension_semantics = [#tpu.dimension_semantics<parallel>, #tpu.dimension_semantics<parallel>], iteration_bounds = array<i64: 2, 1>, scalar_prefetch = 0 : i64, scratch_operands = 0 : i64, tpu.core_type = #tpu.core_type<tc>, window_params = [{transform_indices = @transform_0, window_bounds = array<i64: 1, 10, 10, 128>}, {pipeline_mode = #tpu.pipeline_mode<synchronous>, transform_indices = @transform_1, window_bounds = array<i64: 9, 128, 128>}, {pipeline_mode = #tpu.pipeline_mode<synchronous>, transform_indices = @transform_2, window_bounds = array<i64: 1, 128>}, {transform_indices = @transform_3, window_bounds = array<i64: 1, 8, 8, 128>}, {pipeline_mode = #tpu.pipeline_mode<synchronous>, transform_indices = @transform_4, window_bounds = array<i64: 128, 128>}, {pipeline_mode = #tpu.pipeline_mode<synchronous>, transform_indices = @transform_5, window_bounds = array<i64: 1, 128>}, {transform_indices = @transform_6, window_bounds = array<i64: 1, 8, 8, 128>}]} {
    %c8_i32 = arith.constant 8 : i32
    %0 = arith.muli %arg1, %c8_i32 : i32
    %1 = tpu.assume_multiple %0, 8 : i32
    %cst = arith.constant 0.000000e+00 : f32
    %2 = vector.broadcast %cst : f32 to vector<64x128xf32>
    %c0_i32 = arith.constant 0 : i32
    %3 = arith.addi %1, %c0_i32 : i32
    %c0 = arith.constant 0 : index
    %4 = arith.index_cast %3 : i32 to index
    %c0_0 = arith.constant 0 : index
    %c0_1 = arith.constant 0 : index
    %5 = vector.load %arg2[%c0, %4, %c0_0, %c0_1] : memref<1x10x10x128xbf16, #tpu.memory_space<vmem>>, vector<1x8x10x128xbf16>
    %6 = vector.shape_cast %5 : vector<1x8x10x128xbf16> to vector<8x10x128xbf16>
    %7 = arith.extf %6 : vector<8x10x128xbf16> to vector<8x10x128xf32>
    %8 = vector.extract_strided_slice %7 {offsets = [0, 0, 0], sizes = [8, 8, 128], strides = [1, 1, 1]} : vector<8x10x128xf32> to vector<8x8x128xf32>
    %9 = vector.shape_cast %8 : vector<8x8x128xf32> to vector<64x128xf32>
    %10 = arith.truncf %9 : vector<64x128xf32> to vector<64x128xbf16>
    %c0_2 = arith.constant 0 : index
    %c0_3 = arith.constant 0 : index
    %c0_4 = arith.constant 0 : index
    %11 = vector.load %arg3[%c0_2, %c0_3, %c0_4] : memref<9x128x128xbf16, #tpu.memory_space<vmem>>, vector<1x128x128xbf16>
    %12 = vector.shape_cast %11 : vector<1x128x128xbf16> to vector<128x128xbf16>
    %cst_5 = arith.constant dense<0.000000e+00> : vector<64x128xf32>
    %13 = tpu.matmul %10, %12, %cst_5 {dimension_numbers = #tpu.dot_dimension_numbers<[1], [0], [0], [1], [0, 0, 1, 1], [], []>} : vector<64x128xbf16>, vector<128x128xbf16>, vector<64x128xf32> -> vector<64x128xf32>
    %14 = arith.addf %2, %13 : vector<64x128xf32>
    %15 = vector.extract_strided_slice %7 {offsets = [0, 1, 0], sizes = [8, 8, 128], strides = [1, 1, 1]} : vector<8x10x128xf32> to vector<8x8x128xf32>
    %16 = vector.shape_cast %15 : vector<8x8x128xf32> to vector<64x128xf32>
    %17 = arith.truncf %16 : vector<64x128xf32> to vector<64x128xbf16>
    %c1 = arith.constant 1 : index
    %c0_6 = arith.constant 0 : index
    %c0_7 = arith.constant 0 : index
    %18 = vector.load %arg3[%c1, %c0_6, %c0_7] : memref<9x128x128xbf16, #tpu.memory_space<vmem>>, vector<1x128x128xbf16>
    %19 = vector.shape_cast %18 : vector<1x128x128xbf16> to vector<128x128xbf16>
    %cst_8 = arith.constant dense<0.000000e+00> : vector<64x128xf32>
    %20 = tpu.matmul %17, %19, %cst_8 {dimension_numbers = #tpu.dot_dimension_numbers<[1], [0], [0], [1], [0, 0, 1, 1], [], []>} : vector<64x128xbf16>, vector<128x128xbf16>, vector<64x128xf32> -> vector<64x128xf32>
    %21 = arith.addf %14, %20 : vector<64x128xf32>
    %22 = vector.extract_strided_slice %7 {offsets = [0, 2, 0], sizes = [8, 8, 128], strides = [1, 1, 1]} : vector<8x10x128xf32> to vector<8x8x128xf32>
    %23 = vector.shape_cast %22 : vector<8x8x128xf32> to vector<64x128xf32>
    %24 = arith.truncf %23 : vector<64x128xf32> to vector<64x128xbf16>
    %c2 = arith.constant 2 : index
    %c0_9 = arith.constant 0 : index
    %c0_10 = arith.constant 0 : index
    %25 = vector.load %arg3[%c2, %c0_9, %c0_10] : memref<9x128x128xbf16, #tpu.memory_space<vmem>>, vector<1x128x128xbf16>
    %26 = vector.shape_cast %25 : vector<1x128x128xbf16> to vector<128x128xbf16>
    %cst_11 = arith.constant dense<0.000000e+00> : vector<64x128xf32>
    %27 = tpu.matmul %24, %26, %cst_11 {dimension_numbers = #tpu.dot_dimension_numbers<[1], [0], [0], [1], [0, 0, 1, 1], [], []>} : vector<64x128xbf16>, vector<128x128xbf16>, vector<64x128xf32> -> vector<64x128xf32>
    %28 = arith.addf %21, %27 : vector<64x128xf32>
    %c1_i32 = arith.constant 1 : i32
    %29 = arith.addi %1, %c1_i32 : i32
    %c0_12 = arith.constant 0 : index
    %30 = arith.index_cast %29 : i32 to index
    %c0_13 = arith.constant 0 : index
    %c0_14 = arith.constant 0 : index
    %31 = vector.load %arg2[%c0_12, %30, %c0_13, %c0_14] : memref<1x10x10x128xbf16, #tpu.memory_space<vmem>>, vector<1x8x10x128xbf16>
    %32 = vector.shape_cast %31 : vector<1x8x10x128xbf16> to vector<8x10x128xbf16>
    %33 = arith.extf %32 : vector<8x10x128xbf16> to vector<8x10x128xf32>
    %34 = vector.extract_strided_slice %33 {offsets = [0, 0, 0], sizes = [8, 8, 128], strides = [1, 1, 1]} : vector<8x10x128xf32> to vector<8x8x128xf32>
    %35 = vector.shape_cast %34 : vector<8x8x128xf32> to vector<64x128xf32>
    %36 = arith.truncf %35 : vector<64x128xf32> to vector<64x128xbf16>
    %c3 = arith.constant 3 : index
    %c0_15 = arith.constant 0 : index
    %c0_16 = arith.constant 0 : index
    %37 = vector.load %arg3[%c3, %c0_15, %c0_16] : memref<9x128x128xbf16, #tpu.memory_space<vmem>>, vector<1x128x128xbf16>
    %38 = vector.shape_cast %37 : vector<1x128x128xbf16> to vector<128x128xbf16>
    %cst_17 = arith.constant dense<0.000000e+00> : vector<64x128xf32>
    %39 = tpu.matmul %36, %38, %cst_17 {dimension_numbers = #tpu.dot_dimension_numbers<[1], [0], [0], [1], [0, 0, 1, 1], [], []>} : vector<64x128xbf16>, vector<128x128xbf16>, vector<64x128xf32> -> vector<64x128xf32>
    %40 = arith.addf %28, %39 : vector<64x128xf32>
    %41 = vector.extract_strided_slice %33 {offsets = [0, 1, 0], sizes = [8, 8, 128], strides = [1, 1, 1]} : vector<8x10x128xf32> to vector<8x8x128xf32>
    %42 = vector.shape_cast %41 : vector<8x8x128xf32> to vector<64x128xf32>
    %43 = arith.truncf %42 : vector<64x128xf32> to vector<64x128xbf16>
    %c4 = arith.constant 4 : index
    %c0_18 = arith.constant 0 : index
    %c0_19 = arith.constant 0 : index
    %44 = vector.load %arg3[%c4, %c0_18, %c0_19] : memref<9x128x128xbf16, #tpu.memory_space<vmem>>, vector<1x128x128xbf16>
    %45 = vector.shape_cast %44 : vector<1x128x128xbf16> to vector<128x128xbf16>
    %cst_20 = arith.constant dense<0.000000e+00> : vector<64x128xf32>
    %46 = tpu.matmul %43, %45, %cst_20 {dimension_numbers = #tpu.dot_dimension_numbers<[1], [0], [0], [1], [0, 0, 1, 1], [], []>} : vector<64x128xbf16>, vector<128x128xbf16>, vector<64x128xf32> -> vector<64x128xf32>
    %47 = arith.addf %40, %46 : vector<64x128xf32>
    %48 = vector.extract_strided_slice %33 {offsets = [0, 2, 0], sizes = [8, 8, 128], strides = [1, 1, 1]} : vector<8x10x128xf32> to vector<8x8x128xf32>
    %49 = vector.shape_cast %48 : vector<8x8x128xf32> to vector<64x128xf32>
    %50 = arith.truncf %49 : vector<64x128xf32> to vector<64x128xbf16>
    %c5 = arith.constant 5 : index
    %c0_21 = arith.constant 0 : index
    %c0_22 = arith.constant 0 : index
    %51 = vector.load %arg3[%c5, %c0_21, %c0_22] : memref<9x128x128xbf16, #tpu.memory_space<vmem>>, vector<1x128x128xbf16>
    %52 = vector.shape_cast %51 : vector<1x128x128xbf16> to vector<128x128xbf16>
    %cst_23 = arith.constant dense<0.000000e+00> : vector<64x128xf32>
    %53 = tpu.matmul %50, %52, %cst_23 {dimension_numbers = #tpu.dot_dimension_numbers<[1], [0], [0], [1], [0, 0, 1, 1], [], []>} : vector<64x128xbf16>, vector<128x128xbf16>, vector<64x128xf32> -> vector<64x128xf32>
    %54 = arith.addf %47, %53 : vector<64x128xf32>
    %c2_i32 = arith.constant 2 : i32
    %55 = arith.addi %1, %c2_i32 : i32
    %c0_24 = arith.constant 0 : index
    %56 = arith.index_cast %55 : i32 to index
    %c0_25 = arith.constant 0 : index
    %c0_26 = arith.constant 0 : index
    %57 = vector.load %arg2[%c0_24, %56, %c0_25, %c0_26] : memref<1x10x10x128xbf16, #tpu.memory_space<vmem>>, vector<1x8x10x128xbf16>
    %58 = vector.shape_cast %57 : vector<1x8x10x128xbf16> to vector<8x10x128xbf16>
    %59 = arith.extf %58 : vector<8x10x128xbf16> to vector<8x10x128xf32>
    %60 = vector.extract_strided_slice %59 {offsets = [0, 0, 0], sizes = [8, 8, 128], strides = [1, 1, 1]} : vector<8x10x128xf32> to vector<8x8x128xf32>
    %61 = vector.shape_cast %60 : vector<8x8x128xf32> to vector<64x128xf32>
    %62 = arith.truncf %61 : vector<64x128xf32> to vector<64x128xbf16>
    %c6 = arith.constant 6 : index
    %c0_27 = arith.constant 0 : index
    %c0_28 = arith.constant 0 : index
    %63 = vector.load %arg3[%c6, %c0_27, %c0_28] : memref<9x128x128xbf16, #tpu.memory_space<vmem>>, vector<1x128x128xbf16>
    %64 = vector.shape_cast %63 : vector<1x128x128xbf16> to vector<128x128xbf16>
    %cst_29 = arith.constant dense<0.000000e+00> : vector<64x128xf32>
    %65 = tpu.matmul %62, %64, %cst_29 {dimension_numbers = #tpu.dot_dimension_numbers<[1], [0], [0], [1], [0, 0, 1, 1], [], []>} : vector<64x128xbf16>, vector<128x128xbf16>, vector<64x128xf32> -> vector<64x128xf32>
    %66 = arith.addf %54, %65 : vector<64x128xf32>
    %67 = vector.extract_strided_slice %59 {offsets = [0, 1, 0], sizes = [8, 8, 128], strides = [1, 1, 1]} : vector<8x10x128xf32> to vector<8x8x128xf32>
    %68 = vector.shape_cast %67 : vector<8x8x128xf32> to vector<64x128xf32>
    %69 = arith.truncf %68 : vector<64x128xf32> to vector<64x128xbf16>
    %c7 = arith.constant 7 : index
    %c0_30 = arith.constant 0 : index
    %c0_31 = arith.constant 0 : index
    %70 = vector.load %arg3[%c7, %c0_30, %c0_31] : memref<9x128x128xbf16, #tpu.memory_space<vmem>>, vector<1x128x128xbf16>
    %71 = vector.shape_cast %70 : vector<1x128x128xbf16> to vector<128x128xbf16>
    %cst_32 = arith.constant dense<0.000000e+00> : vector<64x128xf32>
    %72 = tpu.matmul %69, %71, %cst_32 {dimension_numbers = #tpu.dot_dimension_numbers<[1], [0], [0], [1], [0, 0, 1, 1], [], []>} : vector<64x128xbf16>, vector<128x128xbf16>, vector<64x128xf32> -> vector<64x128xf32>
    %73 = arith.addf %66, %72 : vector<64x128xf32>
    %74 = vector.extract_strided_slice %59 {offsets = [0, 2, 0], sizes = [8, 8, 128], strides = [1, 1, 1]} : vector<8x10x128xf32> to vector<8x8x128xf32>
    %75 = vector.shape_cast %74 : vector<8x8x128xf32> to vector<64x128xf32>
    %76 = arith.truncf %75 : vector<64x128xf32> to vector<64x128xbf16>
    %c8 = arith.constant 8 : index
    %c0_33 = arith.constant 0 : index
    %c0_34 = arith.constant 0 : index
    %77 = vector.load %arg3[%c8, %c0_33, %c0_34] : memref<9x128x128xbf16, #tpu.memory_space<vmem>>, vector<1x128x128xbf16>
    %78 = vector.shape_cast %77 : vector<1x128x128xbf16> to vector<128x128xbf16>
    %cst_35 = arith.constant dense<0.000000e+00> : vector<64x128xf32>
    %79 = tpu.matmul %76, %78, %cst_35 {dimension_numbers = #tpu.dot_dimension_numbers<[1], [0], [0], [1], [0, 0, 1, 1], [], []>} : vector<64x128xbf16>, vector<128x128xbf16>, vector<64x128xf32> -> vector<64x128xf32>
    %80 = arith.addf %73, %79 : vector<64x128xf32>
    %c0_36 = arith.constant 0 : index
    %c0_37 = arith.constant 0 : index
    %81 = vector.load %arg4[%c0_36, %c0_37] : memref<1x128xf32, #tpu.memory_space<vmem>>, vector<1x128xf32>
    %82 = vector.broadcast %81 : vector<1x128xf32> to vector<64x128xf32>
    %83 = arith.addf %80, %82 : vector<64x128xf32>
    %c0_38 = arith.constant 0 : index
    %c0_39 = arith.constant 0 : index
    %c0_40 = arith.constant 0 : index
    %c0_41 = arith.constant 0 : index
    %84 = vector.load %arg5[%c0_38, %c0_39, %c0_40, %c0_41] : memref<1x8x8x128xbf16, #tpu.memory_space<vmem>>, vector<1x8x8x128xbf16>
    %85 = vector.shape_cast %84 : vector<1x8x8x128xbf16> to vector<8x8x128xbf16>
    %86 = arith.extf %85 : vector<8x8x128xbf16> to vector<8x8x128xf32>
    %87 = vector.shape_cast %86 : vector<8x8x128xf32> to vector<64x128xf32>
    %88 = arith.truncf %87 : vector<64x128xf32> to vector<64x128xbf16>
    %c0_42 = arith.constant 0 : index
    %c0_43 = arith.constant 0 : index
    %89 = vector.load %arg6[%c0_42, %c0_43] : memref<128x128xbf16, #tpu.memory_space<vmem>>, vector<128x128xbf16>
    %cst_44 = arith.constant dense<0.000000e+00> : vector<64x128xf32>
    %90 = tpu.matmul %88, %89, %cst_44 {dimension_numbers = #tpu.dot_dimension_numbers<[1], [0], [0], [1], [0, 0, 1, 1], [], []>} : vector<64x128xbf16>, vector<128x128xbf16>, vector<64x128xf32> -> vector<64x128xf32>
    %91 = arith.addf %83, %90 : vector<64x128xf32>
    %c0_45 = arith.constant 0 : index
    %c0_46 = arith.constant 0 : index
    %92 = vector.load %arg7[%c0_45, %c0_46] : memref<1x128xf32, #tpu.memory_space<vmem>>, vector<1x128xf32>
    %93 = vector.broadcast %92 : vector<1x128xf32> to vector<64x128xf32>
    %94 = arith.addf %91, %93 : vector<64x128xf32>
    %cst_47 = arith.constant 0.000000e+00 : f32
    %95 = vector.broadcast %cst_47 : f32 to vector<64x128xf32>
    %96 = arith.maximumf %94, %95 : vector<64x128xf32>
    %97 = vector.shape_cast %96 : vector<64x128xf32> to vector<8x8x128xf32>
    %c0_48 = arith.constant 0 : index
    %c0_49 = arith.constant 0 : index
    %c0_50 = arith.constant 0 : index
    %c0_51 = arith.constant 0 : index
    %98 = vector.load %arg8[%c0_48, %c0_49, %c0_50, %c0_51] : memref<1x8x8x128xf32, #tpu.memory_space<vmem>>, vector<1x8x8x128xf32>
    %99 = vector.shape_cast %98 : vector<1x8x8x128xf32> to vector<8x8x128xf32>
    %100 = vector.shape_cast %97 : vector<8x8x128xf32> to vector<1x8x8x128xf32>
    tpu.vector_store %arg8[%c0_48, %c0_49, %c0_50, %c0_51], %100 {strides = array<i32>} : memref<1x8x8x128xf32, #tpu.memory_space<vmem>>, vector<1x8x8x128xf32>,
    return
  }
  func.func @transform_0(%arg0: i32, %arg1: i32) -> (i32, i32, i32, i32) {
    %c0_i32 = arith.constant 0 : i32
    %c0_i32_0 = arith.constant 0 : i32
    %c0_i32_1 = arith.constant 0 : i32
    %c0_i32_2 = arith.constant 0 : i32
    return %arg0, %c0_i32, %c0_i32_0, %c0_i32_1 : i32, i32, i32, i32
  }
  func.func @transform_1(%arg0: i32, %arg1: i32) -> (i32, i32, i32) {
    %c0_i32 = arith.constant 0 : i32
    %c0_i32_0 = arith.constant 0 : i32
    %c0_i32_1 = arith.constant 0 : i32
    %c0_i32_2 = arith.constant 0 : i32
    return %c0_i32, %c0_i32_0, %c0_i32_1 : i32, i32, i32
  }
  func.func @transform_2(%arg0: i32, %arg1: i32) -> (i32, i32) {
    %c0_i32 = arith.constant 0 : i32
    %c0_i32_0 = arith.constant 0 : i32
    %c0_i32_1 = arith.constant 0 : i32
    return %c0_i32, %c0_i32_0 : i32, i32
  }
  func.func @transform_3(%arg0: i32, %arg1: i32) -> (i32, i32, i32, i32) {
    %c0_i32 = arith.constant 0 : i32
    %c0_i32_0 = arith.constant 0 : i32
    %c0_i32_1 = arith.constant 0 : i32
    return %arg0, %arg1, %c0_i32, %c0_i32_0 : i32, i32, i32, i32
  }
  func.func @transform_4(%arg0: i32, %arg1: i32) -> (i32, i32) {
    %c0_i32 = arith.constant 0 : i32
    %c0_i32_0 = arith.constant 0 : i32
    %c0_i32_1 = arith.constant 0 : i32
    return %c0_i32, %c0_i32_0 : i32, i32
  }
  func.func @transform_5(%arg0: i32, %arg1: i32) -> (i32, i32) {
    %c0_i32 = arith.constant 0 : i32
    %c0_i32_0 = arith.constant 0 : i32
    %c0_i32_1 = arith.constant 0 : i32
    return %c0_i32, %c0_i32_0 : i32, i32
  }
  func.func @transform_6(%arg0: i32, %arg1: i32) -> (i32, i32, i32, i32) {
    %c0_i32 = arith.constant 0 : i32
    %c0_i32_0 = arith.constant 0 : i32
    %c0_i32_1 = arith.constant 0 : i32
    return %arg0, %arg1, %c0_i32, %c0_i32_0 : i32, i32, i32, i32
  }
}

</mosaic_0001>

<llo_original>
// kernel: basic_block_forward.2
$region0: #{basic_block_forward.2}
  #allocation0 [shape = 'u32[]', space=smem, size = 0x4, offset = 0x4, fixed_abs, tag = 'smem constant byte address 0x4 - core index']
  #allocation1 [shape = 'u32[144,128]{1,0:T(1,128)}', space=vmem, size = 0x12000, scoped, tag = 'internal scratch']
  %s0 = inlined_call_operand.vmem [shape: bf16[2,9,9,512], index: 0, kind: input, shape index: {}]
  %s1 = inlined_call_operand.vmem [shape: bf16[4,512,128], index: 1, kind: input, shape index: {}]
  %s2 = inlined_call_operand.vmem [shape: f32[1,128], index: 2, kind: input, shape index: {}]
  %s3 = inlined_call_operand.vmem [shape: bf16[2,8,8,128], index: 3, kind: output, shape index: {}]
  %s4 = sld [smem:[#allocation0]]
  $region45: #{basic_block_forward.2} parent=0
    _
  %s6 = ssub.s32 1, %s4
  %s7 = scalar_select 0, %s6, %s4
  loop: start=0, step=1, limit=4
  $region2: #{basic_block_forward.2} parent=0 // loop_pre_header
    _
  $region3: #{basic_block_forward.2} parent=0 // loop_header
    %s9 = sphi 0, %s13
    %p10 = scmp.ge.s32.totalorder %s9, 4
    %s16 = sphi 0, %s28
    %s17 = sphi 0, %s24
    %s18 = sphi 0, %s16
    %s19 = sphi 0, %s17
    %s20 = sphi 0, %s18
    %s21 = sphi 0, %s19
    %s31 = sphi 0, %s33
    %s34 = sphi 0, %s31
    %s35 = sphi 0, %s34
    %s51 = sphi 0, %s35
    %s55 = sphi 0, %s55
    %s57 = sphi 0, %s55
    %s58 = sphi 0, %s57
    %s72 = sphi 0, %s58
    %s76 = sphi 0, %s76
    %s78 = sphi 0, %s76
    %s79 = sphi 0, %s78
    %s93 = sphi 0, %s79
    %s101 = sphi 0, %s103
    %s104 = sphi 0, %s101
    %s105 = sphi 0, %s104
    %s121 = sphi 0, %s105
  $region4: #{basic_block_forward.2} parent=0 // loop_header_branch
    %12 = sbr.rel (%p10) target = $region8
  $region5: #{basic_block_forward.2} parent=0 // loop_body
    %s14 = ssub.s32 %s9, 1
    %s15 = ssub.s32 %s9, 2
    %s22 = sadd.s32 1, %s17
    %p23 = scmp.ge.s32.totalorder %s22, 1
    %s24 = scalar_select %p23, 0, %s22
    %s25 = sadd.s32 1, %s16
    %s26 = scalar_select %p23, %s25, %s16
    %p27 = scmp.ge.s32.totalorder %s26, 2
    %s28 = scalar_select %p27, 0, %s26
    %s29 = ssub.s32 %s16, %s28
    %p30 = scmp.eq.s32.totalorder %s29, 0
    %s32 = sadd.s32 %s31, 1
    %s33 = scalar_select %p30, %s31, %s32
    %p36 = pneg %p30
    %p37 = scmp.eq.s32.totalorder %s9, 1
    %p38 = por %p36, %p37
    %p39 = scmp.ne.s32.totalorder %s31, %s34
    %p40 = scmp.eq.s32.totalorder %s9, 0
    %p41 = por %p39, %p40
    %p42 = scmp.ne.s32.totalorder %s31, %s34
    %p43 = scmp.eq.s32.totalorder %s14, 1
    %p44 = por %p42, %p43
    %p45 = scmp.ne.s32.totalorder %s34, %s35
    %p46 = scmp.eq.s32.totalorder %s14, 0
    %p47 = por %p45, %p46
    %p48 = scmp.ne.s32.totalorder %s34, %s35
    %p49 = scmp.eq.s32.totalorder %s15, 1
    %p50 = por %p48, %p49
    %p52 = scmp.ne.s32.totalorder %s35, %s51
    %p53 = scmp.eq.s32.totalorder %s15, 0
    %p54 = por %p52, %p53
    %s56 = sadd.s32 %s55, 1
    %p59 = scmp.eq.s32.totalorder %s9, 1
    %p60 = scmp.ne.s32.totalorder %s55, %s57
    %p61 = scmp.eq.s32.totalorder %s9, 0
    %p62 = por %p60, %p61
    %p63 = scmp.ne.s32.totalorder %s55, %s57
    %p64 = scmp.eq.s32.totalorder %s14, 1
    %p65 = por %p63, %p64
    %p66 = scmp.ne.s32.totalorder %s57, %s58
    %p67 = scmp.eq.s32.totalorder %s14, 0
    %p68 = por %p66, %p67
    %p69 = scmp.ne.s32.totalorder %s57, %s58
    %p70 = scmp.eq.s32.totalorder %s15, 1
    %p71 = por %p69, %p70
    %p73 = scmp.ne.s32.totalorder %s58, %s72
    %p74 = scmp.eq.s32.totalorder %s15, 0
    %p75 = por %p73, %p74
    %s77 = sadd.s32 %s76, 1
    %p80 = scmp.eq.s32.totalorder %s9, 1
    %p81 = scmp.ne.s32.totalorder %s76, %s78
    %p82 = scmp.eq.s32.totalorder %s9, 0
    %p83 = por %p81, %p82
    %p84 = scmp.ne.s32.totalorder %s76, %s78
    %p85 = scmp.eq.s32.totalorder %s14, 1
    %p86 = por %p84, %p85
    %p87 = scmp.ne.s32.totalorder %s78, %s79
    %p88 = scmp.eq.s32.totalorder %s14, 0
    %p89 = por %p87, %p88
    %p90 = scmp.ne.s32.totalorder %s78, %s79
    %p91 = scmp.eq.s32.totalorder %s15, 1
    %p92 = por %p90, %p91
    %p94 = scmp.ne.s32.totalorder %s79, %s93
    %p95 = scmp.eq.s32.totalorder %s15, 0
    %p96 = por %p94, %p95
    %s97 = ssub.s32 %s16, %s28
    %s98 = ssub.s32 %s17, %s24
    %s99 = sor.u32 %s97, %s98
    %p100 = scmp.eq.s32.totalorder %s99, 0
    %s102 = sadd.s32 %s101, 1
    %s103 = scalar_select %p100, %s101, %s102
    %p106 = pneg %p100
    %p107 = scmp.eq.s32.totalorder %s9, 1
    %p108 = por %p106, %p107
    %p109 = scmp.ne.s32.totalorder %s101, %s104
    %p110 = scmp.eq.s32.totalorder %s9, 0
    %p111 = por %p109, %p110
    %p112 = scmp.ne.s32.totalorder %s101, %s104
    %p113 = scmp.eq.s32.totalorder %s14, 1
    %p114 = por %p112, %p113
    %p115 = scmp.ne.s32.totalorder %s104, %s105
    %p116 = scmp.eq.s32.totalorder %s14, 0
    %p117 = por %p115, %p116
    %p118 = scmp.ne.s32.totalorder %s104, %s105
    %p119 = scmp.eq.s32.totalorder %s15, 1
    %p120 = por %p118, %p119
    %p122 = scmp.ne.s32.totalorder %s105, %s121
    %p123 = scmp.eq.s32.totalorder %s15, 0
    %p124 = por %p122, %p123
    %p125 = scmp.le.s32.totalorder 1, %s9
    %p126 = scmp.lt.s32.totalorder %s9, 3
    %p127 = pnand %p125, %p126
    %p128 = pneg %p127
    // Predicated region
    $region9: #{basic_block_forward.2} parent=5 // pred_check
      _
    $region10: #{basic_block_forward.2} parent=5 // pred_check_branch
      %130 = sbr.rel (%p127) target = $region12
    $region11: #{basic_block_forward.2} parent=5 // pred_region
      %s131 = ssub.s32 %s9, 1
      // Predicated region
      $region13: #{basic_block_forward.2} parent=11 // pred_check
        %p132 = pneg %p68
      $region14: #{basic_block_forward.2} parent=11 // pred_check_branch
        %134 = sbr.rel (%p132) target = $region16
      $region15: #{basic_block_forward.2} parent=11 // pred_region
        _
      $region16: #{basic_block_forward.2} parent=11 // pred_fallthru
        _
      // Predicated region
      $region17: #{basic_block_forward.2} parent=11 // pred_check
        %p135 = pneg %p89
      $region18: #{basic_block_forward.2} parent=11 // pred_check_branch
        %137 = sbr.rel (%p135) target = $region20
      $region19: #{basic_block_forward.2} parent=11 // pred_region
        _
      $region20: #{basic_block_forward.2} parent=11 // pred_fallthru
        _
    $region12: #{basic_block_forward.2} parent=5 // pred_fallthru
      _
    %p138 = scmp.lt.s32.totalorder %s9, 2
    // Predicated region
    $region21: #{basic_block_forward.2} parent=5 // pred_check
      %p139 = pneg %p138
    $region22: #{basic_block_forward.2} parent=5 // pred_check_branch
      %141 = sbr.rel (%p139) target = $region24
    $region23: #{basic_block_forward.2} parent=5 // pred_region
      // Predicated region
      $region25: #{basic_block_forward.2} parent=23 // pred_check
        %p142 = pneg %p41
      $region26: #{basic_block_forward.2} parent=23 // pred_check_branch
        %144 = sbr.rel (%p142) target = $region28
      $region27: #{basic_block_forward.2} parent=23 // pred_region
        %p145 = scmp.lt.s32.totalorder %s16, 1
        %s146 = scalar_select %p145, %s16, 1
        %s147 = smul.addr %s146, 72
        %s148 = smul.addr %s147, 4
        %s149 = scalar_lea.vmem %s0, %s148
      $region28: #{basic_block_forward.2} parent=23 // pred_fallthru
        _
    $region24: #{basic_block_forward.2} parent=5 // pred_fallthru
      _
    %p150 = scmp.le.s32.totalorder 1, %s9
    %p151 = scmp.lt.s32.totalorder %s9, 3
    %p152 = pnand %p150, %p151
    %p153 = pneg %p152
    // Predicated region
    $region29: #{basic_block_forward.2} parent=5 // pred_check
      _
    $region30: #{basic_block_forward.2} parent=5 // pred_check_branch
      %155 = sbr.rel (%p152) target = $region32
    $region31: #{basic_block_forward.2} parent=5 // pred_region
      %s156 = ssub.s32 %s9, 1
      %p157 = scmp.lt.s32.totalorder %s18, 1
      %s158 = scalar_select %p157, %s18, 1
      %s159 = smul.addr %s158, 72
      %s160 = smul.addr %s159, 4
      %s161 = scalar_lea.vmem %s0, %s160
      %p162 = pneg %p47
      %p163 = pneg %p44
      %p164 = pneg %p68
      %p165 = pneg %p65
      %p166 = pneg %p89
      %p167 = pneg %p86
      %p168 = pneg %p117
      %p169 = pneg %p114
      %s170 = smul.u32 8, %s19
      %p171 = scmp.lt.s32.totalorder %s18, 1
      %s172 = scalar_select %p171, %s18, 1
      %p173 = scmp.lt.s32.totalorder %s170, 7
      %s174 = scalar_select %p173, %s170, 7
      %s175 = smul.addr %s172, 8
      %s176 = sadd.s32 %s174, %s175
      %s177 = smul.addr %s176, 4
      %s178 = scalar_lea.vmem %s3, %s177
      %p179 = scmp.lt.s32.totalorder %s18, 1
      %s180 = scalar_select %p179, %s18, 1
      %s181 = smul.addr %s180, 72
      %s182 = smul.addr %s181, 4
      %s183 = scalar_lea.vmem %s0, %s182
      %s184 = smul.u32 8, %s19
      %p185 = scmp.lt.s32.totalorder %s18, 1
      %s186 = scalar_select %p185, %s18, 1
      %p187 = scmp.lt.s32.totalorder %s184, 7
      %s188 = scalar_select %p187, %s184, 7
      %s189 = smul.addr %s186, 8
      %s190 = sadd.s32 %s188, %s189
      %s191 = smul.addr %s190, 4
      %s192 = scalar_lea.vmem %s3, %s191
      %s193 = smul.u32 8, %s19
      %s195 = smul.u32 %s19, 8
      %s196 = smul.u32 %s195, 8
      %s197 = smul.addr %s196, 4
      %s198 = scalar_lea.vmem %s183, %s197
      %v199 = vld [vmem:[%s198] sm:$0xff]
      %v200 = vld [vmem:[%s198 + $0x8] sm:$0xff]
      %v201 = vld [vmem:[%s198 + $0x10] sm:$0x11]
      %v202 = vld [vmem:[%s198 + $0x18] sm:$0x11]
      %v203 = vld [vmem:[%s198 + $0x20] sm:$0xff]
      %v204 = vld [vmem:[%s198 + $0x28] sm:$0xff]
      %v205 = vld [vmem:[%s198 + $0x30] sm:$0x11]
      %v206 = vld [vmem:[%s198 + $0x38] sm:$0x11]
      %v207 = vld [vmem:[%s198 + $0x40] sm:$0xff]
      %v208 = vld [vmem:[%s198 + $0x48] sm:$0xff]
      %v209 = vld [vmem:[%s198 + $0x50] sm:$0x11]
      %v210 = vld [vmem:[%s198 + $0x58] sm:$0x11]
      %v211 = vld [vmem:[%s198 + $0x60] sm:$0xff]
      %v212 = vld [vmem:[%s198 + $0x68] sm:$0xff]
      %v213 = vld [vmem:[%s198 + $0x70] sm:$0x11]
      %v214 = vld [vmem:[%s198 + $0x78] sm:$0x11]
      %v215 = vld [vmem:[%s198 + $0x80] sm:$0xff]
      %v216 = vld [vmem:[%s198 + $0x88] sm:$0xff]
      %v217 = vld [vmem:[%s198 + $0x90] sm:$0x11]
      %v218 = vld [vmem:[%s198 + $0x98] sm:$0x11]
      %v219 = vld [vmem:[%s198 + $0xa0] sm:$0xff]
      %v220 = vld [vmem:[%s198 + $0xa8] sm:$0xff]
      %v221 = vld [vmem:[%s198 + $0xb0] sm:$0x11]
      %v222 = vld [vmem:[%s198 + $0xb8] sm:$0x11]
      %v223 = vld [vmem:[%s198 + $0xc0] sm:$0xff]
      %v224 = vld [vmem:[%s198 + $0xc8] sm:$0xff]
      %v225 = vld [vmem:[%s198 + $0xd0] sm:$0x11]
      %v226 = vld [vmem:[%s198 + $0xd8] sm:$0x11]
      %v227 = vld [vmem:[%s198 + $0xe0] sm:$0xff]
      %v228 = vld [vmem:[%s198 + $0xe8] sm:$0xff]
      %v229 = vld [vmem:[%s198 + $0xf0] sm:$0x11]
      %v230 = vld [vmem:[%s198 + $0xf8] sm:$0x11]
      %v231 = vunpack.c.l.bf16 %v199
      %v232 = vunpack.c.h.bf16 %v199
      %v233 = vunpack.c.l.bf16 %v200
      %v234 = vunpack.c.h.bf16 %v200
      %v235 = vunpack.c.l.bf16 %v201
      %v236 = vunpack.c.h.bf16 %v201
      %v237 = vunpack.c.l.bf16 %v202
      %v238 = vunpack.c.h.bf16 %v202
      %v239 = vunpack.c.l.bf16 %v203
      %v240 = vunpack.c.h.bf16 %v203
      %v241 = vunpack.c.l.bf16 %v204
      %v242 = vunpack.c.h.bf16 %v204
      %v243 = vunpack.c.l.bf16 %v205
      %v244 = vunpack.c.h.bf16 %v205
      %v245 = vunpack.c.l.bf16 %v206
      %v246 = vunpack.c.h.bf16 %v206
      %v247 = vunpack.c.l.bf16 %v207
      %v248 = vunpack.c.h.bf16 %v207
      %v249 = vunpack.c.l.bf16 %v208
      %v250 = vunpack.c.h.bf16 %v208
      %v251 = vunpack.c.l.bf16 %v209
      %v252 = vunpack.c.h.bf16 %v209
      %v253 = vunpack.c.l.bf16 %v210
      %v254 = vunpack.c.h.bf16 %v210
      %v255 = vunpack.c.l.bf16 %v211
      %v256 = vunpack.c.h.bf16 %v211
      %v257 = vunpack.c.l.bf16 %v212
      %v258 = vunpack.c.h.bf16 %v212
      %v259 = vunpack.c.l.bf16 %v213
      %v260 = vunpack.c.h.bf16 %v213
      %v261 = vunpack.c.l.bf16 %v214
      %v262 = vunpack.c.h.bf16 %v214
      %v263 = vunpack.c.l.bf16 %v215
      %v264 = vunpack.c.h.bf16 %v215
      %v265 = vunpack.c.l.bf16 %v216
      %v266 = vunpack.c.h.bf16 %v216
      %v267 = vunpack.c.l.bf16 %v217
      %v268 = vunpack.c.h.bf16 %v217
      %v269 = vunpack.c.l.bf16 %v218
      %v270 = vunpack.c.h.bf16 %v218
      %v271 = vunpack.c.l.bf16 %v219
      %v272 = vunpack.c.h.bf16 %v219
      %v273 = vunpack.c.l.bf16 %v220
      %v274 = vunpack.c.h.bf16 %v220
      %v275 = vunpack.c.l.bf16 %v221
      %v276 = vunpack.c.h.bf16 %v221
      %v277 = vunpack.c.l.bf16 %v222
      %v278 = vunpack.c.h.bf16 %v222
      %v279 = vunpack.c.l.bf16 %v223
      %v280 = vunpack.c.h.bf16 %v223
      %v281 = vunpack.c.l.bf16 %v224
      %v282 = vunpack.c.h.bf16 %v224
      %v283 = vunpack.c.l.bf16 %v225
      %v284 = vunpack.c.h.bf16 %v225
      %v285 = vunpack.c.l.bf16 %v226
      %v286 = vunpack.c.h.bf16 %v226
      %v287 = vunpack.c.l.bf16 %v227
      %v288 = vunpack.c.h.bf16 %v227
      %v289 = vunpack.c.l.bf16 %v228
      %v290 = vunpack.c.h.bf16 %v228
      %v291 = vunpack.c.l.bf16 %v229
      %v292 = vunpack.c.h.bf16 %v229
      %v293 = vunpack.c.l.bf16 %v230
      %v294 = vunpack.c.h.bf16 %v230
      %v295 = vpack.c.bf16 %v239, %v231
      %v296 = vpack.c.bf16 %v240, %v232
      %v297 = vpack.c.bf16 %v241, %v233
      %v298 = vpack.c.bf16 %v242, %v234
      %v299 = vpack.c.bf16 %v255, %v247
      %v300 = vpack.c.bf16 %v256, %v248
      %v301 = vpack.c.bf16 %v257, %v249
      %v302 = vpack.c.bf16 %v258, %v250
      %v303 = vpack.c.bf16 %v271, %v263
      %v304 = vpack.c.bf16 %v272, %v264
      %v305 = vpack.c.bf16 %v273, %v265
      %v306 = vpack.c.bf16 %v274, %v266
      %v307 = vpack.c.bf16 %v287, %v279
      %v308 = vpack.c.bf16 %v288, %v280
      %v309 = vpack.c.bf16 %v289, %v281
      %v310 = vpack.c.bf16 %v290, %v282
      %v311 = vld [vmem:[%s1] sm:$0xf]
      %v312 = vld [vmem:[%s1 + $0x4] sm:$0xf]
      %v313 = vld [vmem:[%s1 + $0x8] sm:$0xf]
      %v314 = vld [vmem:[%s1 + $0xc] sm:$0xf]
      %v315 = vld [vmem:[%s1 + $0x10] sm:$0xf]
      %v316 = vld [vmem:[%s1 + $0x14] sm:$0xf]
      %v317 = vld [vmem:[%s1 + $0x18] sm:$0xf]
      %v318 = vld [vmem:[%s1 + $0x1c] sm:$0xf]
      %v319 = vld [vmem:[%s1 + $0x20] sm:$0xf]
      %v320 = vld [vmem:[%s1 + $0x24] sm:$0xf]
      %v321 = vld [vmem:[%s1 + $0x28] sm:$0xf]
      %v322 = vld [vmem:[%s1 + $0x2c] sm:$0xf]
      %v323 = vld [vmem:[%s1 + $0x30] sm:$0xf]
      %v324 = vld [vmem:[%s1 + $0x34] sm:$0xf]
      %v325 = vld [vmem:[%s1 + $0x38] sm:$0xf]
      %v326 = vld [vmem:[%s1 + $0x3c] sm:$0xf]
      %v327 = vld [vmem:[%s1 + $0x40] sm:$0xf]
      %v328 = vld [vmem:[%s1 + $0x44] sm:$0xf]
      %v329 = vld [vmem:[%s1 + $0x48] sm:$0xf]
      %v330 = vld [vmem:[%s1 + $0x4c] sm:$0xf]
      %v331 = vld [vmem:[%s1 + $0x50] sm:$0xf]
      %v332 = vld [vmem:[%s1 + $0x54] sm:$0xf]
      %v333 = vld [vmem:[%s1 + $0x58] sm:$0xf]
      %v334 = vld [vmem:[%s1 + $0x5c] sm:$0xf]
      %v335 = vld [vmem:[%s1 + $0x60] sm:$0xf]
      %v336 = vld [vmem:[%s1 + $0x64] sm:$0xf]
      %v337 = vld [vmem:[%s1 + $0x68] sm:$0xf]
      %v338 = vld [vmem:[%s1 + $0x6c] sm:$0xf]
      %v339 = vld [vmem:[%s1 + $0x70] sm:$0xf]
      %v340 = vld [vmem:[%s1 + $0x74] sm:$0xf]
      %v341 = vld [vmem:[%s1 + $0x78] sm:$0xf]
      %v342 = vld [vmem:[%s1 + $0x7c] sm:$0xf]
      %v343 = vld [vmem:[%s1 + $0x80] sm:$0xf]
      %v344 = vld [vmem:[%s1 + $0x84] sm:$0xf]
      %v345 = vld [vmem:[%s1 + $0x88] sm:$0xf]
      %v346 = vld [vmem:[%s1 + $0x8c] sm:$0xf]
      %v347 = vld [vmem:[%s1 + $0x90] sm:$0xf]
      %v348 = vld [vmem:[%s1 + $0x94] sm:$0xf]
      %v349 = vld [vmem:[%s1 + $0x98] sm:$0xf]
      %v350 = vld [vmem:[%s1 + $0x9c] sm:$0xf]
      %v351 = vld [vmem:[%s1 + $0xa0] sm:$0xf]
      %v352 = vld [vmem:[%s1 + $0xa4] sm:$0xf]
      %v353 = vld [vmem:[%s1 + $0xa8] sm:$0xf]
      %v354 = vld [vmem:[%s1 + $0xac] sm:$0xf]
      %v355 = vld [vmem:[%s1 + $0xb0] sm:$0xf]
      %v356 = vld [vmem:[%s1 + $0xb4] sm:$0xf]
      %v357 = vld [vmem:[%s1 + $0xb8] sm:$0xf]
      %v358 = vld [vmem:[%s1 + $0xbc] sm:$0xf]
      %v359 = vld [vmem:[%s1 + $0xc0] sm:$0xf]
      %v360 = vld [vmem:[%s1 + $0xc4] sm:$0xf]
      %v361 = vld [vmem:[%s1 + $0xc8] sm:$0xf]
      %v362 = vld [vmem:[%s1 + $0xcc] sm:$0xf]
      %v363 = vld [vmem:[%s1 + $0xd0] sm:$0xf]
      %v364 = vld [vmem:[%s1 + $0xd4] sm:$0xf]
      %v365 = vld [vmem:[%s1 + $0xd8] sm:$0xf]
      %v366 = vld [vmem:[%s1 + $0xdc] sm:$0xf]
      %v367 = vld [vmem:[%s1 + $0xe0] sm:$0xf]
      %v368 = vld [vmem:[%s1 + $0xe4] sm:$0xf]
      %v369 = vld [vmem:[%s1 + $0xe8] sm:$0xf]
      %v370 = vld [vmem:[%s1 + $0xec] sm:$0xf]
      %v371 = vld [vmem:[%s1 + $0xf0] sm:$0xf]
      %v372 = vld [vmem:[%s1 + $0xf4] sm:$0xf]
      %v373 = vld [vmem:[%s1 + $0xf8] sm:$0xf]
      %v374 = vld [vmem:[%s1 + $0xfc] sm:$0xf]
      %vm439 = vcmask 1046528
      %v440 = vrot.slane %v231, 1
      %v441 = vrot.slane %v235, 1
      %v442 = vsel %vm439, %v440, %v441
      %v443 = vrot.slane %v232, 1
      %v444 = vrot.slane %v236, 1
      %v445 = vsel %vm439, %v443, %v444
      %v446 = vrot.slane %v233, 1
      %v447 = vrot.slane %v237, 1
      %v448 = vsel %vm439, %v446, %v447
      %v449 = vrot.slane %v234, 1
      %v450 = vrot.slane %v238, 1
      %v451 = vsel %vm439, %v449, %v450
      %v452 = vrot.slane %v239, 1
      %v453 = vrot.slane %v243, 1
      %v454 = vsel %vm439, %v452, %v453
      %v455 = vrot.slane %v240, 1
      %v456 = vrot.slane %v244, 1
      %v457 = vsel %vm439, %v455, %v456
      %v458 = vrot.slane %v241, 1
      %v459 = vrot.slane %v245, 1
      %v460 = vsel %vm439, %v458, %v459
      %v461 = vrot.slane %v242, 1
      %v462 = vrot.slane %v246, 1
      %v463 = vsel %vm439, %v461, %v462
      %v464 = vrot.slane %v247, 1
      %v465 = vrot.slane %v251, 1
      %v466 = vsel %vm439, %v464, %v465
      %v467 = vrot.slane %v248, 1
      %v468 = vrot.slane %v252, 1
      %v469 = vsel %vm439, %v467, %v468
      %v470 = vrot.slane %v249, 1
      %v471 = vrot.slane %v253, 1
      %v472 = vsel %vm439, %v470, %v471
      %v473 = vrot.slane %v250, 1
      %v474 = vrot.slane %v254, 1
      %v475 = vsel %vm439, %v473, %v474
      %v476 = vrot.slane %v255, 1
      %v477 = vrot.slane %v259, 1
      %v478 = vsel %vm439, %v476, %v477
      %v479 = vrot.slane %v256, 1
      %v480 = vrot.slane %v260, 1
      %v481 = vsel %vm439, %v479, %v480
      %v482 = vrot.slane %v257, 1
      %v483 = vrot.slane %v261, 1
      %v484 = vsel %vm439, %v482, %v483
      %v485 = vrot.slane %v258, 1
      %v486 = vrot.slane %v262, 1
      %v487 = vsel %vm439, %v485, %v486
      %v488 = vrot.slane %v263, 1
      %v489 = vrot.slane %v267, 1
      %v490 = vsel %vm439, %v488, %v489
      %v491 = vrot.slane %v264, 1
      %v492 = vrot.slane %v268, 1
      %v493 = vsel %vm439, %v491, %v492
      %v494 = vrot.slane %v265, 1
      %v495 = vrot.slane %v269, 1
      %v496 = vsel %vm439, %v494, %v495
      %v497 = vrot.slane %v266, 1
      %v498 = vrot.slane %v270, 1
      %v499 = vsel %vm439, %v497, %v498
      %v500 = vrot.slane %v271, 1
      %v501 = vrot.slane %v275, 1
      %v502 = vsel %vm439, %v500, %v501
      %v503 = vrot.slane %v272, 1
      %v504 = vrot.slane %v276, 1
      %v505 = vsel %vm439, %v503, %v504
      %v506 = vrot.slane %v273, 1
      %v507 = vrot.slane %v277, 1
      %v508 = vsel %vm439, %v506, %v507
      %v509 = vrot.slane %v274, 1
      %v510 = vrot.slane %v278, 1
      %v511 = vsel %vm439, %v509, %v510
      %v512 = vrot.slane %v279, 1
      %v513 = vrot.slane %v283, 1
      %v514 = vsel %vm439, %v512, %v513
      %v515 = vrot.slane %v280, 1
      %v516 = vrot.slane %v284, 1
      %v517 = vsel %vm439, %v515, %v516
      %v518 = vrot.slane %v281, 1
      %v519 = vrot.slane %v285, 1
      %v520 = vsel %vm439, %v518, %v519
      %v521 = vrot.slane %v282, 1
      %v522 = vrot.slane %v286, 1
      %v523 = vsel %vm439, %v521, %v522
      %v524 = vrot.slane %v287, 1
      %v525 = vrot.slane %v291, 1
      %v526 = vsel %vm439, %v524, %v525
      %v527 = vrot.slane %v288, 1
      %v528 = vrot.slane %v292, 1
      %v529 = vsel %vm439, %v527, %v528
      %v530 = vrot.slane %v289, 1
      %v531 = vrot.slane %v293, 1
      %v532 = vsel %vm439, %v530, %v531
      %v533 = vrot.slane %v290, 1
      %v534 = vrot.slane %v294, 1
      %v535 = vsel %vm439, %v533, %v534
      %v568 = vpack.c.bf16 %v454, %v442
      %v569 = vpack.c.bf16 %v457, %v445
      %v570 = vpack.c.bf16 %v460, %v448
      %v571 = vpack.c.bf16 %v463, %v451
      %v572 = vpack.c.bf16 %v478, %v466
      %v573 = vpack.c.bf16 %v481, %v469
      %v574 = vpack.c.bf16 %v484, %v472
      %v575 = vpack.c.bf16 %v487, %v475
      %v576 = vpack.c.bf16 %v502, %v490
      %v577 = vpack.c.bf16 %v505, %v493
      %v578 = vpack.c.bf16 %v508, %v496
      %v579 = vpack.c.bf16 %v511, %v499
      %v580 = vpack.c.bf16 %v526, %v514
      %v581 = vpack.c.bf16 %v529, %v517
      %v582 = vpack.c.bf16 %v532, %v520
      %v583 = vpack.c.bf16 %v535, %v523
      %s584 = scalar_lea.vmem %s1, 256
      %v585 = vld [vmem:[%s584] sm:$0xf]
      %v586 = vld [vmem:[%s584 + $0x4] sm:$0xf]
      %v587 = vld [vmem:[%s584 + $0x8] sm:$0xf]
      %v588 = vld [vmem:[%s584 + $0xc] sm:$0xf]
      %v589 = vld [vmem:[%s584 + $0x10] sm:$0xf]
      %v590 = vld [vmem:[%s584 + $0x14] sm:$0xf]
      %v591 = vld [vmem:[%s584 + $0x18] sm:$0xf]
      %v592 = vld [vmem:[%s584 + $0x1c] sm:$0xf]
      %v593 = vld [vmem:[%s584 + $0x20] sm:$0xf]
      %v594 = vld [vmem:[%s584 + $0x24] sm:$0xf]
      %v595 = vld [vmem:[%s584 + $0x28] sm:$0xf]
      %v596 = vld [vmem:[%s584 + $0x2c] sm:$0xf]
      %v597 = vld [vmem:[%s584 + $0x30] sm:$0xf]
      %v598 = vld [vmem:[%s584 + $0x34] sm:$0xf]
      %v599 = vld [vmem:[%s584 + $0x38] sm:$0xf]
      %v600 = vld [vmem:[%s584 + $0x3c] sm:$0xf]
      %v601 = vld [vmem:[%s584 + $0x40] sm:$0xf]
      %v602 = vld [vmem:[%s584 + $0x44] sm:$0xf]
      %v603 = vld [vmem:[%s584 + $0x48] sm:$0xf]
      %v604 = vld [vmem:[%s584 + $0x4c] sm:$0xf]
      %v605 = vld [vmem:[%s584 + $0x50] sm:$0xf]
      %v606 = vld [vmem:[%s584 + $0x54] sm:$0xf]
      %v607 = vld [vmem:[%s584 + $0x58] sm:$0xf]
      %v608 = vld [vmem:[%s584 + $0x5c] sm:$0xf]
      %v609 = vld [vmem:[%s584 + $0x60] sm:$0xf]
      %v610 = vld [vmem:[%s584 + $0x64] sm:$0xf]
      %v611 = vld [vmem:[%s584 + $0x68] sm:$0xf]
      %v612 = vld [vmem:[%s584 + $0x6c] sm:$0xf]
      %v613 = vld [vmem:[%s584 + $0x70] sm:$0xf]
      %v614 = vld [vmem:[%s584 + $0x74] sm:$0xf]
      %v615 = vld [vmem:[%s584 + $0x78] sm:$0xf]
      %v616 = vld [vmem:[%s584 + $0x7c] sm:$0xf]
      %v617 = vld [vmem:[%s584 + $0x80] sm:$0xf]
      %v618 = vld [vmem:[%s584 + $0x84] sm:$0xf]
      %v619 = vld [vmem:[%s584 + $0x88] sm:$0xf]
      %v620 = vld [vmem:[%s584 + $0x8c] sm:$0xf]
      %v621 = vld [vmem:[%s584 + $0x90] sm:$0xf]
      %v622 = vld [vmem:[%s584 + $0x94] sm:$0xf]
      %v623 = vld [vmem:[%s584 + $0x98] sm:$0xf]
      %v624 = vld [vmem:[%s584 + $0x9c] sm:$0xf]
      %v625 = vld [vmem:[%s584 + $0xa0] sm:$0xf]
      %v626 = vld [vmem:[%s584 + $0xa4] sm:$0xf]
      %v627 = vld [vmem:[%s584 + $0xa8] sm:$0xf]
      %v628 = vld [vmem:[%s584 + $0xac] sm:$0xf]
      %v629 = vld [vmem:[%s584 + $0xb0] sm:$0xf]
      %v630 = vld [vmem:[%s584 + $0xb4] sm:$0xf]
      %v631 = vld [vmem:[%s584 + $0xb8] sm:$0xf]
      %v632 = vld [vmem:[%s584 + $0xbc] sm:$0xf]
      %v633 = vld [vmem:[%s584 + $0xc0] sm:$0xf]
      %v634 = vld [vmem:[%s584 + $0xc4] sm:$0xf]
      %v635 = vld [vmem:[%s584 + $0xc8] sm:$0xf]
      %v636 = vld [vmem:[%s584 + $0xcc] sm:$0xf]
      %v637 = vld [vmem:[%s584 + $0xd0] sm:$0xf]
      %v638 = vld [vmem:[%s584 + $0xd4] sm:$0xf]
      %v639 = vld [vmem:[%s584 + $0xd8] sm:$0xf]
      %v640 = vld [vmem:[%s584 + $0xdc] sm:$0xf]
      %v641 = vld [vmem:[%s584 + $0xe0] sm:$0xf]
      %v642 = vld [vmem:[%s584 + $0xe4] sm:$0xf]
      %v643 = vld [vmem:[%s584 + $0xe8] sm:$0xf]
      %v644 = vld [vmem:[%s584 + $0xec] sm:$0xf]
      %v645 = vld [vmem:[%s584 + $0xf0] sm:$0xf]
      %v646 = vld [vmem:[%s584 + $0xf4] sm:$0xf]
      %v647 = vld [vmem:[%s584 + $0xf8] sm:$0xf]
      %v648 = vld [vmem:[%s584 + $0xfc] sm:$0xf]
      %v713 = vunpack.c.l.b16 %v585
      %v714 = vunpack.c.l.b16 %v586
      %v715 = vunpack.c.l.b16 %v587
      %v716 = vunpack.c.l.b16 %v588
      %v717 = vunpack.c.l.b16 %v589
      %v718 = vunpack.c.l.b16 %v590
      %v719 = vunpack.c.l.b16 %v591
      %v720 = vunpack.c.l.b16 %v592
      %v721 = vunpack.c.l.b16 %v593
      %v722 = vunpack.c.l.b16 %v594
      %v723 = vunpack.c.l.b16 %v595
      %v724 = vunpack.c.l.b16 %v596
      %v725 = vunpack.c.l.b16 %v597
      %v726 = vunpack.c.l.b16 %v598
      %v727 = vunpack.c.l.b16 %v599
      %v728 = vunpack.c.l.b16 %v600
      %v729 = vunpack.c.l.b16 %v601
      %v730 = vunpack.c.l.b16 %v602
      %v731 = vunpack.c.l.b16 %v603
      %v732 = vunpack.c.l.b16 %v604
      %v733 = vunpack.c.l.b16 %v605
      %v734 = vunpack.c.l.b16 %v606
      %v735 = vunpack.c.l.b16 %v607
      %v736 = vunpack.c.l.b16 %v608
      %v737 = vunpack.c.l.b16 %v609
      %v738 = vunpack.c.l.b16 %v610
      %v739 = vunpack.c.l.b16 %v611
      %v740 = vunpack.c.l.b16 %v612
      %v741 = vunpack.c.l.b16 %v613
      %v742 = vunpack.c.l.b16 %v614
      %v743 = vunpack.c.l.b16 %v615
      %v744 = vunpack.c.l.b16 %v616
      %v745 = vunpack.c.l.b16 %v617
      %v746 = vunpack.c.l.b16 %v618
      %v747 = vunpack.c.l.b16 %v619
      %v748 = vunpack.c.l.b16 %v620
      %v749 = vunpack.c.l.b16 %v621
      %v750 = vunpack.c.l.b16 %v622
      %v751 = vunpack.c.l.b16 %v623
      %v752 = vunpack.c.l.b16 %v624
      %v753 = vunpack.c.l.b16 %v625
      %v754 = vunpack.c.l.b16 %v626
      %v755 = vunpack.c.l.b16 %v627
      %v756 = vunpack.c.l.b16 %v628
      %v757 = vunpack.c.l.b16 %v629
      %v758 = vunpack.c.l.b16 %v630
      %v759 = vunpack.c.l.b16 %v631
      %v760 = vunpack.c.l.b16 %v632
      %v761 = vunpack.c.l.b16 %v633
      %v762 = vunpack.c.l.b16 %v634
      %v763 = vunpack.c.l.b16 %v635
      %v764 = vunpack.c.l.b16 %v636
      %v765 = vunpack.c.l.b16 %v637
      %v766 = vunpack.c.l.b16 %v638
      %v767 = vunpack.c.l.b16 %v639
      %v768 = vunpack.c.l.b16 %v640
      %v769 = vunpack.c.l.b16 %v641
      %v770 = vunpack.c.l.b16 %v642
      %v771 = vunpack.c.l.b16 %v643
      %v772 = vunpack.c.l.b16 %v644
      %v773 = vunpack.c.l.b16 %v645
      %v774 = vunpack.c.l.b16 %v646
      %v775 = vunpack.c.l.b16 %v647
      %v776 = vunpack.c.l.b16 %v648
      %v777 = vpack.c.b16 %v714, %v713
      %v778 = vpack.c.b16 %v716, %v715
      %v779 = vpack.c.b16 %v718, %v717
      %v780 = vpack.c.b16 %v720, %v719
      %v781 = vpack.c.b16 %v722, %v721
      %v782 = vpack.c.b16 %v724, %v723
      %v783 = vpack.c.b16 %v726, %v725
      %v784 = vpack.c.b16 %v728, %v727
      %v785 = vpack.c.b16 %v730, %v729
      %v786 = vpack.c.b16 %v732, %v731
      %v787 = vpack.c.b16 %v734, %v733
      %v788 = vpack.c.b16 %v736, %v735
      %v789 = vpack.c.b16 %v738, %v737
      %v790 = vpack.c.b16 %v740, %v739
      %v791 = vpack.c.b16 %v742, %v741
      %v792 = vpack.c.b16 %v744, %v743
      %v793 = vpack.c.b16 %v746, %v745
      %v794 = vpack.c.b16 %v748, %v747
      %v795 = vpack.c.b16 %v750, %v749
      %v796 = vpack.c.b16 %v752, %v751
      %v797 = vpack.c.b16 %v754, %v753
      %v798 = vpack.c.b16 %v756, %v755
      %v799 = vpack.c.b16 %v758, %v757
      %v800 = vpack.c.b16 %v760, %v759
      %v801 = vpack.c.b16 %v762, %v761
      %v802 = vpack.c.b16 %v764, %v763
      %v803 = vpack.c.b16 %v766, %v765
      %v804 = vpack.c.b16 %v768, %v767
      %v805 = vpack.c.b16 %v770, %v769
      %v806 = vpack.c.b16 %v772, %v771
      %v807 = vpack.c.b16 %v774, %v773
      %v808 = vpack.c.b16 %v776, %v775
      %841 = vmatprep.subr.bf16.mxu0 0
      %842 = vmatpush1.bf16.msra.mxu0 %v777
      %843 = vmatprep.subr.bf16.mxu0 0
      %844 = vmatpush1.bf16.msra.mxu0 %v778
      %845 = vmatprep.subr.bf16.mxu0 0
      %846 = vmatpush1.bf16.msra.mxu0 %v779
      %847 = vmatprep.subr.bf16.mxu0 0
      %848 = vmatpush1.bf16.msra.mxu0 %v780
      %849 = vmatprep.subr.bf16.mxu0 0
      %850 = vmatpush1.bf16.msra.mxu0 %v781
      %851 = vmatprep.subr.bf16.mxu0 0
      %852 = vmatpush1.bf16.msra.mxu0 %v782
      %853 = vmatprep.subr.bf16.mxu0 0
      %854 = vmatpush1.bf16.msra.mxu0 %v783
      %855 = vmatprep.subr.bf16.mxu0 0
      %856 = vmatpush1.bf16.msra.mxu0 %v784
      %857 = vmatprep.subr.bf16.mxu0 0
      %858 = vmatpush1.bf16.msra.mxu0 %v785
      %859 = vmatprep.subr.bf16.mxu0 0
      %860 = vmatpush1.bf16.msra.mxu0 %v786
      %861 = vmatprep.subr.bf16.mxu0 0
      %862 = vmatpush1.bf16.msra.mxu0 %v787
      %863 = vmatprep.subr.bf16.mxu0 0
      %864 = vmatpush1.bf16.msra.mxu0 %v788
      %865 = vmatprep.subr.bf16.mxu0 0
      %866 = vmatpush1.bf16.msra.mxu0 %v789
      %867 = vmatprep.subr.bf16.mxu0 0
      %868 = vmatpush1.bf16.msra.mxu0 %v790
      %869 = vmatprep.subr.bf16.mxu0 0
      %870 = vmatpush1.bf16.msra.mxu0 %v791
      %871 = vmatprep.subr.bf16.mxu0 0
      %872 = vmatpush1.bf16.msra.mxu0 %v792
      %873 = vmatprep.mubr.bf16.mxu0 %v569
      %874 = vmatmul.mubr.bf16.gmra.mrb[0].mxu0 %v568
      %v875 = vpop.f32.mrb[0].mxu0
      %v876 = vadd.f32 0.0, %v875
      %v877 = vpop.f32.mrb[0].mxu0
      %v878 = vpop.f32.mrb[0].mxu0
      %v879 = vadd.f32 0.0, %v878
      %v880 = vpop.f32.mrb[0].mxu0
      %881 = vmatprep.mubr.bf16.mxu0 %v573
      %882 = vmatmul.mubr.bf16.gmra.mrb[0].mxu0 %v572
      %v883 = vpop.f32.mrb[0].mxu0
      %v884 = vadd.f32 0.0, %v883
      %v885 = vpop.f32.mrb[0].mxu0
      %v886 = vpop.f32.mrb[0].mxu0
      %v887 = vadd.f32 0.0, %v886
      %v888 = vpop.f32.mrb[0].mxu0
      %889 = vmatprep.mubr.bf16.mxu0 %v577
      %890 = vmatmul.mubr.bf16.gmra.mrb[0].mxu0 %v576
      %v891 = vpop.f32.mrb[0].mxu0
      %v892 = vadd.f32 0.0, %v891
      %v893 = vpop.f32.mrb[0].mxu0
      %v894 = vpop.f32.mrb[0].mxu0
      %v895 = vadd.f32 0.0, %v894
      %v896 = vpop.f32.mrb[0].mxu0
      %897 = vmatprep.mubr.bf16.mxu0 %v581
      %898 = vmatmul.mubr.bf16.gmra.mrb[0].mxu0 %v580
      %v899 = vpop.f32.mrb[0].mxu0
      %v900 = vadd.f32 0.0, %v899
      %v901 = vpop.f32.mrb[0].mxu0
      %v902 = vpop.f32.mrb[0].mxu0
      %v903 = vadd.f32 0.0, %v902
      %v904 = vpop.f32.mrb[0].mxu0
      %905 = vdwg.mxu0
      %906 = vmatprep.subr.bf16.mxu0 0
      %907 = vmatpush1.bf16.msra.mxu0 %v793
      %908 = vmatprep.subr.bf16.mxu0 0
      %909 = vmatpush1.bf16.msra.mxu0 %v794
      %910 = vmatprep.subr.bf16.mxu0 0
      %911 = vmatpush1.bf16.msra.mxu0 %v795
      %912 = vmatprep.subr.bf16.mxu0 0
      %913 = vmatpush1.bf16.msra.mxu0 %v796
      %914 = vmatprep.subr.bf16.mxu0 0
      %915 = vmatpush1.bf16.msra.mxu0 %v797
      %916 = vmatprep.subr.bf16.mxu0 0
      %917 = vmatpush1.bf16.msra.mxu0 %v798
      %918 = vmatprep.subr.bf16.mxu0 0
      %919 = vmatpush1.bf16.msra.mxu0 %v799
      %920 = vmatprep.subr.bf16.mxu0 0
      %921 = vmatpush1.bf16.msra.mxu0 %v800
      %922 = vmatprep.subr.bf16.mxu0 0
      %923 = vmatpush1.bf16.msra.mxu0 %v801
      %924 = vmatprep.subr.bf16.mxu0 0
      %925 = vmatpush1.bf16.msra.mxu0 %v802
      %926 = vmatprep.subr.bf16.mxu0 0
      %927 = vmatpush1.bf16.msra.mxu0 %v803
      %928 = vmatprep.subr.bf16.mxu0 0
      %929 = vmatpush1.bf16.msra.mxu0 %v804
      %930 = vmatprep.subr.bf16.mxu0 0
      %931 = vmatpush1.bf16.msra.mxu0 %v805
      %932 = vmatprep.subr.bf16.mxu0 0
      %933 = vmatpush1.bf16.msra.mxu0 %v806
      %934 = vmatprep.subr.bf16.mxu0 0
      %935 = vmatpush1.bf16.msra.mxu0 %v807
      %936 = vmatprep.subr.bf16.mxu0 0
      %937 = vmatpush1.bf16.msra.mxu0 %v808
      %938 = vmatprep.mubr.bf16.mxu0 %v571
      %939 = vmatmul.mubr.bf16.gmra.mrb[0].mxu0 %v570
      %v940 = vpop.f32.mrb[0].mxu0
      %v941 = vadd.f32 %v876, %v940
      %v942 = vpop.f32.mrb[0].mxu0
      %v943 = vpop.f32.mrb[0].mxu0
      %v944 = vadd.f32 %v879, %v943
      %v945 = vpop.f32.mrb[0].mxu0
      %946 = vmatprep.mubr.bf16.mxu0 %v575
      %947 = vmatmul.mubr.bf16.gmra.mrb[0].mxu0 %v574
      %v948 = vpop.f32.mrb[0].mxu0
      %v949 = vadd.f32 %v884, %v948
      %v950 = vpop.f32.mrb[0].mxu0
      %v951 = vpop.f32.mrb[0].mxu0
      %v952 = vadd.f32 %v887, %v951
      %v953 = vpop.f32.mrb[0].mxu0
      %954 = vmatprep.mubr.bf16.mxu0 %v579
      %955 = vmatmul.mubr.bf16.gmra.mrb[0].mxu0 %v578
      %v956 = vpop.f32.mrb[0].mxu0
      %v957 = vadd.f32 %v892, %v956
      %v958 = vpop.f32.mrb[0].mxu0
      %v959 = vpop.f32.mrb[0].mxu0
      %v960 = vadd.f32 %v895, %v959
      %v961 = vpop.f32.mrb[0].mxu0
      %962 = vmatprep.mubr.bf16.mxu0 %v583
      %963 = vmatmul.mubr.bf16.gmra.mrb[0].mxu0 %v582
      %v964 = vpop.f32.mrb[0].mxu0
      %v965 = vadd.f32 %v900, %v964
      %v966 = vpop.f32.mrb[0].mxu0
      %v967 = vpop.f32.mrb[0].mxu0
      %v968 = vadd.f32 %v903, %v967
      %v969 = vpop.f32.mrb[0].mxu0
      %970 = vdwg.mxu0
      %v1035 = vunpack.c.l.b16 %v311
      %v1036 = vunpack.c.l.b16 %v312
      %v1037 = vunpack.c.l.b16 %v313
      %v1038 = vunpack.c.l.b16 %v314
      %v1039 = vunpack.c.l.b16 %v315
      %v1040 = vunpack.c.l.b16 %v316
      %v1041 = vunpack.c.l.b16 %v317
      %v1042 = vunpack.c.l.b16 %v318
      %v1043 = vunpack.c.l.b16 %v319
      %v1044 = vunpack.c.l.b16 %v320
      %v1045 = vunpack.c.l.b16 %v321
      %v1046 = vunpack.c.l.b16 %v322
      %v1047 = vunpack.c.l.b16 %v323
      %v1048 = vunpack.c.l.b16 %v324
      %v1049 = vunpack.c.l.b16 %v325
      %v1050 = vunpack.c.l.b16 %v326
      %v1051 = vunpack.c.l.b16 %v327
      %v1052 = vunpack.c.l.b16 %v328
      %v1053 = vunpack.c.l.b16 %v329
      %v1054 = vunpack.c.l.b16 %v330
      %v1055 = vunpack.c.l.b16 %v331
      %v1056 = vunpack.c.l.b16 %v332
      %v1057 = vunpack.c.l.b16 %v333
      %v1058 = vunpack.c.l.b16 %v334
      %v1059 = vunpack.c.l.b16 %v335
      %v1060 = vunpack.c.l.b16 %v336
      %v1061 = vunpack.c.l.b16 %v337
      %v1062 = vunpack.c.l.b16 %v338
      %v1063 = vunpack.c.l.b16 %v339
      %v1064 = vunpack.c.l.b16 %v340
      %v1065 = vunpack.c.l.b16 %v341
      %v1066 = vunpack.c.l.b16 %v342
      %v1067 = vunpack.c.l.b16 %v343
      %v1068 = vunpack.c.l.b16 %v344
      %v1069 = vunpack.c.l.b16 %v345
      %v1070 = vunpack.c.l.b16 %v346
      %v1071 = vunpack.c.l.b16 %v347
      %v1072 = vunpack.c.l.b16 %v348
      %v1073 = vunpack.c.l.b16 %v349
      %v1074 = vunpack.c.l.b16 %v350
      %v1075 = vunpack.c.l.b16 %v351
      %v1076 = vunpack.c.l.b16 %v352
      %v1077 = vunpack.c.l.b16 %v353
      %v1078 = vunpack.c.l.b16 %v354
      %v1079 = vunpack.c.l.b16 %v355
      %v1080 = vunpack.c.l.b16 %v356
      %v1081 = vunpack.c.l.b16 %v357
      %v1082 = vunpack.c.l.b16 %v358
      %v1083 = vunpack.c.l.b16 %v359
      %v1084 = vunpack.c.l.b16 %v360
      %v1085 = vunpack.c.l.b16 %v361
      %v1086 = vunpack.c.l.b16 %v362
      %v1087 = vunpack.c.l.b16 %v363
      %v1088 = vunpack.c.l.b16 %v364
      %v1089 = vunpack.c.l.b16 %v365
      %v1090 = vunpack.c.l.b16 %v366
      %v1091 = vunpack.c.l.b16 %v367
      %v1092 = vunpack.c.l.b16 %v368
      %v1093 = vunpack.c.l.b16 %v369
      %v1094 = vunpack.c.l.b16 %v370
      %v1095 = vunpack.c.l.b16 %v371
      %v1096 = vunpack.c.l.b16 %v372
      %v1097 = vunpack.c.l.b16 %v373
      %v1098 = vunpack.c.l.b16 %v374
      %v1099 = vpack.c.b16 %v1036, %v1035
      %v1100 = vpack.c.b16 %v1038, %v1037
      %v1101 = vpack.c.b16 %v1040, %v1039
      %v1102 = vpack.c.b16 %v1042, %v1041
      %v1103 = vpack.c.b16 %v1044, %v1043
      %v1104 = vpack.c.b16 %v1046, %v1045
      %v1105 = vpack.c.b16 %v1048, %v1047
      %v1106 = vpack.c.b16 %v1050, %v1049
      %v1107 = vpack.c.b16 %v1052, %v1051
      %v1108 = vpack.c.b16 %v1054, %v1053
      %v1109 = vpack.c.b16 %v1056, %v1055
      %v1110 = vpack.c.b16 %v1058, %v1057
      %v1111 = vpack.c.b16 %v1060, %v1059
      %v1112 = vpack.c.b16 %v1062, %v1061
      %v1113 = vpack.c.b16 %v1064, %v1063
      %v1114 = vpack.c.b16 %v1066, %v1065
      %v1115 = vpack.c.b16 %v1068, %v1067
      %v1116 = vpack.c.b16 %v1070, %v1069
      %v1117 = vpack.c.b16 %v1072, %v1071
      %v1118 = vpack.c.b16 %v1074, %v1073
      %v1119 = vpack.c.b16 %v1076, %v1075
      %v1120 = vpack.c.b16 %v1078, %v1077
      %v1121 = vpack.c.b16 %v1080, %v1079
      %v1122 = vpack.c.b16 %v1082, %v1081
      %v1123 = vpack.c.b16 %v1084, %v1083
      %v1124 = vpack.c.b16 %v1086, %v1085
      %v1125 = vpack.c.b16 %v1088, %v1087
      %v1126 = vpack.c.b16 %v1090, %v1089
      %v1127 = vpack.c.b16 %v1092, %v1091
      %v1128 = vpack.c.b16 %v1094, %v1093
      %v1129 = vpack.c.b16 %v1096, %v1095
      %v1130 = vpack.c.b16 %v1098, %v1097
      %1163 = vmatprep.subr.bf16.mxu0 0
      %1164 = vmatpush1.bf16.msra.mxu0 %v1099
      %1165 = vmatprep.subr.bf16.mxu0 0
      %1166 = vmatpush1.bf16.msra.mxu0 %v1100
      %1167 = vmatprep.subr.bf16.mxu0 0
      %1168 = vmatpush1.bf16.msra.mxu0 %v1101
      %1169 = vmatprep.subr.bf16.mxu0 0
      %1170 = vmatpush1.bf16.msra.mxu0 %v1102
      %1171 = vmatprep.subr.bf16.mxu0 0
      %1172 = vmatpush1.bf16.msra.mxu0 %v1103
      %1173 = vmatprep.subr.bf16.mxu0 0
      %1174 = vmatpush1.bf16.msra.mxu0 %v1104
      %1175 = vmatprep.subr.bf16.mxu0 0
      %1176 = vmatpush1.bf16.msra.mxu0 %v1105
      %1177 = vmatprep.subr.bf16.mxu0 0
      %1178 = vmatpush1.bf16.msra.mxu0 %v1106
      %1179 = vmatprep.subr.bf16.mxu0 0
      %1180 = vmatpush1.bf16.msra.mxu0 %v1107
      %1181 = vmatprep.subr.bf16.mxu0 0
      %1182 = vmatpush1.bf16.msra.mxu0 %v1108
      %1183 = vmatprep.subr.bf16.mxu0 0
      %1184 = vmatpush1.bf16.msra.mxu0 %v1109
      %1185 = vmatprep.subr.bf16.mxu0 0
      %1186 = vmatpush1.bf16.msra.mxu0 %v1110
      %1187 = vmatprep.subr.bf16.mxu0 0
      %1188 = vmatpush1.bf16.msra.mxu0 %v1111
      %1189 = vmatprep.subr.bf16.mxu0 0
      %1190 = vmatpush1.bf16.msra.mxu0 %v1112
      %1191 = vmatprep.subr.bf16.mxu0 0
      %1192 = vmatpush1.bf16.msra.mxu0 %v1113
      %1193 = vmatprep.subr.bf16.mxu0 0
      %1194 = vmatpush1.bf16.msra.mxu0 %v1114
      %1195 = vmatprep.mubr.bf16.mxu0 %v296
      %1196 = vmatmul.mubr.bf16.gmra.mrb[0].mxu0 %v295
      %v1197 = vpop.f32.mrb[0].mxu0
      %v1198 = vadd.f32 %v941, %v1197
      %v1199 = vpop.f32.mrb[0].mxu0
      %v1200 = vpop.f32.mrb[0].mxu0
      %v1201 = vadd.f32 %v944, %v1200
      %v1202 = vpop.f32.mrb[0].mxu0
      %1203 = vmatprep.mubr.bf16.mxu0 %v300
      %1204 = vmatmul.mubr.bf16.gmra.mrb[0].mxu0 %v299
      %v1205 = vpop.f32.mrb[0].mxu0
      %v1206 = vadd.f32 %v949, %v1205
      %v1207 = vpop.f32.mrb[0].mxu0
      %v1208 = vpop.f32.mrb[0].mxu0
      %v1209 = vadd.f32 %v952, %v1208
      %v1210 = vpop.f32.mrb[0].mxu0
      %1211 = vmatprep.mubr.bf16.mxu0 %v304
      %1212 = vmatmul.mubr.bf16.gmra.mrb[0].mxu0 %v303
      %v1213 = vpop.f32.mrb[0].mxu0
      %v1214 = vadd.f32 %v957, %v1213
      %v1215 = vpop.f32.mrb[0].mxu0
      %v1216 = vpop.f32.mrb[0].mxu0
      %v1217 = vadd.f32 %v960, %v1216
      %v1218 = vpop.f32.mrb[0].mxu0
      %1219 = vmatprep.mubr.bf16.mxu0 %v308
      %1220 = vmatmul.mubr.bf16.gmra.mrb[0].mxu0 %v307
      %v1221 = vpop.f32.mrb[0].mxu0
      %v1222 = vadd.f32 %v965, %v1221
      %v1223 = vpop.f32.mrb[0].mxu0
      %v1224 = vpop.f32.mrb[0].mxu0
      %v1225 = vadd.f32 %v968, %v1224
      %v1226 = vpop.f32.mrb[0].mxu0
      %1227 = vdwg.mxu0
      %1228 = vmatprep.subr.bf16.mxu0 0
      %1229 = vmatpush1.bf16.msra.mxu0 %v1115
      %1230 = vmatprep.subr.bf16.mxu0 0
      %1231 = vmatpush1.bf16.msra.mxu0 %v1116
      %1232 = vmatprep.subr.bf16.mxu0 0
      %1233 = vmatpush1.bf16.msra.mxu0 %v1117
      %1234 = vmatprep.subr.bf16.mxu0 0
      %1235 = vmatpush1.bf16.msra.mxu0 %v1118
      %1236 = vmatprep.subr.bf16.mxu0 0
      %1237 = vmatpush1.bf16.msra.mxu0 %v1119
      %1238 = vmatprep.subr.bf16.mxu0 0
      %1239 = vmatpush1.bf16.msra.mxu0 %v1120
      %1240 = vmatprep.subr.bf16.mxu0 0
      %1241 = vmatpush1.bf16.msra.mxu0 %v1121
      %1242 = vmatprep.subr.bf16.mxu0 0
      %1243 = vmatpush1.bf16.msra.mxu0 %v1122
      %1244 = vmatprep.subr.bf16.mxu0 0
      %1245 = vmatpush1.bf16.msra.mxu0 %v1123
      %1246 = vmatprep.subr.bf16.mxu0 0
      %1247 = vmatpush1.bf16.msra.mxu0 %v1124
      %1248 = vmatprep.subr.bf16.mxu0 0
      %1249 = vmatpush1.bf16.msra.mxu0 %v1125
      %1250 = vmatprep.subr.bf16.mxu0 0
      %1251 = vmatpush1.bf16.msra.mxu0 %v1126
      %1252 = vmatprep.subr.bf16.mxu0 0
      %1253 = vmatpush1.bf16.msra.mxu0 %v1127
      %1254 = vmatprep.subr.bf16.mxu0 0
      %1255 = vmatpush1.bf16.msra.mxu0 %v1128
      %1256 = vmatprep.subr.bf16.mxu0 0
      %1257 = vmatpush1.bf16.msra.mxu0 %v1129
      %1258 = vmatprep.subr.bf16.mxu0 0
      %1259 = vmatpush1.bf16.msra.mxu0 %v1130
      %1260 = vmatprep.mubr.bf16.mxu0 %v298
      %1261 = vmatmul.mubr.bf16.gmra.mrb[0].mxu0 %v297
      %v1262 = vpop.f32.mrb[0].mxu0
      %v1263 = vadd.f32 %v1198, %v1262
      %v1264 = vpop.f32.mrb[0].mxu0
      %v1265 = vpop.f32.mrb[0].mxu0
      %v1266 = vadd.f32 %v1201, %v1265
      %v1267 = vpop.f32.mrb[0].mxu0
      %1268 = vmatprep.mubr.bf16.mxu0 %v302
      %1269 = vmatmul.mubr.bf16.gmra.mrb[0].mxu0 %v301
      %v1270 = vpop.f32.mrb[0].mxu0
      %v1271 = vadd.f32 %v1206, %v1270
      %v1272 = vpop.f32.mrb[0].mxu0
      %v1273 = vpop.f32.mrb[0].mxu0
      %v1274 = vadd.f32 %v1209, %v1273
      %v1275 = vpop.f32.mrb[0].mxu0
      %1276 = vmatprep.mubr.bf16.mxu0 %v306
      %1277 = vmatmul.mubr.bf16.gmra.mrb[0].mxu0 %v305
      %v1278 = vpop.f32.mrb[0].mxu0
      %v1279 = vadd.f32 %v1214, %v1278
      %v1280 = vpop.f32.mrb[0].mxu0
      %v1281 = vpop.f32.mrb[0].mxu0
      %v1282 = vadd.f32 %v1217, %v1281
      %v1283 = vpop.f32.mrb[0].mxu0
      %1284 = vmatprep.mubr.bf16.mxu0 %v310
      %1285 = vmatmul.mubr.bf16.gmra.mrb[0].mxu0 %v309
      %v1286 = vpop.f32.mrb[0].mxu0
      %v1287 = vadd.f32 %v1222, %v1286
      %v1288 = vpop.f32.mrb[0].mxu0
      %v1289 = vpop.f32.mrb[0].mxu0
      %v1290 = vadd.f32 %v1225, %v1289
      %v1291 = vpop.f32.mrb[0].mxu0
      %1292 = vdwg.mxu0
      %s1293 = sadd.s32 %s195, 1
      %s1294 = smul.u32 %s1293, 8
      %s1295 = smul.addr %s1294, 4
      %s1296 = scalar_lea.vmem %s183, %s1295
      %v1297 = vld [vmem:[%s1296] sm:$0xff]
      %v1298 = vld [vmem:[%s1296 + $0x8] sm:$0xff]
      %v1299 = vld [vmem:[%s1296 + $0x10] sm:$0x11]
      %v1300 = vld [vmem:[%s1296 + $0x18] sm:$0x11]
      %v1301 = vld [vmem:[%s1296 + $0x20] sm:$0xff]
      %v1302 = vld [vmem:[%s1296 + $0x28] sm:$0xff]
      %v1303 = vld [vmem:[%s1296 + $0x30] sm:$0x11]
      %v1304 = vld [vmem:[%s1296 + $0x38] sm:$0x11]
      %v1305 = vld [vmem:[%s1296 + $0x40] sm:$0xff]
      %v1306 = vld [vmem:[%s1296 + $0x48] sm:$0xff]
      %v1307 = vld [vmem:[%s1296 + $0x50] sm:$0x11]
      %v1308 = vld [vmem:[%s1296 + $0x58] sm:$0x11]
      %v1309 = vld [vmem:[%s1296 + $0x60] sm:$0xff]
      %v1310 = vld [vmem:[%s1296 + $0x68] sm:$0xff]
      %v1311 = vld [vmem:[%s1296 + $0x70] sm:$0x11]
      %v1312 = vld [vmem:[%s1296 + $0x78] sm:$0x11]
      %v1313 = vld [vmem:[%s1296 + $0x80] sm:$0xff]
      %v1314 = vld [vmem:[%s1296 + $0x88] sm:$0xff]
      %v1315 = vld [vmem:[%s1296 + $0x90] sm:$0x11]
      %v1316 = vld [vmem:[%s1296 + $0x98] sm:$0x11]
      %v1317 = vld [vmem:[%s1296 + $0xa0] sm:$0xff]
      %v1318 = vld [vmem:[%s1296 + $0xa8] sm:$0xff]
      %v1319 = vld [vmem:[%s1296 + $0xb0] sm:$0x11]
      %v1320 = vld [vmem:[%s1296 + $0xb8] sm:$0x11]
      %v1321 = vld [vmem:[%s1296 + $0xc0] sm:$0xff]
      %v1322 = vld [vmem:[%s1296 + $0xc8] sm:$0xff]
      %v1323 = vld [vmem:[%s1296 + $0xd0] sm:$0x11]
      %v1324 = vld [vmem:[%s1296 + $0xd8] sm:$0x11]
      %v1325 = vld [vmem:[%s1296 + $0xe0] sm:$0xff]
      %v1326 = vld [vmem:[%s1296 + $0xe8] sm:$0xff]
      %v1327 = vld [vmem:[%s1296 + $0xf0] sm:$0x11]
      %v1328 = vld [vmem:[%s1296 + $0xf8] sm:$0x11]
      %v1329 = vunpack.c.l.bf16 %v1297
      %v1330 = vunpack.c.h.bf16 %v1297
      %v1331 = vunpack.c.l.bf16 %v1298
      %v1332 = vunpack.c.h.bf16 %v1298
      %v1333 = vunpack.c.l.bf16 %v1299
      %v1334 = vunpack.c.h.bf16 %v1299
      %v1335 = vunpack.c.l.bf16 %v1300
      %v1336 = vunpack.c.h.bf16 %v1300
      %v1337 = vunpack.c.l.bf16 %v1301
      %v1338 = vunpack.c.h.bf16 %v1301
      %v1339 = vunpack.c.l.bf16 %v1302
      %v1340 = vunpack.c.h.bf16 %v1302
      %v1341 = vunpack.c.l.bf16 %v1303
      %v1342 = vunpack.c.h.bf16 %v1303
      %v1343 = vunpack.c.l.bf16 %v1304
      %v1344 = vunpack.c.h.bf16 %v1304
      %v1345 = vunpack.c.l.bf16 %v1305
      %v1346 = vunpack.c.h.bf16 %v1305
      %v1347 = vunpack.c.l.bf16 %v1306
      %v1348 = vunpack.c.h.bf16 %v1306
      %v1349 = vunpack.c.l.bf16 %v1307
      %v1350 = vunpack.c.h.bf16 %v1307
      %v1351 = vunpack.c.l.bf16 %v1308
      %v1352 = vunpack.c.h.bf16 %v1308
      %v1353 = vunpack.c.l.bf16 %v1309
      %v1354 = vunpack.c.h.bf16 %v1309
      %v1355 = vunpack.c.l.bf16 %v1310
      %v1356 = vunpack.c.h.bf16 %v1310
      %v1357 = vunpack.c.l.bf16 %v1311
      %v1358 = vunpack.c.h.bf16 %v1311
      %v1359 = vunpack.c.l.bf16 %v1312
      %v1360 = vunpack.c.h.bf16 %v1312
      %v1361 = vunpack.c.l.bf16 %v1313
      %v1362 = vunpack.c.h.bf16 %v1313
      %v1363 = vunpack.c.l.bf16 %v1314
      %v1364 = vunpack.c.h.bf16 %v1314
      %v1365 = vunpack.c.l.bf16 %v1315
      %v1366 = vunpack.c.h.bf16 %v1315
      %v1367 = vunpack.c.l.bf16 %v1316
      %v1368 = vunpack.c.h.bf16 %v1316
      %v1369 = vunpack.c.l.bf16 %v1317
      %v1370 = vunpack.c.h.bf16 %v1317
      %v1371 = vunpack.c.l.bf16 %v1318
      %v1372 = vunpack.c.h.bf16 %v1318
      %v1373 = vunpack.c.l.bf16 %v1319
      %v1374 = vunpack.c.h.bf16 %v1319
      %v1375 = vunpack.c.l.bf16 %v1320
      %v1376 = vunpack.c.h.bf16 %v1320
      %v1377 = vunpack.c.l.bf16 %v1321
      %v1378 = vunpack.c.h.bf16 %v1321
      %v1379 = vunpack.c.l.bf16 %v1322
      %v1380 = vunpack.c.h.bf16 %v1322
      %v1381 = vunpack.c.l.bf16 %v1323
      %v1382 = vunpack.c.h.bf16 %v1323
      %v1383 = vunpack.c.l.bf16 %v1324
      %v1384 = vunpack.c.h.bf16 %v1324
      %v1385 = vunpack.c.l.bf16 %v1325
      %v1386 = vunpack.c.h.bf16 %v1325
      %v1387 = vunpack.c.l.bf16 %v1326
      %v1388 = vunpack.c.h.bf16 %v1326
      %v1389 = vunpack.c.l.bf16 %v1327
      %v1390 = vunpack.c.h.bf16 %v1327
      %v1391 = vunpack.c.l.bf16 %v1328
      %v1392 = vunpack.c.h.bf16 %v1328
      %v1393 = vpack.c.bf16 %v1337, %v1329
      %v1394 = vpack.c.bf16 %v1338, %v1330
      %v1395 = vpack.c.bf16 %v1339, %v1331
      %v1396 = vpack.c.bf16 %v1340, %v1332
      %v1397 = vpack.c.bf16 %v1353, %v1345
      %v1398 = vpack.c.bf16 %v1354, %v1346
      %v1399 = vpack.c.bf16 %v1355, %v1347
      %v1400 = vpack.c.bf16 %v1356, %v1348
      %v1401 = vpack.c.bf16 %v1369, %v1361
      %v1402 = vpack.c.bf16 %v1370, %v1362
      %v1403 = vpack.c.bf16 %v1371, %v1363
      %v1404 = vpack.c.bf16 %v1372, %v1364
      %v1405 = vpack.c.bf16 %v1385, %v1377
      %v1406 = vpack.c.bf16 %v1386, %v1378
      %v1407 = vpack.c.bf16 %v1387, %v1379
      %v1408 = vpack.c.bf16 %v1388, %v1380
      %s1409 = scalar_lea.vmem %s1, 512
      %v1410 = vld [vmem:[%s1409] sm:$0xf]
      %v1411 = vld [vmem:[%s1409 + $0x4] sm:$0xf]
      %v1412 = vld [vmem:[%s1409 + $0x8] sm:$0xf]
      %v1413 = vld [vmem:[%s1409 + $0xc] sm:$0xf]
      %v1414 = vld [vmem:[%s1409 + $0x10] sm:$0xf]
      %v1415 = vld [vmem:[%s1409 + $0x14] sm:$0xf]
      %v1416 = vld [vmem:[%s1409 + $0x18] sm:$0xf]
      %v1417 = vld [vmem:[%s1409 + $0x1c] sm:$0xf]
      %v1418 = vld [vmem:[%s1409 + $0x20] sm:$0xf]
      %v1419 = vld [vmem:[%s1409 + $0x24] sm:$0xf]
      %v1420 = vld [vmem:[%s1409 + $0x28] sm:$0xf]
      %v1421 = vld [vmem:[%s1409 + $0x2c] sm:$0xf]
      %v1422 = vld [vmem:[%s1409 + $0x30] sm:$0xf]
      %v1423 = vld [vmem:[%s1409 + $0x34] sm:$0xf]
      %v1424 = vld [vmem:[%s1409 + $0x38] sm:$0xf]
      %v1425 = vld [vmem:[%s1409 + $0x3c] sm:$0xf]
      %v1426 = vld [vmem:[%s1409 + $0x40] sm:$0xf]
      %v1427 = vld [vmem:[%s1409 + $0x44] sm:$0xf]
      %v1428 = vld [vmem:[%s1409 + $0x48] sm:$0xf]
      %v1429 = vld [vmem:[%s1409 + $0x4c] sm:$0xf]
      %v1430 = vld [vmem:[%s1409 + $0x50] sm:$0xf]
      %v1431 = vld [vmem:[%s1409 + $0x54] sm:$0xf]
      %v1432 = vld [vmem:[%s1409 + $0x58] sm:$0xf]
      %v1433 = vld [vmem:[%s1409 + $0x5c] sm:$0xf]
      %v1434 = vld [vmem:[%s1409 + $0x60] sm:$0xf]
      %v1435 = vld [vmem:[%s1409 + $0x64] sm:$0xf]
      %v1436 = vld [vmem:[%s1409 + $0x68] sm:$0xf]
      %v1437 = vld [vmem:[%s1409 + $0x6c] sm:$0xf]
      %v1438 = vld [vmem:[%s1409 + $0x70] sm:$0xf]
      %v1439 = vld [vmem:[%s1409 + $0x74] sm:$0xf]
      %v1440 = vld [vmem:[%s1409 + $0x78] sm:$0xf]
      %v1441 = vld [vmem:[%s1409 + $0x7c] sm:$0xf]
      %v1442 = vld [vmem:[%s1409 + $0x80] sm:$0xf]
      %v1443 = vld [vmem:[%s1409 + $0x84] sm:$0xf]
      %v1444 = vld [vmem:[%s1409 + $0x88] sm:$0xf]
      %v1445 = vld [vmem:[%s1409 + $0x8c] sm:$0xf]
      %v1446 = vld [vmem:[%s1409 + $0x90] sm:$0xf]
      %v1447 = vld [vmem:[%s1409 + $0x94] sm:$0xf]
      %v1448 = vld [vmem:[%s1409 + $0x98] sm:$0xf]
      %v1449 = vld [vmem:[%s1409 + $0x9c] sm:$0xf]
      %v1450 = vld [vmem:[%s1409 + $0xa0] sm:$0xf]
      %v1451 = vld [vmem:[%s1409 + $0xa4] sm:$0xf]
      %v1452 = vld [vmem:[%s1409 + $0xa8] sm:$0xf]
      %v1453 = vld [vmem:[%s1409 + $0xac] sm:$0xf]
      %v1454 = vld [vmem:[%s1409 + $0xb0] sm:$0xf]
      %v1455 = vld [vmem:[%s1409 + $0xb4] sm:$0xf]
      %v1456 = vld [vmem:[%s1409 + $0xb8] sm:$0xf]
      %v1457 = vld [vmem:[%s1409 + $0xbc] sm:$0xf]
      %v1458 = vld [vmem:[%s1409 + $0xc0] sm:$0xf]
      %v1459 = vld [vmem:[%s1409 + $0xc4] sm:$0xf]
      %v1460 = vld [vmem:[%s1409 + $0xc8] sm:$0xf]
      %v1461 = vld [vmem:[%s1409 + $0xcc] sm:$0xf]
      %v1462 = vld [vmem:[%s1409 + $0xd0] sm:$0xf]
      %v1463 = vld [vmem:[%s1409 + $0xd4] sm:$0xf]
      %v1464 = vld [vmem:[%s1409 + $0xd8] sm:$0xf]
      %v1465 = vld [vmem:[%s1409 + $0xdc] sm:$0xf]
      %v1466 = vld [vmem:[%s1409 + $0xe0] sm:$0xf]
      %v1467 = vld [vmem:[%s1409 + $0xe4] sm:$0xf]
      %v1468 = vld [vmem:[%s1409 + $0xe8] sm:$0xf]
      %v1469 = vld [vmem:[%s1409 + $0xec] sm:$0xf]
      %v1470 = vld [vmem:[%s1409 + $0xf0] sm:$0xf]
      %v1471 = vld [vmem:[%s1409 + $0xf4] sm:$0xf]
      %v1472 = vld [vmem:[%s1409 + $0xf8] sm:$0xf]
      %v1473 = vld [vmem:[%s1409 + $0xfc] sm:$0xf]
      %v1538 = vunpack.c.l.b16 %v1410
      %v1539 = vunpack.c.l.b16 %v1411
      %v1540 = vunpack.c.l.b16 %v1412
      %v1541 = vunpack.c.l.b16 %v1413
      %v1542 = vunpack.c.l.b16 %v1414
      %v1543 = vunpack.c.l.b16 %v1415
      %v1544 = vunpack.c.l.b16 %v1416
      %v1545 = vunpack.c.l.b16 %v1417
      %v1546 = vunpack.c.l.b16 %v1418
      %v1547 = vunpack.c.l.b16 %v1419
      %v1548 = vunpack.c.l.b16 %v1420
      %v1549 = vunpack.c.l.b16 %v1421
      %v1550 = vunpack.c.l.b16 %v1422
      %v1551 = vunpack.c.l.b16 %v1423
      %v1552 = vunpack.c.l.b16 %v1424
      %v1553 = vunpack.c.l.b16 %v1425
      %v1554 = vunpack.c.l.b16 %v1426
      %v1555 = vunpack.c.l.b16 %v1427
      %v1556 = vunpack.c.l.b16 %v1428
      %v1557 = vunpack.c.l.b16 %v1429
      %v1558 = vunpack.c.l.b16 %v1430
      %v1559 = vunpack.c.l.b16 %v1431
      %v1560 = vunpack.c.l.b16 %v1432
      %v1561 = vunpack.c.l.b16 %v1433
      %v1562 = vunpack.c.l.b16 %v1434
      %v1563 = vunpack.c.l.b16 %v1435
      %v1564 = vunpack.c.l.b16 %v1436
      %v1565 = vunpack.c.l.b16 %v1437
      %v1566 = vunpack.c.l.b16 %v1438
      %v1567 = vunpack.c.l.b16 %v1439
      %v1568 = vunpack.c.l.b16 %v1440
      %v1569 = vunpack.c.l.b16 %v1441
      %v1570 = vunpack.c.l.b16 %v1442
      %v1571 = vunpack.c.l.b16 %v1443
      %v1572 = vunpack.c.l.b16 %v1444
      %v1573 = vunpack.c.l.b16 %v1445
      %v1574 = vunpack.c.l.b16 %v1446
      %v1575 = vunpack.c.l.b16 %v1447
      %v1576 = vunpack.c.l.b16 %v1448
      %v1577 = vunpack.c.l.b16 %v1449
      %v1578 = vunpack.c.l.b16 %v1450
      %v1579 = vunpack.c.l.b16 %v1451
      %v1580 = vunpack.c.l.b16 %v1452
      %v1581 = vunpack.c.l.b16 %v1453
      %v1582 = vunpack.c.l.b16 %v1454
      %v1583 = vunpack.c.l.b16 %v1455
      %v1584 = vunpack.c.l.b16 %v1456
      %v1585 = vunpack.c.l.b16 %v1457
      %v1586 = vunpack.c.l.b16 %v1458
      %v1587 = vunpack.c.l.b16 %v1459
      %v1588 = vunpack.c.l.b16 %v1460
      %v1589 = vunpack.c.l.b16 %v1461
      %v1590 = vunpack.c.l.b16 %v1462
      %v1591 = vunpack.c.l.b16 %v1463
      %v1592 = vunpack.c.l.b16 %v1464
      %v1593 = vunpack.c.l.b16 %v1465
      %v1594 = vunpack.c.l.b16 %v1466
      %v1595 = vunpack.c.l.b16 %v1467
      %v1596 = vunpack.c.l.b16 %v1468
      %v1597 = vunpack.c.l.b16 %v1469
      %v1598 = vunpack.c.l.b16 %v1470
      %v1599 = vunpack.c.l.b16 %v1471
      %v1600 = vunpack.c.l.b16 %v1472
      %v1601 = vunpack.c.l.b16 %v1473
      %v1602 = vpack.c.b16 %v1539, %v1538
      %v1603 = vpack.c.b16 %v1541, %v1540
      %v1604 = vpack.c.b16 %v1543, %v1542
      %v1605 = vpack.c.b16 %v1545, %v1544
      %v1606 = vpack.c.b16 %v1547, %v1546
      %v1607 = vpack.c.b16 %v1549, %v1548
      %v1608 = vpack.c.b16 %v1551, %v1550
      %v1609 = vpack.c.b16 %v1553, %v1552
      %v1610 = vpack.c.b16 %v1555, %v1554
      %v1611 = vpack.c.b16 %v1557, %v1556
      %v1612 = vpack.c.b16 %v1559, %v1558
      %v1613 = vpack.c.b16 %v1561, %v1560
      %v1614 = vpack.c.b16 %v1563, %v1562
      %v1615 = vpack.c.b16 %v1565, %v1564
      %v1616 = vpack.c.b16 %v1567, %v1566
      %v1617 = vpack.c.b16 %v1569, %v1568
      %v1618 = vpack.c.b16 %v1571, %v1570
      %v1619 = vpack.c.b16 %v1573, %v1572
      %v1620 = vpack.c.b16 %v1575, %v1574
      %v1621 = vpack.c.b16 %v1577, %v1576
      %v1622 = vpack.c.b16 %v1579, %v1578
      %v1623 = vpack.c.b16 %v1581, %v1580
      %v1624 = vpack.c.b16 %v1583, %v1582
      %v1625 = vpack.c.b16 %v1585, %v1584
      %v1626 = vpack.c.b16 %v1587, %v1586
      %v1627 = vpack.c.b16 %v1589, %v1588
      %v1628 = vpack.c.b16 %v1591, %v1590
      %v1629 = vpack.c.b16 %v1593, %v1592
      %v1630 = vpack.c.b16 %v1595, %v1594
      %v1631 = vpack.c.b16 %v1597, %v1596
      %v1632 = vpack.c.b16 %v1599, %v1598
      %v1633 = vpack.c.b16 %v1601, %v1600
      %1666 = vmatprep.subr.bf16.mxu0 0
      %1667 = vmatpush1.bf16.msra.mxu0 %v1602
      %1668 = vmatprep.subr.bf16.mxu0 0
      %1669 = vmatpush1.bf16.msra.mxu0 %v1603
      %1670 = vmatprep.subr.bf16.mxu0 0
      %1671 = vmatpush1.bf16.msra.mxu0 %v1604
      %1672 = vmatprep.subr.bf16.mxu0 0
      %1673 = vmatpush1.bf16.msra.mxu0 %v1605
      %1674 = vmatprep.subr.bf16.mxu0 0
      %1675 = vmatpush1.bf16.msra.mxu0 %v1606
      %1676 = vmatprep.subr.bf16.mxu0 0
      %1677 = vmatpush1.bf16.msra.mxu0 %v1607
      %1678 = vmatprep.subr.bf16.mxu0 0
      %1679 = vmatpush1.bf16.msra.mxu0 %v1608
      %1680 = vmatprep.subr.bf16.mxu0 0
      %1681 = vmatpush1.bf16.msra.mxu0 %v1609
      %1682 = vmatprep.subr.bf16.mxu0 0
      %1683 = vmatpush1.bf16.msra.mxu0 %v1610
      %1684 = vmatprep.subr.bf16.mxu0 0
      %1685 = vmatpush1.bf16.msra.mxu0 %v1611
      %1686 = vmatprep.subr.bf16.mxu0 0
      %1687 = vmatpush1.bf16.msra.mxu0 %v1612
      %1688 = vmatprep.subr.bf16.mxu0 0
      %1689 = vmatpush1.bf16.msra.mxu0 %v1613
      %1690 = vmatprep.subr.bf16.mxu0 0
      %1691 = vmatpush1.bf16.msra.mxu0 %v1614
      %1692 = vmatprep.subr.bf16.mxu0 0
      %1693 = vmatpush1.bf16.msra.mxu0 %v1615
      %1694 = vmatprep.subr.bf16.mxu0 0
      %1695 = vmatpush1.bf16.msra.mxu0 %v1616
      %1696 = vmatprep.subr.bf16.mxu0 0
      %1697 = vmatpush1.bf16.msra.mxu0 %v1617
      %1698 = vmatprep.mubr.bf16.mxu0 %v1394
      %1699 = vmatmul.mubr.bf16.gmra.mrb[0].mxu0 %v1393
      %v1700 = vpop.f32.mrb[0].mxu0
      %v1701 = vadd.f32 0.0, %v1700
      %v1702 = vpop.f32.mrb[0].mxu0
      %v1703 = vpop.f32.mrb[0].mxu0
      %v1704 = vadd.f32 0.0, %v1703
      %v1705 = vpop.f32.mrb[0].mxu0
      %1706 = vmatprep.mubr.bf16.mxu0 %v1398
      %1707 = vmatmul.mubr.bf16.gmra.mrb[0].mxu0 %v1397
      %v1708 = vpop.f32.mrb[0].mxu0
      %v1709 = vadd.f32 0.0, %v1708
      %v1710 = vpop.f32.mrb[0].mxu0
      %v1711 = vpop.f32.mrb[0].mxu0
      %v1712 = vadd.f32 0.0, %v1711
      %v1713 = vpop.f32.mrb[0].mxu0
      %1714 = vmatprep.mubr.bf16.mxu0 %v1402
      %1715 = vmatmul.mubr.bf16.gmra.mrb[0].mxu0 %v1401
      %v1716 = vpop.f32.mrb[0].mxu0
      %v1717 = vadd.f32 0.0, %v1716
      %v1718 = vpop.f32.mrb[0].mxu0
      %v1719 = vpop.f32.mrb[0].mxu0
      %v1720 = vadd.f32 0.0, %v1719
      %v1721 = vpop.f32.mrb[0].mxu0
      %1722 = vmatprep.mubr.bf16.mxu0 %v1406
      %1723 = vmatmul.mubr.bf16.gmra.mrb[0].mxu0 %v1405
      %v1724 = vpop.f32.mrb[0].mxu0
      %v1725 = vadd.f32 0.0, %v1724
      %v1726 = vpop.f32.mrb[0].mxu0
      %v1727 = vpop.f32.mrb[0].mxu0
      %v1728 = vadd.f32 0.0, %v1727
      %v1729 = vpop.f32.mrb[0].mxu0
      %1730 = vdwg.mxu0
      %1731 = vmatprep.subr.bf16.mxu0 0
      %1732 = vmatpush1.bf16.msra.mxu0 %v1618
      %1733 = vmatprep.subr.bf16.mxu0 0
      %1734 = vmatpush1.bf16.msra.mxu0 %v1619
      %1735 = vmatprep.subr.bf16.mxu0 0
      %1736 = vmatpush1.bf16.msra.mxu0 %v1620
      %1737 = vmatprep.subr.bf16.mxu0 0
      %1738 = vmatpush1.bf16.msra.mxu0 %v1621
      %1739 = vmatprep.subr.bf16.mxu0 0
      %1740 = vmatpush1.bf16.msra.mxu0 %v1622
      %1741 = vmatprep.subr.bf16.mxu0 0
      %1742 = vmatpush1.bf16.msra.mxu0 %v1623
      %1743 = vmatprep.subr.bf16.mxu0 0
      %1744 = vmatpush1.bf16.msra.mxu0 %v1624
      %1745 = vmatprep.subr.bf16.mxu0 0
      %1746 = vmatpush1.bf16.msra.mxu0 %v1625
      %1747 = vmatprep.subr.bf16.mxu0 0
      %1748 = vmatpush1.bf16.msra.mxu0 %v1626
      %1749 = vmatprep.subr.bf16.mxu0 0
      %1750 = vmatpush1.bf16.msra.mxu0 %v1627
      %1751 = vmatprep.subr.bf16.mxu0 0
      %1752 = vmatpush1.bf16.msra.mxu0 %v1628
      %1753 = vmatprep.subr.bf16.mxu0 0
      %1754 = vmatpush1.bf16.msra.mxu0 %v1629
      %1755 = vmatprep.subr.bf16.mxu0 0
      %1756 = vmatpush1.bf16.msra.mxu0 %v1630
      %1757 = vmatprep.subr.bf16.mxu0 0
      %1758 = vmatpush1.bf16.msra.mxu0 %v1631
      %1759 = vmatprep.subr.bf16.mxu0 0
      %1760 = vmatpush1.bf16.msra.mxu0 %v1632
      %1761 = vmatprep.subr.bf16.mxu0 0
      %1762 = vmatpush1.bf16.msra.mxu0 %v1633
      %1763 = vmatprep.mubr.bf16.mxu0 %v1396
      %1764 = vmatmul.mubr.bf16.gmra.mrb[0].mxu0 %v1395
      %v1765 = vpop.f32.mrb[0].mxu0
      %v1766 = vadd.f32 %v1701, %v1765
      %v1767 = vpop.f32.mrb[0].mxu0
      %v1768 = vpop.f32.mrb[0].mxu0
      %v1769 = vadd.f32 %v1704, %v1768
      %v1770 = vpop.f32.mrb[0].mxu0
      %1771 = vmatprep.mubr.bf16.mxu0 %v1400
      %1772 = vmatmul.mubr.bf16.gmra.mrb[0].mxu0 %v1399
      %v1773 = vpop.f32.mrb[0].mxu0
      %v1774 = vadd.f32 %v1709, %v1773
      %v1775 = vpop.f32.mrb[0].mxu0
      %v1776 = vpop.f32.mrb[0].mxu0
      %v1777 = vadd.f32 %v1712, %v1776
      %v1778 = vpop.f32.mrb[0].mxu0
      %1779 = vmatprep.mubr.bf16.mxu0 %v1404
      %1780 = vmatmul.mubr.bf16.gmra.mrb[0].mxu0 %v1403
      %v1781 = vpop.f32.mrb[0].mxu0
      %v1782 = vadd.f32 %v1717, %v1781
      %v1783 = vpop.f32.mrb[0].mxu0
      %v1784 = vpop.f32.mrb[0].mxu0
      %v1785 = vadd.f32 %v1720, %v1784
      %v1786 = vpop.f32.mrb[0].mxu0
      %1787 = vmatprep.mubr.bf16.mxu0 %v1408
      %1788 = vmatmul.mubr.bf16.gmra.mrb[0].mxu0 %v1407
      %v1789 = vpop.f32.mrb[0].mxu0
      %v1790 = vadd.f32 %v1725, %v1789
      %v1791 = vpop.f32.mrb[0].mxu0
      %v1792 = vpop.f32.mrb[0].mxu0
      %v1793 = vadd.f32 %v1728, %v1792
      %v1794 = vpop.f32.mrb[0].mxu0
      %1795 = vdwg.mxu0
      %v1796 = vadd.f32 %v1263, %v1766
      %v1797 = vadd.f32 %v1266, %v1769
      %v1798 = vadd.f32 %v1271, %v1774
      %v1799 = vadd.f32 %v1274, %v1777
      %v1800 = vadd.f32 %v1279, %v1782
      %v1801 = vadd.f32 %v1282, %v1785
      %v1802 = vadd.f32 %v1287, %v1790
      %v1803 = vadd.f32 %v1290, %v1793
      %v1868 = vrot.slane %v1329, 1
      %v1869 = vrot.slane %v1333, 1
      %v1870 = vsel %vm439, %v1868, %v1869
      %v1871 = vrot.slane %v1330, 1
      %v1872 = vrot.slane %v1334, 1
      %v1873 = vsel %vm439, %v1871, %v1872
      %v1874 = vrot.slane %v1331, 1
      %v1875 = vrot.slane %v1335, 1
      %v1876 = vsel %vm439, %v1874, %v1875
      %v1877 = vrot.slane %v1332, 1
      %v1878 = vrot.slane %v1336, 1
      %v1879 = vsel %vm439, %v1877, %v1878
      %v1880 = vrot.slane %v1337, 1
      %v1881 = vrot.slane %v1341, 1
      %v1882 = vsel %vm439, %v1880, %v1881
      %v1883 = vrot.slane %v1338, 1
      %v1884 = vrot.slane %v1342, 1
      %v1885 = vsel %vm439, %v1883, %v1884
      %v1886 = vrot.slane %v1339, 1
      %v1887 = vrot.slane %v1343, 1
      %v1888 = vsel %vm439, %v1886, %v1887
      %v1889 = vrot.slane %v1340, 1
      %v1890 = vrot.slane %v1344, 1
      %v1891 = vsel %vm439, %v1889, %v1890
      %v1892 = vrot.slane %v1345, 1
      %v1893 = vrot.slane %v1349, 1
      %v1894 = vsel %vm439, %v1892, %v1893
      %v1895 = vrot.slane %v1346, 1
      %v1896 = vrot.slane %v1350, 1
      %v1897 = vsel %vm439, %v1895, %v1896
      %v1898 = vrot.slane %v1347, 1
      %v1899 = vrot.slane %v1351, 1
      %v1900 = vsel %vm439, %v1898, %v1899
      %v1901 = vrot.slane %v1348, 1
      %v1902 = vrot.slane %v1352, 1
      %v1903 = vsel %vm439, %v1901, %v1902
      %v1904 = vrot.slane %v1353, 1
      %v1905 = vrot.slane %v1357, 1
      %v1906 = vsel %vm439, %v1904, %v1905
      %v1907 = vrot.slane %v1354, 1
      %v1908 = vrot.slane %v1358, 1
      %v1909 = vsel %vm439, %v1907, %v1908
      %v1910 = vrot.slane %v1355, 1
      %v1911 = vrot.slane %v1359, 1
      %v1912 = vsel %vm439, %v1910, %v1911
      %v1913 = vrot.slane %v1356, 1
      %v1914 = vrot.slane %v1360, 1
      %v1915 = vsel %vm439, %v1913, %v1914
      %v1916 = vrot.slane %v1361, 1
      %v1917 = vrot.slane %v1365, 1
      %v1918 = vsel %vm439, %v1916, %v1917
      %v1919 = vrot.slane %v1362, 1
      %v1920 = vrot.slane %v1366, 1
      %v1921 = vsel %vm439, %v1919, %v1920
      %v1922 = vrot.slane %v1363, 1
      %v1923 = vrot.slane %v1367, 1
      %v1924 = vsel %vm439, %v1922, %v1923
      %v1925 = vrot.slane %v1364, 1
      %v1926 = vrot.slane %v1368, 1
      %v1927 = vsel %vm439, %v1925, %v1926
      %v1928 = vrot.slane %v1369, 1
      %v1929 = vrot.slane %v1373, 1
      %v1930 = vsel %vm439, %v1928, %v1929
      %v1931 = vrot.slane %v1370, 1
      %v1932 = vrot.slane %v1374, 1
      %v1933 = vsel %vm439, %v1931, %v1932
      %v1934 = vrot.slane %v1371, 1
      %v1935 = vrot.slane %v1375, 1
      %v1936 = vsel %vm439, %v1934, %v1935
      %v1937 = vrot.slane %v1372, 1
      %v1938 = vrot.slane %v1376, 1
      %v1939 = vsel %vm439, %v1937, %v1938
      %v1940 = vrot.slane %v1377, 1
      %v1941 = vrot.slane %v1381, 1
      %v1942 = vsel %vm439, %v1940, %v1941
      %v1943 = vrot.slane %v1378, 1
      %v1944 = vrot.slane %v1382, 1
      %v1945 = vsel %vm439, %v1943, %v1944
      %v1946 = vrot.slane %v1379, 1
      %v1947 = vrot.slane %v1383, 1
      %v1948 = vsel %vm439, %v1946, %v1947
      %v1949 = vrot.slane %v1380, 1
      %v1950 = vrot.slane %v1384, 1
      %v1951 = vsel %vm439, %v1949, %v1950
      %v1952 = vrot.slane %v1385, 1
      %v1953 = vrot.slane %v1389, 1
      %v1954 = vsel %vm439, %v1952, %v1953
      %v1955 = vrot.slane %v1386, 1
      %v1956 = vrot.slane %v1390, 1
      %v1957 = vsel %vm439, %v1955, %v1956
      %v1958 = vrot.slane %v1387, 1
      %v1959 = vrot.slane %v1391, 1
      %v1960 = vsel %vm439, %v1958, %v1959
      %v1961 = vrot.slane %v1388, 1
      %v1962 = vrot.slane %v1392, 1
      %v1963 = vsel %vm439, %v1961, %v1962
      %v1996 = vpack.c.bf16 %v1882, %v1870
      %v1997 = vpack.c.bf16 %v1885, %v1873
      %v1998 = vpack.c.bf16 %v1888, %v1876
      %v1999 = vpack.c.bf16 %v1891, %v1879
      %v2000 = vpack.c.bf16 %v1906, %v1894
      %v2001 = vpack.c.bf16 %v1909, %v1897
      %v2002 = vpack.c.bf16 %v1912, %v1900
      %v2003 = vpack.c.bf16 %v1915, %v1903
      %v2004 = vpack.c.bf16 %v1930, %v1918
      %v2005 = vpack.c.bf16 %v1933, %v1921
      %v2006 = vpack.c.bf16 %v1936, %v1924
      %v2007 = vpack.c.bf16 %v1939, %v1927
      %v2008 = vpack.c.bf16 %v1954, %v1942
      %v2009 = vpack.c.bf16 %v1957, %v1945
      %v2010 = vpack.c.bf16 %v1960, %v1948
      %v2011 = vpack.c.bf16 %v1963, %v1951
      %s2012 = scalar_lea.vmem %s1, 768
      %v2013 = vld [vmem:[%s2012] sm:$0xf]
      %v2014 = vld [vmem:[%s2012 + $0x4] sm:$0xf]
      %v2015 = vld [vmem:[%s2012 + $0x8] sm:$0xf]
      %v2016 = vld [vmem:[%s2012 + $0xc] sm:$0xf]
      %v2017 = vld [vmem:[%s2012 + $0x10] sm:$0xf]
      %v2018 = vld [vmem:[%s2012 + $0x14] sm:$0xf]
      %v2019 = vld [vmem:[%s2012 + $0x18] sm:$0xf]
      %v2020 = vld [vmem:[%s2012 + $0x1c] sm:$0xf]
      %v2021 = vld [vmem:[%s2012 + $0x20] sm:$0xf]
      %v2022 = vld [vmem:[%s2012 + $0x24] sm:$0xf]
      %v2023 = vld [vmem:[%s2012 + $0x28] sm:$0xf]
      %v2024 = vld [vmem:[%s2012 + $0x2c] sm:$0xf]
      %v2025 = vld [vmem:[%s2012 + $0x30] sm:$0xf]
      %v2026 = vld [vmem:[%s2012 + $0x34] sm:$0xf]
      %v2027 = vld [vmem:[%s2012 + $0x38] sm:$0xf]
      %v2028 = vld [vmem:[%s2012 + $0x3c] sm:$0xf]
      %v2029 = vld [vmem:[%s2012 + $0x40] sm:$0xf]
      %v2030 = vld [vmem:[%s2012 + $0x44] sm:$0xf]
      %v2031 = vld [vmem:[%s2012 + $0x48] sm:$0xf]
      %v2032 = vld [vmem:[%s2012 + $0x4c] sm:$0xf]
      %v2033 = vld [vmem:[%s2012 + $0x50] sm:$0xf]
      %v2034 = vld [vmem:[%s2012 + $0x54] sm:$0xf]
      %v2035 = vld [vmem:[%s2012 + $0x58] sm:$0xf]
      %v2036 = vld [vmem:[%s2012 + $0x5c] sm:$0xf]
      %v2037 = vld [vmem:[%s2012 + $0x60] sm:$0xf]
      %v2038 = vld [vmem:[%s2012 + $0x64] sm:$0xf]
      %v2039 = vld [vmem:[%s2012 + $0x68] sm:$0xf]
      %v2040 = vld [vmem:[%s2012 + $0x6c] sm:$0xf]
      %v2041 = vld [vmem:[%s2012 + $0x70] sm:$0xf]
      %v2042 = vld [vmem:[%s2012 + $0x74] sm:$0xf]
      %v2043 = vld [vmem:[%s2012 + $0x78] sm:$0xf]
      %v2044 = vld [vmem:[%s2012 + $0x7c] sm:$0xf]
      %v2045 = vld [vmem:[%s2012 + $0x80] sm:$0xf]
      %v2046 = vld [vmem:[%s2012 + $0x84] sm:$0xf]
      %v2047 = vld [vmem:[%s2012 + $0x88] sm:$0xf]
      %v2048 = vld [vmem:[%s2012 + $0x8c] sm:$0xf]
      %v2049 = vld [vmem:[%s2012 + $0x90] sm:$0xf]
      %v2050 = vld [vmem:[%s2012 + $0x94] sm:$0xf]
      %v2051 = vld [vmem:[%s2012 + $0x98] sm:$0xf]
      %v2052 = vld [vmem:[%s2012 + $0x9c] sm:$0xf]
      %v2053 = vld [vmem:[%s2012 + $0xa0] sm:$0xf]
      %v2054 = vld [vmem:[%s2012 + $0xa4] sm:$0xf]
      %v2055 = vld [vmem:[%s2012 + $0xa8] sm:$0xf]
      %v2056 = vld [vmem:[%s2012 + $0xac] sm:$0xf]
      %v2057 = vld [vmem:[%s2012 + $0xb0] sm:$0xf]
      %v2058 = vld [vmem:[%s2012 + $0xb4] sm:$0xf]
      %v2059 = vld [vmem:[%s2012 + $0xb8] sm:$0xf]
      %v2060 = vld [vmem:[%s2012 + $0xbc] sm:$0xf]
      %v2061 = vld [vmem:[%s2012 + $0xc0] sm:$0xf]
      %v2062 = vld [vmem:[%s2012 + $0xc4] sm:$0xf]
      %v2063 = vld [vmem:[%s2012 + $0xc8] sm:$0xf]
      %v2064 = vld [vmem:[%s2012 + $0xcc] sm:$0xf]
      %v2065 = vld [vmem:[%s2012 + $0xd0] sm:$0xf]
      %v2066 = vld [vmem:[%s2012 + $0xd4] sm:$0xf]
      %v2067 = vld [vmem:[%s2012 + $0xd8] sm:$0xf]
      %v2068 = vld [vmem:[%s2012 + $0xdc] sm:$0xf]
      %v2069 = vld [vmem:[%s2012 + $0xe0] sm:$0xf]
      %v2070 = vld [vmem:[%s2012 + $0xe4] sm:$0xf]
      %v2071 = vld [vmem:[%s2012 + $0xe8] sm:$0xf]
      %v2072 = vld [vmem:[%s2012 + $0xec] sm:$0xf]
      %v2073 = vld [vmem:[%s2012 + $0xf0] sm:$0xf]
      %v2074 = vld [vmem:[%s2012 + $0xf4] sm:$0xf]
      %v2075 = vld [vmem:[%s2012 + $0xf8] sm:$0xf]
      %v2076 = vld [vmem:[%s2012 + $0xfc] sm:$0xf]
      %v2141 = vunpack.c.l.b16 %v2013
      %v2142 = vunpack.c.l.b16 %v2014
      %v2143 = vunpack.c.l.b16 %v2015
      %v2144 = vunpack.c.l.b16 %v2016
      %v2145 = vunpack.c.l.b16 %v2017
      %v2146 = vunpack.c.l.b16 %v2018
      %v2147 = vunpack.c.l.b16 %v2019
      %v2148 = vunpack.c.l.b16 %v2020
      %v2149 = vunpack.c.l.b16 %v2021
      %v2150 = vunpack.c.l.b16 %v2022
      %v2151 = vunpack.c.l.b16 %v2023
      %v2152 = vunpack.c.l.b16 %v2024
      %v2153 = vunpack.c.l.b16 %v2025
      %v2154 = vunpack.c.l.b16 %v2026
      %v2155 = vunpack.c.l.b16 %v2027
      %v2156 = vunpack.c.l.b16 %v2028
      %v2157 = vunpack.c.l.b16 %v2029
      %v2158 = vunpack.c.l.b16 %v2030
      %v2159 = vunpack.c.l.b16 %v2031
      %v2160 = vunpack.c.l.b16 %v2032
      %v2161 = vunpack.c.l.b16 %v2033
      %v2162 = vunpack.c.l.b16 %v2034
      %v2163 = vunpack.c.l.b16 %v2035
      %v2164 = vunpack.c.l.b16 %v2036
      %v2165 = vunpack.c.l.b16 %v2037
      %v2166 = vunpack.c.l.b16 %v2038
      %v2167 = vunpack.c.l.b16 %v2039
      %v2168 = vunpack.c.l.b16 %v2040
      %v2169 = vunpack.c.l.b16 %v2041
      %v2170 = vunpack.c.l.b16 %v2042
      %v2171 = vunpack.c.l.b16 %v2043
      %v2172 = vunpack.c.l.b16 %v2044
      %v2173 = vunpack.c.l.b16 %v2045
      %v2174 = vunpack.c.l.b16 %v2046
      %v2175 = vunpack.c.l.b16 %v2047
      %v2176 = vunpack.c.l.b16 %v2048
      %v2177 = vunpack.c.l.b16 %v2049
      %v2178 = vunpack.c.l.b16 %v2050
      %v2179 = vunpack.c.l.b16 %v2051
      %v2180 = vunpack.c.l.b16 %v2052
      %v2181 = vunpack.c.l.b16 %v2053
      %v2182 = vunpack.c.l.b16 %v2054
      %v2183 = vunpack.c.l.b16 %v2055
      %v2184 = vunpack.c.l.b16 %v2056
      %v2185 = vunpack.c.l.b16 %v2057
      %v2186 = vunpack.c.l.b16 %v2058
      %v2187 = vunpack.c.l.b16 %v2059
      %v2188 = vunpack.c.l.b16 %v2060
      %v2189 = vunpack.c.l.b16 %v2061
      %v2190 = vunpack.c.l.b16 %v2062
      %v2191 = vunpack.c.l.b16 %v2063
      %v2192 = vunpack.c.l.b16 %v2064
      %v2193 = vunpack.c.l.b16 %v2065
      %v2194 = vunpack.c.l.b16 %v2066
      %v2195 = vunpack.c.l.b16 %v2067
      %v2196 = vunpack.c.l.b16 %v2068
      %v2197 = vunpack.c.l.b16 %v2069
      %v2198 = vunpack.c.l.b16 %v2070
      %v2199 = vunpack.c.l.b16 %v2071
      %v2200 = vunpack.c.l.b16 %v2072
      %v2201 = vunpack.c.l.b16 %v2073
      %v2202 = vunpack.c.l.b16 %v2074
      %v2203 = vunpack.c.l.b16 %v2075
      %v2204 = vunpack.c.l.b16 %v2076
      %v2205 = vpack.c.b16 %v2142, %v2141
      %v2206 = vpack.c.b16 %v2144, %v2143
      %v2207 = vpack.c.b16 %v2146, %v2145
      %v2208 = vpack.c.b16 %v2148, %v2147
      %v2209 = vpack.c.b16 %v2150, %v2149
      %v2210 = vpack.c.b16 %v2152, %v2151
      %v2211 = vpack.c.b16 %v2154, %v2153
      %v2212 = vpack.c.b16 %v2156, %v2155
      %v2213 = vpack.c.b16 %v2158, %v2157
      %v2214 = vpack.c.b16 %v2160, %v2159
      %v2215 = vpack.c.b16 %v2162, %v2161
      %v2216 = vpack.c.b16 %v2164, %v2163
      %v2217 = vpack.c.b16 %v2166, %v2165
      %v2218 = vpack.c.b16 %v2168, %v2167
      %v2219 = vpack.c.b16 %v2170, %v2169
      %v2220 = vpack.c.b16 %v2172, %v2171
      %v2221 = vpack.c.b16 %v2174, %v2173
      %v2222 = vpack.c.b16 %v2176, %v2175
      %v2223 = vpack.c.b16 %v2178, %v2177
      %v2224 = vpack.c.b16 %v2180, %v2179
      %v2225 = vpack.c.b16 %v2182, %v2181
      %v2226 = vpack.c.b16 %v2184, %v2183
      %v2227 = vpack.c.b16 %v2186, %v2185
      %v2228 = vpack.c.b16 %v2188, %v2187
      %v2229 = vpack.c.b16 %v2190, %v2189
      %v2230 = vpack.c.b16 %v2192, %v2191
      %v2231 = vpack.c.b16 %v2194, %v2193
      %v2232 = vpack.c.b16 %v2196, %v2195
      %v2233 = vpack.c.b16 %v2198, %v2197
      %v2234 = vpack.c.b16 %v2200, %v2199
      %v2235 = vpack.c.b16 %v2202, %v2201
      %v2236 = vpack.c.b16 %v2204, %v2203
      %2269 = vmatprep.subr.bf16.mxu0 0
      %2270 = vmatpush1.bf16.msra.mxu0 %v2205
      %2271 = vmatprep.subr.bf16.mxu0 0
      %2272 = vmatpush1.bf16.msra.mxu0 %v2206
      %2273 = vmatprep.subr.bf16.mxu0 0
      %2274 = vmatpush1.bf16.msra.mxu0 %v2207
      %2275 = vmatprep.subr.bf16.mxu0 0
      %2276 = vmatpush1.bf16.msra.mxu0 %v2208
      %2277 = vmatprep.subr.bf16.mxu0 0
      %2278 = vmatpush1.bf16.msra.mxu0 %v2209
      %2279 = vmatprep.subr.bf16.mxu0 0
      %2280 = vmatpush1.bf16.msra.mxu0 %v2210
      %2281 = vmatprep.subr.bf16.mxu0 0
      %2282 = vmatpush1.bf16.msra.mxu0 %v2211
      %2283 = vmatprep.subr.bf16.mxu0 0
      %2284 = vmatpush1.bf16.msra.mxu0 %v2212
      %2285 = vmatprep.subr.bf16.mxu0 0
      %2286 = vmatpush1.bf16.msra.mxu0 %v2213
      %2287 = vmatprep.subr.bf16.mxu0 0
      %2288 = vmatpush1.bf16.msra.mxu0 %v2214
      %2289 = vmatprep.subr.bf16.mxu0 0
      %2290 = vmatpush1.bf16.msra.mxu0 %v2215
      %2291 = vmatprep.subr.bf16.mxu0 0
      %2292 = vmatpush1.bf16.msra.mxu0 %v2216
      %2293 = vmatprep.subr.bf16.mxu0 0
      %2294 = vmatpush1.bf16.msra.mxu0 %v2217
      %2295 = vmatprep.subr.bf16.mxu0 0
      %2296 = vmatpush1.bf16.msra.mxu0 %v2218
      %2297 = vmatprep.subr.bf16.mxu0 0
      %2298 = vmatpush1.bf16.msra.mxu0 %v2219
      %2299 = vmatprep.subr.bf16.mxu0 0
      %2300 = vmatpush1.bf16.msra.mxu0 %v2220
      %2301 = vmatprep.mubr.bf16.mxu0 %v1997
      %2302 = vmatmul.mubr.bf16.gmra.mrb[0].mxu0 %v1996
      %v2303 = vpop.f32.mrb[0].mxu0
      %v2304 = vadd.f32 0.0, %v2303
      %v2305 = vpop.f32.mrb[0].mxu0
      %v2306 = vpop.f32.mrb[0].mxu0
      %v2307 = vadd.f32 0.0, %v2306
      %v2308 = vpop.f32.mrb[0].mxu0
      %2309 = vmatprep.mubr.bf16.mxu0 %v2001
      %2310 = vmatmul.mubr.bf16.gmra.mrb[0].mxu0 %v2000
      %v2311 = vpop.f32.mrb[0].mxu0
      %v2312 = vadd.f32 0.0, %v2311
      %v2313 = vpop.f32.mrb[0].mxu0
      %v2314 = vpop.f32.mrb[0].mxu0
      %v2315 = vadd.f32 0.0, %v2314
      %v2316 = vpop.f32.mrb[0].mxu0
      %2317 = vmatprep.mubr.bf16.mxu0 %v2005
      %2318 = vmatmul.mubr.bf16.gmra.mrb[0].mxu0 %v2004
      %v2319 = vpop.f32.mrb[0].mxu0
      %v2320 = vadd.f32 0.0, %v2319
      %v2321 = vpop.f32.mrb[0].mxu0
      %v2322 = vpop.f32.mrb[0].mxu0
      %v2323 = vadd.f32 0.0, %v2322
      %v2324 = vpop.f32.mrb[0].mxu0
      %2325 = vmatprep.mubr.bf16.mxu0 %v2009
      %2326 = vmatmul.mubr.bf16.gmra.mrb[0].mxu0 %v2008
      %v2327 = vpop.f32.mrb[0].mxu0
      %v2328 = vadd.f32 0.0, %v2327
      %v2329 = vpop.f32.mrb[0].mxu0
      %v2330 = vpop.f32.mrb[0].mxu0
      %v2331 = vadd.f32 0.0, %v2330
      %v2332 = vpop.f32.mrb[0].mxu0
      %2333 = vdwg.mxu0
      %2334 = vmatprep.subr.bf16.mxu0 0
      %2335 = vmatpush1.bf16.msra.mxu0 %v2221
      %2336 = vmatprep.subr.bf16.mxu0 0
      %2337 = vmatpush1.bf16.msra.mxu0 %v2222
      %2338 = vmatprep.subr.bf16.mxu0 0
      %2339 = vmatpush1.bf16.msra.mxu0 %v2223
      %2340 = vmatprep.subr.bf16.mxu0 0
      %2341 = vmatpush1.bf16.msra.mxu0 %v2224
      %2342 = vmatprep.subr.bf16.mxu0 0
      %2343 = vmatpush1.bf16.msra.mxu0 %v2225
      %2344 = vmatprep.subr.bf16.mxu0 0
      %2345 = vmatpush1.bf16.msra.mxu0 %v2226
      %2346 = vmatprep.subr.bf16.mxu0 0
      %2347 = vmatpush1.bf16.msra.mxu0 %v2227
      %2348 = vmatprep.subr.bf16.mxu0 0
      %2349 = vmatpush1.bf16.msra.mxu0 %v2228
      %2350 = vmatprep.subr.bf16.mxu0 0
      %2351 = vmatpush1.bf16.msra.mxu0 %v2229
      %2352 = vmatprep.subr.bf16.mxu0 0
      %2353 = vmatpush1.bf16.msra.mxu0 %v2230
      %2354 = vmatprep.subr.bf16.mxu0 0
      %2355 = vmatpush1.bf16.msra.mxu0 %v2231
      %2356 = vmatprep.subr.bf16.mxu0 0
      %2357 = vmatpush1.bf16.msra.mxu0 %v2232
      %2358 = vmatprep.subr.bf16.mxu0 0
      %2359 = vmatpush1.bf16.msra.mxu0 %v2233
      %2360 = vmatprep.subr.bf16.mxu0 0
      %2361 = vmatpush1.bf16.msra.mxu0 %v2234
      %2362 = vmatprep.subr.bf16.mxu0 0
      %2363 = vmatpush1.bf16.msra.mxu0 %v2235
      %2364 = vmatprep.subr.bf16.mxu0 0
      %2365 = vmatpush1.bf16.msra.mxu0 %v2236
      %2366 = vmatprep.mubr.bf16.mxu0 %v1999
      %2367 = vmatmul.mubr.bf16.gmra.mrb[0].mxu0 %v1998
      %v2368 = vpop.f32.mrb[0].mxu0
      %v2369 = vadd.f32 %v2304, %v2368
      %v2370 = vpop.f32.mrb[0].mxu0
      %v2371 = vpop.f32.mrb[0].mxu0
      %v2372 = vadd.f32 %v2307, %v2371
      %v2373 = vpop.f32.mrb[0].mxu0
      %2374 = vmatprep.mubr.bf16.mxu0 %v2003
      %2375 = vmatmul.mubr.bf16.gmra.mrb[0].mxu0 %v2002
      %v2376 = vpop.f32.mrb[0].mxu0
      %v2377 = vadd.f32 %v2312, %v2376
      %v2378 = vpop.f32.mrb[0].mxu0
      %v2379 = vpop.f32.mrb[0].mxu0
      %v2380 = vadd.f32 %v2315, %v2379
      %v2381 = vpop.f32.mrb[0].mxu0
      %2382 = vmatprep.mubr.bf16.mxu0 %v2007
      %2383 = vmatmul.mubr.bf16.gmra.mrb[0].mxu0 %v2006
      %v2384 = vpop.f32.mrb[0].mxu0
      %v2385 = vadd.f32 %v2320, %v2384
      %v2386 = vpop.f32.mrb[0].mxu0
      %v2387 = vpop.f32.mrb[0].mxu0
      %v2388 = vadd.f32 %v2323, %v2387
      %v2389 = vpop.f32.mrb[0].mxu0
      %2390 = vmatprep.mubr.bf16.mxu0 %v2011
      %2391 = vmatmul.mubr.bf16.gmra.mrb[0].mxu0 %v2010
      %v2392 = vpop.f32.mrb[0].mxu0
      %v2393 = vadd.f32 %v2328, %v2392
      %v2394 = vpop.f32.mrb[0].mxu0
      %v2395 = vpop.f32.mrb[0].mxu0
      %v2396 = vadd.f32 %v2331, %v2395
      %v2397 = vpop.f32.mrb[0].mxu0
      %2398 = vdwg.mxu0
      %v2399 = vadd.f32 %v1796, %v2369
      %v2400 = vadd.f32 %v1797, %v2372
      %v2401 = vadd.f32 %v1798, %v2377
      %v2402 = vadd.f32 %v1799, %v2380
      %v2403 = vadd.f32 %v1800, %v2385
      %v2404 = vadd.f32 %v1801, %v2388
      %v2405 = vadd.f32 %v1802, %v2393
      %v2406 = vadd.f32 %v1803, %v2396
      %v2407 = vld [vmem:[%s2] sm:$0x1]
      %v2409 = vlaneseq
      %v2410 = vshrl.u32 %v2409, 7
      %v2411 = vsub.s32 0, %v2410
      %v2412 = vrot.slane %v2407, %v2411
      %v2414 = vadd.f32 %v2399, %v2412
      %v2415 = vadd.f32 %v2400, %v2412
      %v2416 = vadd.f32 %v2401, %v2412
      %v2417 = vadd.f32 %v2402, %v2412
      %v2418 = vadd.f32 %v2403, %v2412
      %v2419 = vadd.f32 %v2404, %v2412
      %v2420 = vadd.f32 %v2405, %v2412
      %v2421 = vadd.f32 %v2406, %v2412
      %v2422 = vmax.f32 %v2414, 0.0
      %v2423 = vmax.f32 %v2415, 0.0
      %v2424 = vmax.f32 %v2416, 0.0
      %v2425 = vmax.f32 %v2417, 0.0
      %v2426 = vmax.f32 %v2418, 0.0
      %v2427 = vmax.f32 %v2419, 0.0
      %v2428 = vmax.f32 %v2420, 0.0
      %v2429 = vmax.f32 %v2421, 0.0
      %v2430 = vpack.c.bf16 %v2422, %v2422
      %v2431 = vpack.c.bf16 %v2423, %v2423
      %v2432 = vpack.c.bf16 %v2424, %v2424
      %v2433 = vpack.c.bf16 %v2425, %v2425
      %v2434 = vpack.c.bf16 %v2426, %v2426
      %v2435 = vpack.c.bf16 %v2427, %v2427
      %v2436 = vpack.c.bf16 %v2428, %v2428
      %v2437 = vpack.c.bf16 %v2429, %v2429
      %2438 = vst [vmem:[%s192] sm:$0xf] %v2430
      %2439 = vst [vmem:[%s192 + $0x4] sm:$0xf] %v2431
      %2440 = vst [vmem:[%s192 + $0x8] sm:$0xf] %v2432
      %2441 = vst [vmem:[%s192 + $0xc] sm:$0xf] %v2433
      %2442 = vst [vmem:[%s192 + $0x10] sm:$0xf] %v2434
      %2443 = vst [vmem:[%s192 + $0x14] sm:$0xf] %v2435
      %2444 = vst [vmem:[%s192 + $0x18] sm:$0xf] %v2436
      %2445 = vst [vmem:[%s192 + $0x1c] sm:$0xf] %v2437
      %s2446 = smul.u32 8, %s19
      %p2447 = scmp.lt.s32.totalorder %s18, 1
      %s2448 = scalar_select %p2447, %s18, 1
      %p2449 = scmp.lt.s32.totalorder %s2446, 7
      %s2450 = scalar_select %p2449, %s2446, 7
      %s2451 = smul.addr %s2448, 8
      %s2452 = sadd.s32 %s2450, %s2451
      %s2453 = smul.addr %s2452, 4
      %s2454 = scalar_lea.vmem %s3, %s2453
      // Predicated region
      $region33: #{basic_block_forward.2} parent=31 // pred_check
        %p2455 = pneg %p114
      $region34: #{basic_block_forward.2} parent=31 // pred_check_branch
        %2457 = sbr.rel (%p2455) target = $region36
      $region35: #{basic_block_forward.2} parent=31 // pred_region
        %s2458 = smul.u32 8, %s19
      $region36: #{basic_block_forward.2} parent=31 // pred_fallthru
        _
    $region32: #{basic_block_forward.2} parent=5 // pred_fallthru
      _
    %p2459 = scmp.le.s32.totalorder 2, %s9
    // Predicated region
    $region37: #{basic_block_forward.2} parent=5 // pred_check
      %p2460 = pneg %p2459
    $region38: #{basic_block_forward.2} parent=5 // pred_check_branch
      %2462 = sbr.rel (%p2460) target = $region40
    $region39: #{basic_block_forward.2} parent=5 // pred_region
      %s2463 = ssub.s32 %s9, 2
      // Predicated region
      $region41: #{basic_block_forward.2} parent=39 // pred_check
        %p2464 = pneg %p120
      $region42: #{basic_block_forward.2} parent=39 // pred_check_branch
        %2466 = sbr.rel (%p2464) target = $region44
      $region43: #{basic_block_forward.2} parent=39 // pred_region
        %s2467 = smul.u32 8, %s21
        %p2468 = scmp.lt.s32.totalorder %s20, 1
        %s2469 = scalar_select %p2468, %s20, 1
        %p2470 = scmp.lt.s32.totalorder %s2467, 7
        %s2471 = scalar_select %p2470, %s2467, 7
        %s2472 = smul.addr %s2469, 8
        %s2473 = sadd.s32 %s2471, %s2472
        %s2474 = smul.addr %s2473, 4
        %s2475 = scalar_lea.vmem %s3, %s2474
      $region44: #{basic_block_forward.2} parent=39 // pred_fallthru
        _
    $region40: #{basic_block_forward.2} parent=5 // pred_fallthru
      _
  $region6: #{basic_block_forward.2} parent=0 // loop_footer
    %s13 = sadd.s32 1, %s9
  $region7: #{basic_block_forward.2} parent=0 // loop_footer_branch
    %8 = sbr.rel target = $region3
  $region8: #{basic_block_forward.2} parent=0 // loop_exit
    _

// kernel: basic_block_forward.3
$region0: #{basic_block_forward.3}
  #allocation0 [shape = 'u32[]', space=smem, size = 0x4, offset = 0x4, fixed_abs, tag = 'smem constant byte address 0x4 - core index']
  #allocation1 [shape = 'u32[144,128]{1,0:T(1,128)}', space=vmem, size = 0x12000, scoped, tag = 'internal scratch']
  %s0 = inlined_call_operand.vmem [shape: bf16[2,10,10,128], index: 0, kind: input, shape index: {}]
  %s1 = inlined_call_operand.vmem [shape: bf16[9,128,128], index: 1, kind: input, shape index: {}]
  %s2 = inlined_call_operand.vmem [shape: f32[1,128], index: 2, kind: input, shape index: {}]
  %s3 = inlined_call_operand.vmem [shape: bf16[2,8,8,128], index: 3, kind: input, shape index: {}]
  %s4 = inlined_call_operand.vmem [shape: bf16[128,128], index: 4, kind: input, shape index: {}]
  %s5 = inlined_call_operand.vmem [shape: f32[1,128], index: 5, kind: input, shape index: {}]
  %s6 = inlined_call_operand.vmem [shape: f32[2,8,8,128], index: 6, kind: output, shape index: {}]
  %s7 = sld [smem:[#allocation0]]
  $region57: #{basic_block_forward.3} parent=0
    _
  %s9 = ssub.s32 1, %s7
  %s10 = scalar_select 0, %s9, %s7
  loop: start=0, step=1, limit=4
  $region2: #{basic_block_forward.3} parent=0 // loop_pre_header
    _
  $region3: #{basic_block_forward.3} parent=0 // loop_header
    %s12 = sphi 0, %s16
    %p13 = scmp.ge.s32.totalorder %s12, 4
    %s19 = sphi 0, %s31
    %s20 = sphi 0, %s27
    %s21 = sphi 0, %s19
    %s22 = sphi 0, %s20
    %s23 = sphi 0, %s21
    %s24 = sphi 0, %s22
    %s34 = sphi 0, %s36
    %s37 = sphi 0, %s34
    %s38 = sphi 0, %s37
    %s54 = sphi 0, %s38
    %s58 = sphi 0, %s58
    %s60 = sphi 0, %s58
    %s61 = sphi 0, %s60
    %s75 = sphi 0, %s61
    %s79 = sphi 0, %s79
    %s81 = sphi 0, %s79
    %s82 = sphi 0, %s81
    %s96 = sphi 0, %s82
    %s104 = sphi 0, %s106
    %s107 = sphi 0, %s104
    %s108 = sphi 0, %s107
    %s124 = sphi 0, %s108
    %s128 = sphi 0, %s128
    %s130 = sphi 0, %s128
    %s131 = sphi 0, %s130
    %s145 = sphi 0, %s131
    %s149 = sphi 0, %s149
    %s151 = sphi 0, %s149
    %s152 = sphi 0, %s151
    %s166 = sphi 0, %s152
    %s174 = sphi 0, %s176
    %s177 = sphi 0, %s174
    %s178 = sphi 0, %s177
    %s194 = sphi 0, %s178
  $region4: #{basic_block_forward.3} parent=0 // loop_header_branch
    %15 = sbr.rel (%p13) target = $region8
  $region5: #{basic_block_forward.3} parent=0 // loop_body
    %s17 = ssub.s32 %s12, 1
    %s18 = ssub.s32 %s12, 2
    %s25 = sadd.s32 1, %s20
    %p26 = scmp.ge.s32.totalorder %s25, 1
    %s27 = scalar_select %p26, 0, %s25
    %s28 = sadd.s32 1, %s19
    %s29 = scalar_select %p26, %s28, %s19
    %p30 = scmp.ge.s32.totalorder %s29, 2
    %s31 = scalar_select %p30, 0, %s29
    %s32 = ssub.s32 %s19, %s31
    %p33 = scmp.eq.s32.totalorder %s32, 0
    %s35 = sadd.s32 %s34, 1
    %s36 = scalar_select %p33, %s34, %s35
    %p39 = pneg %p33
    %p40 = scmp.eq.s32.totalorder %s12, 1
    %p41 = por %p39, %p40
    %p42 = scmp.ne.s32.totalorder %s34, %s37
    %p43 = scmp.eq.s32.totalorder %s12, 0
    %p44 = por %p42, %p43
    %p45 = scmp.ne.s32.totalorder %s34, %s37
    %p46 = scmp.eq.s32.totalorder %s17, 1
    %p47 = por %p45, %p46
    %p48 = scmp.ne.s32.totalorder %s37, %s38
    %p49 = scmp.eq.s32.totalorder %s17, 0
    %p50 = por %p48, %p49
    %p51 = scmp.ne.s32.totalorder %s37, %s38
    %p52 = scmp.eq.s32.totalorder %s18, 1
    %p53 = por %p51, %p52
    %p55 = scmp.ne.s32.totalorder %s38, %s54
    %p56 = scmp.eq.s32.totalorder %s18, 0
    %p57 = por %p55, %p56
    %s59 = sadd.s32 %s58, 1
    %p62 = scmp.eq.s32.totalorder %s12, 1
    %p63 = scmp.ne.s32.totalorder %s58, %s60
    %p64 = scmp.eq.s32.totalorder %s12, 0
    %p65 = por %p63, %p64
    %p66 = scmp.ne.s32.totalorder %s58, %s60
    %p67 = scmp.eq.s32.totalorder %s17, 1
    %p68 = por %p66, %p67
    %p69 = scmp.ne.s32.totalorder %s60, %s61
    %p70 = scmp.eq.s32.totalorder %s17, 0
    %p71 = por %p69, %p70
    %p72 = scmp.ne.s32.totalorder %s60, %s61
    %p73 = scmp.eq.s32.totalorder %s18, 1
    %p74 = por %p72, %p73
    %p76 = scmp.ne.s32.totalorder %s61, %s75
    %p77 = scmp.eq.s32.totalorder %s18, 0
    %p78 = por %p76, %p77
    %s80 = sadd.s32 %s79, 1
    %p83 = scmp.eq.s32.totalorder %s12, 1
    %p84 = scmp.ne.s32.totalorder %s79, %s81
    %p85 = scmp.eq.s32.totalorder %s12, 0
    %p86 = por %p84, %p85
    %p87 = scmp.ne.s32.totalorder %s79, %s81
    %p88 = scmp.eq.s32.totalorder %s17, 1
    %p89 = por %p87, %p88
    %p90 = scmp.ne.s32.totalorder %s81, %s82
    %p91 = scmp.eq.s32.totalorder %s17, 0
    %p92 = por %p90, %p91
    %p93 = scmp.ne.s32.totalorder %s81, %s82
    %p94 = scmp.eq.s32.totalorder %s18, 1
    %p95 = por %p93, %p94
    %p97 = scmp.ne.s32.totalorder %s82, %s96
    %p98 = scmp.eq.s32.totalorder %s18, 0
    %p99 = por %p97, %p98
    %s100 = ssub.s32 %s19, %s31
    %s101 = ssub.s32 %s20, %s27
    %s102 = sor.u32 %s100, %s101
    %p103 = scmp.eq.s32.totalorder %s102, 0
    %s105 = sadd.s32 %s104, 1
    %s106 = scalar_select %p103, %s104, %s105
    %p109 = pneg %p103
    %p110 = scmp.eq.s32.totalorder %s12, 1
    %p111 = por %p109, %p110
    %p112 = scmp.ne.s32.totalorder %s104, %s107
    %p113 = scmp.eq.s32.totalorder %s12, 0
    %p114 = por %p112, %p113
    %p115 = scmp.ne.s32.totalorder %s104, %s107
    %p116 = scmp.eq.s32.totalorder %s17, 1
    %p117 = por %p115, %p116
    %p118 = scmp.ne.s32.totalorder %s107, %s108
    %p119 = scmp.eq.s32.totalorder %s17, 0
    %p120 = por %p118, %p119
    %p121 = scmp.ne.s32.totalorder %s107, %s108
    %p122 = scmp.eq.s32.totalorder %s18, 1
    %p123 = por %p121, %p122
    %p125 = scmp.ne.s32.totalorder %s108, %s124
    %p126 = scmp.eq.s32.totalorder %s18, 0
    %p127 = por %p125, %p126
    %s129 = sadd.s32 %s128, 1
    %p132 = scmp.eq.s32.totalorder %s12, 1
    %p133 = scmp.ne.s32.totalorder %s128, %s130
    %p134 = scmp.eq.s32.totalorder %s12, 0
    %p135 = por %p133, %p134
    %p136 = scmp.ne.s32.totalorder %s128, %s130
    %p137 = scmp.eq.s32.totalorder %s17, 1
    %p138 = por %p136, %p137
    %p139 = scmp.ne.s32.totalorder %s130, %s131
    %p140 = scmp.eq.s32.totalorder %s17, 0
    %p141 = por %p139, %p140
    %p142 = scmp.ne.s32.totalorder %s130, %s131
    %p143 = scmp.eq.s32.totalorder %s18, 1
    %p144 = por %p142, %p143
    %p146 = scmp.ne.s32.totalorder %s131, %s145
    %p147 = scmp.eq.s32.totalorder %s18, 0
    %p148 = por %p146, %p147
    %s150 = sadd.s32 %s149, 1
    %p153 = scmp.eq.s32.totalorder %s12, 1
    %p154 = scmp.ne.s32.totalorder %s149, %s151
    %p155 = scmp.eq.s32.totalorder %s12, 0
    %p156 = por %p154, %p155
    %p157 = scmp.ne.s32.totalorder %s149, %s151
    %p158 = scmp.eq.s32.totalorder %s17, 1
    %p159 = por %p157, %p158
    %p160 = scmp.ne.s32.totalorder %s151, %s152
    %p161 = scmp.eq.s32.totalorder %s17, 0
    %p162 = por %p160, %p161
    %p163 = scmp.ne.s32.totalorder %s151, %s152
    %p164 = scmp.eq.s32.totalorder %s18, 1
    %p165 = por %p163, %p164
    %p167 = scmp.ne.s32.totalorder %s152, %s166
    %p168 = scmp.eq.s32.totalorder %s18, 0
    %p169 = por %p167, %p168
    %s170 = ssub.s32 %s19, %s31
    %s171 = ssub.s32 %s20, %s27
    %s172 = sor.u32 %s170, %s171
    %p173 = scmp.eq.s32.totalorder %s172, 0
    %s175 = sadd.s32 %s174, 1
    %s176 = scalar_select %p173, %s174, %s175
    %p179 = pneg %p173
    %p180 = scmp.eq.s32.totalorder %s12, 1
    %p181 = por %p179, %p180
    %p182 = scmp.ne.s32.totalorder %s174, %s177
    %p183 = scmp.eq.s32.totalorder %s12, 0
    %p184 = por %p182, %p183
    %p185 = scmp.ne.s32.totalorder %s174, %s177
    %p186 = scmp.eq.s32.totalorder %s17, 1
    %p187 = por %p185, %p186
    %p188 = scmp.ne.s32.totalorder %s177, %s178
    %p189 = scmp.eq.s32.totalorder %s17, 0
    %p190 = por %p188, %p189
    %p191 = scmp.ne.s32.totalorder %s177, %s178
    %p192 = scmp.eq.s32.totalorder %s18, 1
    %p193 = por %p191, %p192
    %p195 = scmp.ne.s32.totalorder %s178, %s194
    %p196 = scmp.eq.s32.totalorder %s18, 0
    %p197 = por %p195, %p196
    %p198 = scmp.le.s32.totalorder 1, %s12
    %p199 = scmp.lt.s32.totalorder %s12, 3
    %p200 = pnand %p198, %p199
    %p201 = pneg %p200
    // Predicated region
    $region9: #{basic_block_forward.3} parent=5 // pred_check
      _
    $region10: #{basic_block_forward.3} parent=5 // pred_check_branch
      %203 = sbr.rel (%p200) target = $region12
    $region11: #{basic_block_forward.3} parent=5 // pred_region
      %s204 = ssub.s32 %s12, 1
      // Predicated region
      $region13: #{basic_block_forward.3} parent=11 // pred_check
        %p205 = pneg %p71
      $region14: #{basic_block_forward.3} parent=11 // pred_check_branch
        %207 = sbr.rel (%p205) target = $region16
      $region15: #{basic_block_forward.3} parent=11 // pred_region
        _
      $region16: #{basic_block_forward.3} parent=11 // pred_fallthru
        _
      // Predicated region
      $region17: #{basic_block_forward.3} parent=11 // pred_check
        %p208 = pneg %p92
      $region18: #{basic_block_forward.3} parent=11 // pred_check_branch
        %210 = sbr.rel (%p208) target = $region20
      $region19: #{basic_block_forward.3} parent=11 // pred_region
        _
      $region20: #{basic_block_forward.3} parent=11 // pred_fallthru
        _
      // Predicated region
      $region21: #{basic_block_forward.3} parent=11 // pred_check
        %p211 = pneg %p141
      $region22: #{basic_block_forward.3} parent=11 // pred_check_branch
        %213 = sbr.rel (%p211) target = $region24
      $region23: #{basic_block_forward.3} parent=11 // pred_region
        _
      $region24: #{basic_block_forward.3} parent=11 // pred_fallthru
        _
      // Predicated region
      $region25: #{basic_block_forward.3} parent=11 // pred_check
        %p214 = pneg %p162
      $region26: #{basic_block_forward.3} parent=11 // pred_check_branch
        %216 = sbr.rel (%p214) target = $region28
      $region27: #{basic_block_forward.3} parent=11 // pred_region
        _
      $region28: #{basic_block_forward.3} parent=11 // pred_fallthru
        _
    $region12: #{basic_block_forward.3} parent=5 // pred_fallthru
      _
    %p217 = scmp.lt.s32.totalorder %s12, 2
    // Predicated region
    $region29: #{basic_block_forward.3} parent=5 // pred_check
      %p218 = pneg %p217
    $region30: #{basic_block_forward.3} parent=5 // pred_check_branch
      %220 = sbr.rel (%p218) target = $region32
    $region31: #{basic_block_forward.3} parent=5 // pred_region
      // Predicated region
      $region33: #{basic_block_forward.3} parent=31 // pred_check
        %p221 = pneg %p44
      $region34: #{basic_block_forward.3} parent=31 // pred_check_branch
        %223 = sbr.rel (%p221) target = $region36
      $region35: #{basic_block_forward.3} parent=31 // pred_region
        %p224 = scmp.lt.s32.totalorder %s19, 1
        %s225 = scalar_select %p224, %s19, 1
        %s226 = smul.addr %s225, 20
        %s227 = smul.addr %s226, 4
        %s228 = scalar_lea.vmem %s0, %s227
      $region36: #{basic_block_forward.3} parent=31 // pred_fallthru
        _
      // Predicated region
      $region37: #{basic_block_forward.3} parent=31 // pred_check
        %p229 = pneg %p114
      $region38: #{basic_block_forward.3} parent=31 // pred_check_branch
        %231 = sbr.rel (%p229) target = $region40
      $region39: #{basic_block_forward.3} parent=31 // pred_region
        %s232 = smul.u32 8, %s20
        %p233 = scmp.lt.s32.totalorder %s19, 1
        %s234 = scalar_select %p233, %s19, 1
        %p235 = scmp.lt.s32.totalorder %s232, 7
        %s236 = scalar_select %p235, %s232, 7
        %s237 = smul.addr %s234, 8
        %s238 = sadd.s32 %s236, %s237
        %s239 = smul.addr %s238, 4
        %s240 = scalar_lea.vmem %s3, %s239
        %s241 = smul.u32 8, %s20
      $region40: #{basic_block_forward.3} parent=31 // pred_fallthru
        _
    $region32: #{basic_block_forward.3} parent=5 // pred_fallthru
      _
    %p242 = scmp.le.s32.totalorder 1, %s12
    %p243 = scmp.lt.s32.totalorder %s12, 3
    %p244 = pnand %p242, %p243
    %p245 = pneg %p244
    // Predicated region
    $region41: #{basic_block_forward.3} parent=5 // pred_check
      _
    $region42: #{basic_block_forward.3} parent=5 // pred_check_branch
      %247 = sbr.rel (%p244) target = $region44
    $region43: #{basic_block_forward.3} parent=5 // pred_region
      %s248 = ssub.s32 %s12, 1
      %p249 = scmp.lt.s32.totalorder %s21, 1
      %s250 = scalar_select %p249, %s21, 1
      %s251 = smul.addr %s250, 20
      %s252 = smul.addr %s251, 4
      %s253 = scalar_lea.vmem %s0, %s252
      %p254 = pneg %p50
      %p255 = pneg %p47
      %p256 = pneg %p71
      %p257 = pneg %p68
      %p258 = pneg %p92
      %p259 = pneg %p89
      %s260 = smul.u32 8, %s22
      %p261 = scmp.lt.s32.totalorder %s21, 1
      %s262 = scalar_select %p261, %s21, 1
      %p263 = scmp.lt.s32.totalorder %s260, 7
      %s264 = scalar_select %p263, %s260, 7
      %s265 = smul.addr %s262, 8
      %s266 = sadd.s32 %s264, %s265
      %s267 = smul.addr %s266, 4
      %s268 = scalar_lea.vmem %s3, %s267
      %p269 = pneg %p120
      %p270 = pneg %p117
      %p271 = pneg %p141
      %p272 = pneg %p138
      %p273 = pneg %p162
      %p274 = pneg %p159
      %p275 = pneg %p190
      %p276 = pneg %p187
      %s277 = smul.u32 8, %s22
      %p278 = scmp.lt.s32.totalorder %s21, 1
      %s279 = scalar_select %p278, %s21, 1
      %p280 = scmp.lt.s32.totalorder %s277, 7
      %s281 = scalar_select %p280, %s277, 7
      %s282 = smul.addr %s279, 8
      %s283 = sadd.s32 %s281, %s282
      %s284 = smul.addr %s283, 8
      %s285 = scalar_lea.vmem %s6, %s284
      %p286 = scmp.lt.s32.totalorder %s21, 1
      %s287 = scalar_select %p286, %s21, 1
      %s288 = smul.addr %s287, 20
      %s289 = smul.addr %s288, 4
      %s290 = scalar_lea.vmem %s0, %s289
      %s291 = smul.u32 8, %s22
      %p292 = scmp.lt.s32.totalorder %s21, 1
      %s293 = scalar_select %p292, %s21, 1
      %p294 = scmp.lt.s32.totalorder %s291, 7
      %s295 = scalar_select %p294, %s291, 7
      %s296 = smul.addr %s293, 8
      %s297 = sadd.s32 %s295, %s296
      %s298 = smul.addr %s297, 4
      %s299 = scalar_lea.vmem %s3, %s298
      %s300 = smul.u32 8, %s22
      %s301 = smul.u32 8, %s22
      %p302 = scmp.lt.s32.totalorder %s21, 1
      %s303 = scalar_select %p302, %s21, 1
      %p304 = scmp.lt.s32.totalorder %s301, 7
      %s305 = scalar_select %p304, %s301, 7
      %s306 = smul.addr %s303, 8
      %s307 = sadd.s32 %s305, %s306
      %s308 = smul.addr %s307, 8
      %s309 = scalar_lea.vmem %s6, %s308
      %s310 = smul.u32 8, %s22
      %s312 = smul.u32 %s22, 8
      %s313 = smul.u32 %s312, 2
      %s314 = smul.addr %s313, 4
      %s315 = scalar_lea.vmem %s290, %s314
      %v316 = vld [vmem:[%s315] sm:$0xf]
      %v317 = vld [vmem:[%s315 + $0x4] sm:$0x1]
      %v318 = vld [vmem:[%s315 + $0x8] sm:$0xf]
      %v319 = vld [vmem:[%s315 + $0xc] sm:$0x1]
      %v320 = vld [vmem:[%s315 + $0x10] sm:$0xf]
      %v321 = vld [vmem:[%s315 + $0x14] sm:$0x1]
      %v322 = vld [vmem:[%s315 + $0x18] sm:$0xf]
      %v323 = vld [vmem:[%s315 + $0x1c] sm:$0x1]
      %v324 = vld [vmem:[%s315 + $0x20] sm:$0xf]
      %v325 = vld [vmem:[%s315 + $0x24] sm:$0x1]
      %v326 = vld [vmem:[%s315 + $0x28] sm:$0xf]
      %v327 = vld [vmem:[%s315 + $0x2c] sm:$0x1]
      %v328 = vld [vmem:[%s315 + $0x30] sm:$0xf]
      %v329 = vld [vmem:[%s315 + $0x34] sm:$0x1]
      %v330 = vld [vmem:[%s315 + $0x38] sm:$0xf]
      %v331 = vld [vmem:[%s315 + $0x3c] sm:$0x1]
      %v332 = vunpack.c.l.bf16 %v316
      %v333 = vunpack.c.l.bf16 %v317
      %v334 = vunpack.c.l.bf16 %v318
      %v335 = vunpack.c.l.bf16 %v319
      %v336 = vunpack.c.l.bf16 %v320
      %v337 = vunpack.c.l.bf16 %v321
      %v338 = vunpack.c.l.bf16 %v322
      %v339 = vunpack.c.l.bf16 %v323
      %v340 = vunpack.c.l.bf16 %v324
      %v341 = vunpack.c.l.bf16 %v325
      %v342 = vunpack.c.l.bf16 %v326
      %v343 = vunpack.c.l.bf16 %v327
      %v344 = vunpack.c.l.bf16 %v328
      %v345 = vunpack.c.l.bf16 %v329
      %v346 = vunpack.c.l.bf16 %v330
      %v347 = vunpack.c.l.bf16 %v331
      %v348 = vpack.c.bf16 %v334, %v332
      %v349 = vpack.c.bf16 %v338, %v336
      %v350 = vpack.c.bf16 %v342, %v340
      %v351 = vpack.c.bf16 %v346, %v344
      %v352 = vld [vmem:[%s1] sm:$0xf]
      %v353 = vld [vmem:[%s1 + $0x4] sm:$0xf]
      %v354 = vld [vmem:[%s1 + $0x8] sm:$0xf]
      %v355 = vld [vmem:[%s1 + $0xc] sm:$0xf]
      %v356 = vld [vmem:[%s1 + $0x10] sm:$0xf]
      %v357 = vld [vmem:[%s1 + $0x14] sm:$0xf]
      %v358 = vld [vmem:[%s1 + $0x18] sm:$0xf]
      %v359 = vld [vmem:[%s1 + $0x1c] sm:$0xf]
      %v360 = vld [vmem:[%s1 + $0x20] sm:$0xf]
      %v361 = vld [vmem:[%s1 + $0x24] sm:$0xf]
      %v362 = vld [vmem:[%s1 + $0x28] sm:$0xf]
      %v363 = vld [vmem:[%s1 + $0x2c] sm:$0xf]
      %v364 = vld [vmem:[%s1 + $0x30] sm:$0xf]
      %v365 = vld [vmem:[%s1 + $0x34] sm:$0xf]
      %v366 = vld [vmem:[%s1 + $0x38] sm:$0xf]
      %v367 = vld [vmem:[%s1 + $0x3c] sm:$0xf]
      %vm384 = vcmask 1046528
      %v385 = vrot.slane %v332, 1
      %v386 = vrot.slane %v333, 1
      %v387 = vsel %vm384, %v385, %v386
      %v388 = vrot.slane %v334, 1
      %v389 = vrot.slane %v335, 1
      %v390 = vsel %vm384, %v388, %v389
      %v391 = vrot.slane %v336, 1
      %v392 = vrot.slane %v337, 1
      %v393 = vsel %vm384, %v391, %v392
      %v394 = vrot.slane %v338, 1
      %v395 = vrot.slane %v339, 1
      %v396 = vsel %vm384, %v394, %v395
      %v397 = vrot.slane %v340, 1
      %v398 = vrot.slane %v341, 1
      %v399 = vsel %vm384, %v397, %v398
      %v400 = vrot.slane %v342, 1
      %v401 = vrot.slane %v343, 1
      %v402 = vsel %vm384, %v400, %v401
      %v403 = vrot.slane %v344, 1
      %v404 = vrot.slane %v345, 1
      %v405 = vsel %vm384, %v403, %v404
      %v406 = vrot.slane %v346, 1
      %v407 = vrot.slane %v347, 1
      %v408 = vsel %vm384, %v406, %v407
      %v417 = vpack.c.bf16 %v390, %v387
      %v418 = vpack.c.bf16 %v396, %v393
      %v419 = vpack.c.bf16 %v402, %v399
      %v420 = vpack.c.bf16 %v408, %v405
      %s421 = scalar_lea.vmem %s1, 64
      %v422 = vld [vmem:[%s421] sm:$0xf]
      %v423 = vld [vmem:[%s421 + $0x4] sm:$0xf]
      %v424 = vld [vmem:[%s421 + $0x8] sm:$0xf]
      %v425 = vld [vmem:[%s421 + $0xc] sm:$0xf]
      %v426 = vld [vmem:[%s421 + $0x10] sm:$0xf]
      %v427 = vld [vmem:[%s421 + $0x14] sm:$0xf]
      %v428 = vld [vmem:[%s421 + $0x18] sm:$0xf]
      %v429 = vld [vmem:[%s421 + $0x1c] sm:$0xf]
      %v430 = vld [vmem:[%s421 + $0x20] sm:$0xf]
      %v431 = vld [vmem:[%s421 + $0x24] sm:$0xf]
      %v432 = vld [vmem:[%s421 + $0x28] sm:$0xf]
      %v433 = vld [vmem:[%s421 + $0x2c] sm:$0xf]
      %v434 = vld [vmem:[%s421 + $0x30] sm:$0xf]
      %v435 = vld [vmem:[%s421 + $0x34] sm:$0xf]
      %v436 = vld [vmem:[%s421 + $0x38] sm:$0xf]
      %v437 = vld [vmem:[%s421 + $0x3c] sm:$0xf]
      %v454 = vunpack.c.l.b16 %v422
      %v455 = vunpack.c.l.b16 %v423
      %v456 = vunpack.c.l.b16 %v424
      %v457 = vunpack.c.l.b16 %v425
      %v458 = vunpack.c.l.b16 %v426
      %v459 = vunpack.c.l.b16 %v427
      %v460 = vunpack.c.l.b16 %v428
      %v461 = vunpack.c.l.b16 %v429
      %v462 = vunpack.c.l.b16 %v430
      %v463 = vunpack.c.l.b16 %v431
      %v464 = vunpack.c.l.b16 %v432
      %v465 = vunpack.c.l.b16 %v433
      %v466 = vunpack.c.l.b16 %v434
      %v467 = vunpack.c.l.b16 %v435
      %v468 = vunpack.c.l.b16 %v436
      %v469 = vunpack.c.l.b16 %v437
      %v470 = vpack.c.b16 %v455, %v454
      %v471 = vpack.c.b16 %v457, %v456
      %v472 = vpack.c.b16 %v459, %v458
      %v473 = vpack.c.b16 %v461, %v460
      %v474 = vpack.c.b16 %v463, %v462
      %v475 = vpack.c.b16 %v465, %v464
      %v476 = vpack.c.b16 %v467, %v466
      %v477 = vpack.c.b16 %v469, %v468
      %486 = vmatprep.subr.bf16.mxu0 0
      %487 = vmatpush1.bf16.msra.mxu0 %v470
      %488 = vmatprep.subr.bf16.mxu0 0
      %489 = vmatpush1.bf16.msra.mxu0 %v471
      %490 = vmatprep.subr.bf16.mxu0 0
      %491 = vmatpush1.bf16.msra.mxu0 %v472
      %492 = vmatprep.subr.bf16.mxu0 0
      %493 = vmatpush1.bf16.msra.mxu0 %v473
      %494 = vmatprep.subr.bf16.mxu0 0
      %495 = vmatpush1.bf16.msra.mxu0 %v474
      %496 = vmatprep.subr.bf16.mxu0 0
      %497 = vmatpush1.bf16.msra.mxu0 %v475
      %498 = vmatprep.subr.bf16.mxu0 0
      %499 = vmatpush1.bf16.msra.mxu0 %v476
      %500 = vmatprep.subr.bf16.mxu0 0
      %501 = vmatpush1.bf16.msra.mxu0 %v477
      %502 = vmatprep.subr.bf16.mxu0 0
      %503 = vmatpush1.bf16.msra.mxu0 0
      %504 = vmatprep.subr.bf16.mxu0 0
      %505 = vmatpush1.bf16.msra.mxu0 0
      %506 = vmatprep.subr.bf16.mxu0 0
      %507 = vmatpush1.bf16.msra.mxu0 0
      %508 = vmatprep.subr.bf16.mxu0 0
      %509 = vmatpush1.bf16.msra.mxu0 0
      %510 = vmatprep.subr.bf16.mxu0 0
      %511 = vmatpush1.bf16.msra.mxu0 0
      %512 = vmatprep.subr.bf16.mxu0 0
      %513 = vmatpush1.bf16.msra.mxu0 0
      %514 = vmatprep.subr.bf16.mxu0 0
      %515 = vmatpush1.bf16.msra.mxu0 0
      %516 = vmatprep.subr.bf16.mxu0 0
      %517 = vmatpush1.bf16.msra.mxu0 0
      %518 = vmatprep.mubr.bf16.mxu0 0
      %519 = vmatmul.mubr.bf16.gmra.mrb[0].mxu0 %v417
      %v520 = vpop.f32.mrb[0].mxu0
      %v521 = vadd.f32 0.0, %v520
      %v522 = vpop.f32.mrb[0].mxu0
      %v523 = vpop.f32.mrb[0].mxu0
      %v524 = vadd.f32 0.0, %v523
      %v525 = vpop.f32.mrb[0].mxu0
      %526 = vmatprep.mubr.bf16.mxu0 0
      %527 = vmatmul.mubr.bf16.gmra.mrb[0].mxu0 %v418
      %v528 = vpop.f32.mrb[0].mxu0
      %v529 = vadd.f32 0.0, %v528
      %v530 = vpop.f32.mrb[0].mxu0
      %v531 = vpop.f32.mrb[0].mxu0
      %v532 = vadd.f32 0.0, %v531
      %v533 = vpop.f32.mrb[0].mxu0
      %534 = vmatprep.mubr.bf16.mxu0 0
      %535 = vmatmul.mubr.bf16.gmra.mrb[0].mxu0 %v419
      %v536 = vpop.f32.mrb[0].mxu0
      %v537 = vadd.f32 0.0, %v536
      %v538 = vpop.f32.mrb[0].mxu0
      %v539 = vpop.f32.mrb[0].mxu0
      %v540 = vadd.f32 0.0, %v539
      %v541 = vpop.f32.mrb[0].mxu0
      %542 = vmatprep.mubr.bf16.mxu0 0
      %543 = vmatmul.mubr.bf16.gmra.mrb[0].mxu0 %v420
      %v544 = vpop.f32.mrb[0].mxu0
      %v545 = vadd.f32 0.0, %v544
      %v546 = vpop.f32.mrb[0].mxu0
      %v547 = vpop.f32.mrb[0].mxu0
      %v548 = vadd.f32 0.0, %v547
      %v549 = vpop.f32.mrb[0].mxu0
      %550 = vdwg.mxu0
      %v567 = vunpack.c.l.b16 %v352
      %v568 = vunpack.c.l.b16 %v353
      %v569 = vunpack.c.l.b16 %v354
      %v570 = vunpack.c.l.b16 %v355
      %v571 = vunpack.c.l.b16 %v356
      %v572 = vunpack.c.l.b16 %v357
      %v573 = vunpack.c.l.b16 %v358
      %v574 = vunpack.c.l.b16 %v359
      %v575 = vunpack.c.l.b16 %v360
      %v576 = vunpack.c.l.b16 %v361
      %v577 = vunpack.c.l.b16 %v362
      %v578 = vunpack.c.l.b16 %v363
      %v579 = vunpack.c.l.b16 %v364
      %v580 = vunpack.c.l.b16 %v365
      %v581 = vunpack.c.l.b16 %v366
      %v582 = vunpack.c.l.b16 %v367
      %v583 = vpack.c.b16 %v568, %v567
      %v584 = vpack.c.b16 %v570, %v569
      %v585 = vpack.c.b16 %v572, %v571
      %v586 = vpack.c.b16 %v574, %v573
      %v587 = vpack.c.b16 %v576, %v575
      %v588 = vpack.c.b16 %v578, %v577
      %v589 = vpack.c.b16 %v580, %v579
      %v590 = vpack.c.b16 %v582, %v581
      %599 = vmatprep.subr.bf16.mxu0 0
      %600 = vmatpush1.bf16.msra.mxu0 %v583
      %601 = vmatprep.subr.bf16.mxu0 0
      %602 = vmatpush1.bf16.msra.mxu0 %v584
      %603 = vmatprep.subr.bf16.mxu0 0
      %604 = vmatpush1.bf16.msra.mxu0 %v585
      %605 = vmatprep.subr.bf16.mxu0 0
      %606 = vmatpush1.bf16.msra.mxu0 %v586
      %607 = vmatprep.subr.bf16.mxu0 0
      %608 = vmatpush1.bf16.msra.mxu0 %v587
      %609 = vmatprep.subr.bf16.mxu0 0
      %610 = vmatpush1.bf16.msra.mxu0 %v588
      %611 = vmatprep.subr.bf16.mxu0 0
      %612 = vmatpush1.bf16.msra.mxu0 %v589
      %613 = vmatprep.subr.bf16.mxu0 0
      %614 = vmatpush1.bf16.msra.mxu0 %v590
      %615 = vmatprep.subr.bf16.mxu0 0
      %616 = vmatpush1.bf16.msra.mxu0 0
      %617 = vmatprep.subr.bf16.mxu0 0
      %618 = vmatpush1.bf16.msra.mxu0 0
      %619 = vmatprep.subr.bf16.mxu0 0
      %620 = vmatpush1.bf16.msra.mxu0 0
      %621 = vmatprep.subr.bf16.mxu0 0
      %622 = vmatpush1.bf16.msra.mxu0 0
      %623 = vmatprep.subr.bf16.mxu0 0
      %624 = vmatpush1.bf16.msra.mxu0 0
      %625 = vmatprep.subr.bf16.mxu0 0
      %626 = vmatpush1.bf16.msra.mxu0 0
      %627 = vmatprep.subr.bf16.mxu0 0
      %628 = vmatpush1.bf16.msra.mxu0 0
      %629 = vmatprep.subr.bf16.mxu0 0
      %630 = vmatpush1.bf16.msra.mxu0 0
      %631 = vmatprep.mubr.bf16.mxu0 0
      %632 = vmatmul.mubr.bf16.gmra.mrb[0].mxu0 %v348
      %v633 = vpop.f32.mrb[0].mxu0
      %v634 = vadd.f32 %v521, %v633
      %v635 = vpop.f32.mrb[0].mxu0
      %v636 = vpop.f32.mrb[0].mxu0
      %v637 = vadd.f32 %v524, %v636
      %v638 = vpop.f32.mrb[0].mxu0
      %639 = vmatprep.mubr.bf16.mxu0 0
      %640 = vmatmul.mubr.bf16.gmra.mrb[0].mxu0 %v349
      %v641 = vpop.f32.mrb[0].mxu0
      %v642 = vadd.f32 %v529, %v641
      %v643 = vpop.f32.mrb[0].mxu0
      %v644 = vpop.f32.mrb[0].mxu0
      %v645 = vadd.f32 %v532, %v644
      %v646 = vpop.f32.mrb[0].mxu0
      %647 = vmatprep.mubr.bf16.mxu0 0
      %648 = vmatmul.mubr.bf16.gmra.mrb[0].mxu0 %v350
      %v649 = vpop.f32.mrb[0].mxu0
      %v650 = vadd.f32 %v537, %v649
      %v651 = vpop.f32.mrb[0].mxu0
      %v652 = vpop.f32.mrb[0].mxu0
      %v653 = vadd.f32 %v540, %v652
      %v654 = vpop.f32.mrb[0].mxu0
      %655 = vmatprep.mubr.bf16.mxu0 0
      %656 = vmatmul.mubr.bf16.gmra.mrb[0].mxu0 %v351
      %v657 = vpop.f32.mrb[0].mxu0
      %v658 = vadd.f32 %v545, %v657
      %v659 = vpop.f32.mrb[0].mxu0
      %v660 = vpop.f32.mrb[0].mxu0
      %v661 = vadd.f32 %v548, %v660
      %v662 = vpop.f32.mrb[0].mxu0
      %663 = vdwg.mxu0
      %vm664 = vcmask 1045504
      %v665 = vrot.slane %v332, 2
      %v666 = vrot.slane %v333, 2
      %v667 = vsel %vm664, %v665, %v666
      %v668 = vrot.slane %v334, 2
      %v669 = vrot.slane %v335, 2
      %v670 = vsel %vm664, %v668, %v669
      %v671 = vrot.slane %v336, 2
      %v672 = vrot.slane %v337, 2
      %v673 = vsel %vm664, %v671, %v672
      %v674 = vrot.slane %v338, 2
      %v675 = vrot.slane %v339, 2
      %v676 = vsel %vm664, %v674, %v675
      %v677 = vrot.slane %v340, 2
      %v678 = vrot.slane %v341, 2
      %v679 = vsel %vm664, %v677, %v678
      %v680 = vrot.slane %v342, 2
      %v681 = vrot.slane %v343, 2
      %v682 = vsel %vm664, %v680, %v681
      %v683 = vrot.slane %v344, 2
      %v684 = vrot.slane %v345, 2
      %v685 = vsel %vm664, %v683, %v684
      %v686 = vrot.slane %v346, 2
      %v687 = vrot.slane %v347, 2
      %v688 = vsel %vm664, %v686, %v687
      %v697 = vpack.c.bf16 %v670, %v667
      %v698 = vpack.c.bf16 %v676, %v673
      %v699 = vpack.c.bf16 %v682, %v679
      %v700 = vpack.c.bf16 %v688, %v685
      %s701 = scalar_lea.vmem %s1, 128
      %v702 = vld [vmem:[%s701] sm:$0xf]
      %v703 = vld [vmem:[%s701 + $0x4] sm:$0xf]
      %v704 = vld [vmem:[%s701 + $0x8] sm:$0xf]
      %v705 = vld [vmem:[%s701 + $0xc] sm:$0xf]
      %v706 = vld [vmem:[%s701 + $0x10] sm:$0xf]
      %v707 = vld [vmem:[%s701 + $0x14] sm:$0xf]
      %v708 = vld [vmem:[%s701 + $0x18] sm:$0xf]
      %v709 = vld [vmem:[%s701 + $0x1c] sm:$0xf]
      %v710 = vld [vmem:[%s701 + $0x20] sm:$0xf]
      %v711 = vld [vmem:[%s701 + $0x24] sm:$0xf]
      %v712 = vld [vmem:[%s701 + $0x28] sm:$0xf]
      %v713 = vld [vmem:[%s701 + $0x2c] sm:$0xf]
      %v714 = vld [vmem:[%s701 + $0x30] sm:$0xf]
      %v715 = vld [vmem:[%s701 + $0x34] sm:$0xf]
      %v716 = vld [vmem:[%s701 + $0x38] sm:$0xf]
      %v717 = vld [vmem:[%s701 + $0x3c] sm:$0xf]
      %v734 = vunpack.c.l.b16 %v702
      %v735 = vunpack.c.l.b16 %v703
      %v736 = vunpack.c.l.b16 %v704
      %v737 = vunpack.c.l.b16 %v705
      %v738 = vunpack.c.l.b16 %v706
      %v739 = vunpack.c.l.b16 %v707
      %v740 = vunpack.c.l.b16 %v708
      %v741 = vunpack.c.l.b16 %v709
      %v742 = vunpack.c.l.b16 %v710
      %v743 = vunpack.c.l.b16 %v711
      %v744 = vunpack.c.l.b16 %v712
      %v745 = vunpack.c.l.b16 %v713
      %v746 = vunpack.c.l.b16 %v714
      %v747 = vunpack.c.l.b16 %v715
      %v748 = vunpack.c.l.b16 %v716
      %v749 = vunpack.c.l.b16 %v717
      %v750 = vpack.c.b16 %v735, %v734
      %v751 = vpack.c.b16 %v737, %v736
      %v752 = vpack.c.b16 %v739, %v738
      %v753 = vpack.c.b16 %v741, %v740
      %v754 = vpack.c.b16 %v743, %v742
      %v755 = vpack.c.b16 %v745, %v744
      %v756 = vpack.c.b16 %v747, %v746
      %v757 = vpack.c.b16 %v749, %v748
      %766 = vmatprep.subr.bf16.mxu0 0
      %767 = vmatpush1.bf16.msra.mxu0 %v750
      %768 = vmatprep.subr.bf16.mxu0 0
      %769 = vmatpush1.bf16.msra.mxu0 %v751
      %770 = vmatprep.subr.bf16.mxu0 0
      %771 = vmatpush1.bf16.msra.mxu0 %v752
      %772 = vmatprep.subr.bf16.mxu0 0
      %773 = vmatpush1.bf16.msra.mxu0 %v753
      %774 = vmatprep.subr.bf16.mxu0 0
      %775 = vmatpush1.bf16.msra.mxu0 %v754
      %776 = vmatprep.subr.bf16.mxu0 0
      %777 = vmatpush1.bf16.msra.mxu0 %v755
      %778 = vmatprep.subr.bf16.mxu0 0
      %779 = vmatpush1.bf16.msra.mxu0 %v756
      %780 = vmatprep.subr.bf16.mxu0 0
      %781 = vmatpush1.bf16.msra.mxu0 %v757
      %782 = vmatprep.subr.bf16.mxu0 0
      %783 = vmatpush1.bf16.msra.mxu0 0
      %784 = vmatprep.subr.bf16.mxu0 0
      %785 = vmatpush1.bf16.msra.mxu0 0
      %786 = vmatprep.subr.bf16.mxu0 0
      %787 = vmatpush1.bf16.msra.mxu0 0
      %788 = vmatprep.subr.bf16.mxu0 0
      %789 = vmatpush1.bf16.msra.mxu0 0
      %790 = vmatprep.subr.bf16.mxu0 0
      %791 = vmatpush1.bf16.msra.mxu0 0
      %792 = vmatprep.subr.bf16.mxu0 0
      %793 = vmatpush1.bf16.msra.mxu0 0
      %794 = vmatprep.subr.bf16.mxu0 0
      %795 = vmatpush1.bf16.msra.mxu0 0
      %796 = vmatprep.subr.bf16.mxu0 0
      %797 = vmatpush1.bf16.msra.mxu0 0
      %798 = vmatprep.mubr.bf16.mxu0 0
      %799 = vmatmul.mubr.bf16.gmra.mrb[0].mxu0 %v697
      %v800 = vpop.f32.mrb[0].mxu0
      %v801 = vadd.f32 0.0, %v800
      %v802 = vpop.f32.mrb[0].mxu0
      %v803 = vpop.f32.mrb[0].mxu0
      %v804 = vadd.f32 0.0, %v803
      %v805 = vpop.f32.mrb[0].mxu0
      %806 = vmatprep.mubr.bf16.mxu0 0
      %807 = vmatmul.mubr.bf16.gmra.mrb[0].mxu0 %v698
      %v808 = vpop.f32.mrb[0].mxu0
      %v809 = vadd.f32 0.0, %v808
      %v810 = vpop.f32.mrb[0].mxu0
      %v811 = vpop.f32.mrb[0].mxu0
      %v812 = vadd.f32 0.0, %v811
      %v813 = vpop.f32.mrb[0].mxu0
      %814 = vmatprep.mubr.bf16.mxu0 0
      %815 = vmatmul.mubr.bf16.gmra.mrb[0].mxu0 %v699
      %v816 = vpop.f32.mrb[0].mxu0
      %v817 = vadd.f32 0.0, %v816
      %v818 = vpop.f32.mrb[0].mxu0
      %v819 = vpop.f32.mrb[0].mxu0
      %v820 = vadd.f32 0.0, %v819
      %v821 = vpop.f32.mrb[0].mxu0
      %822 = vmatprep.mubr.bf16.mxu0 0
      %823 = vmatmul.mubr.bf16.gmra.mrb[0].mxu0 %v700
      %v824 = vpop.f32.mrb[0].mxu0
      %v825 = vadd.f32 0.0, %v824
      %v826 = vpop.f32.mrb[0].mxu0
      %v827 = vpop.f32.mrb[0].mxu0
      %v828 = vadd.f32 0.0, %v827
      %v829 = vpop.f32.mrb[0].mxu0
      %830 = vdwg.mxu0
      %v831 = vadd.f32 %v634, %v801
      %v832 = vadd.f32 %v637, %v804
      %v833 = vadd.f32 %v642, %v809
      %v834 = vadd.f32 %v645, %v812
      %v835 = vadd.f32 %v650, %v817
      %v836 = vadd.f32 %v653, %v820
      %v837 = vadd.f32 %v658, %v825
      %v838 = vadd.f32 %v661, %v828
      %s839 = sadd.s32 %s312, 1
      %s840 = smul.u32 %s839, 2
      %s841 = smul.addr %s840, 4
      %s842 = scalar_lea.vmem %s290, %s841
      %v843 = vld [vmem:[%s842] sm:$0xf]
      %v844 = vld [vmem:[%s842 + $0x4] sm:$0x1]
      %v845 = vld [vmem:[%s842 + $0x8] sm:$0xf]
      %v846 = vld [vmem:[%s842 + $0xc] sm:$0x1]
      %v847 = vld [vmem:[%s842 + $0x10] sm:$0xf]
      %v848 = vld [vmem:[%s842 + $0x14] sm:$0x1]
      %v849 = vld [vmem:[%s842 + $0x18] sm:$0xf]
      %v850 = vld [vmem:[%s842 + $0x1c] sm:$0x1]
      %v851 = vld [vmem:[%s842 + $0x20] sm:$0xf]
      %v852 = vld [vmem:[%s842 + $0x24] sm:$0x1]
      %v853 = vld [vmem:[%s842 + $0x28] sm:$0xf]
      %v854 = vld [vmem:[%s842 + $0x2c] sm:$0x1]
      %v855 = vld [vmem:[%s842 + $0x30] sm:$0xf]
      %v856 = vld [vmem:[%s842 + $0x34] sm:$0x1]
      %v857 = vld [vmem:[%s842 + $0x38] sm:$0xf]
      %v858 = vld [vmem:[%s842 + $0x3c] sm:$0x1]
      %v859 = vunpack.c.l.bf16 %v843
      %v860 = vunpack.c.l.bf16 %v844
      %v861 = vunpack.c.l.bf16 %v845
      %v862 = vunpack.c.l.bf16 %v846
      %v863 = vunpack.c.l.bf16 %v847
      %v864 = vunpack.c.l.bf16 %v848
      %v865 = vunpack.c.l.bf16 %v849
      %v866 = vunpack.c.l.bf16 %v850
      %v867 = vunpack.c.l.bf16 %v851
      %v868 = vunpack.c.l.bf16 %v852
      %v869 = vunpack.c.l.bf16 %v853
      %v870 = vunpack.c.l.bf16 %v854
      %v871 = vunpack.c.l.bf16 %v855
      %v872 = vunpack.c.l.bf16 %v856
      %v873 = vunpack.c.l.bf16 %v857
      %v874 = vunpack.c.l.bf16 %v858
      %v875 = vpack.c.bf16 %v861, %v859
      %v876 = vpack.c.bf16 %v865, %v863
      %v877 = vpack.c.bf16 %v869, %v867
      %v878 = vpack.c.bf16 %v873, %v871
      %s879 = scalar_lea.vmem %s1, 192
      %v880 = vld [vmem:[%s879] sm:$0xf]
      %v881 = vld [vmem:[%s879 + $0x4] sm:$0xf]
      %v882 = vld [vmem:[%s879 + $0x8] sm:$0xf]
      %v883 = vld [vmem:[%s879 + $0xc] sm:$0xf]
      %v884 = vld [vmem:[%s879 + $0x10] sm:$0xf]
      %v885 = vld [vmem:[%s879 + $0x14] sm:$0xf]
      %v886 = vld [vmem:[%s879 + $0x18] sm:$0xf]
      %v887 = vld [vmem:[%s879 + $0x1c] sm:$0xf]
      %v888 = vld [vmem:[%s879 + $0x20] sm:$0xf]
      %v889 = vld [vmem:[%s879 + $0x24] sm:$0xf]
      %v890 = vld [vmem:[%s879 + $0x28] sm:$0xf]
      %v891 = vld [vmem:[%s879 + $0x2c] sm:$0xf]
      %v892 = vld [vmem:[%s879 + $0x30] sm:$0xf]
      %v893 = vld [vmem:[%s879 + $0x34] sm:$0xf]
      %v894 = vld [vmem:[%s879 + $0x38] sm:$0xf]
      %v895 = vld [vmem:[%s879 + $0x3c] sm:$0xf]
      %v912 = vunpack.c.l.b16 %v880
      %v913 = vunpack.c.l.b16 %v881
      %v914 = vunpack.c.l.b16 %v882
      %v915 = vunpack.c.l.b16 %v883
      %v916 = vunpack.c.l.b16 %v884
      %v917 = vunpack.c.l.b16 %v885
      %v918 = vunpack.c.l.b16 %v886
      %v919 = vunpack.c.l.b16 %v887
      %v920 = vunpack.c.l.b16 %v888
      %v921 = vunpack.c.l.b16 %v889
      %v922 = vunpack.c.l.b16 %v890
      %v923 = vunpack.c.l.b16 %v891
      %v924 = vunpack.c.l.b16 %v892
      %v925 = vunpack.c.l.b16 %v893
      %v926 = vunpack.c.l.b16 %v894
      %v927 = vunpack.c.l.b16 %v895
      %v928 = vpack.c.b16 %v913, %v912
      %v929 = vpack.c.b16 %v915, %v914
      %v930 = vpack.c.b16 %v917, %v916
      %v931 = vpack.c.b16 %v919, %v918
      %v932 = vpack.c.b16 %v921, %v920
      %v933 = vpack.c.b16 %v923, %v922
      %v934 = vpack.c.b16 %v925, %v924
      %v935 = vpack.c.b16 %v927, %v926
      %944 = vmatprep.subr.bf16.mxu0 0
      %945 = vmatpush1.bf16.msra.mxu0 %v928
      %946 = vmatprep.subr.bf16.mxu0 0
      %947 = vmatpush1.bf16.msra.mxu0 %v929
      %948 = vmatprep.subr.bf16.mxu0 0
      %949 = vmatpush1.bf16.msra.mxu0 %v930
      %950 = vmatprep.subr.bf16.mxu0 0
      %951 = vmatpush1.bf16.msra.mxu0 %v931
      %952 = vmatprep.subr.bf16.mxu0 0
      %953 = vmatpush1.bf16.msra.mxu0 %v932
      %954 = vmatprep.subr.bf16.mxu0 0
      %955 = vmatpush1.bf16.msra.mxu0 %v933
      %956 = vmatprep.subr.bf16.mxu0 0
      %957 = vmatpush1.bf16.msra.mxu0 %v934
      %958 = vmatprep.subr.bf16.mxu0 0
      %959 = vmatpush1.bf16.msra.mxu0 %v935
      %960 = vmatprep.subr.bf16.mxu0 0
      %961 = vmatpush1.bf16.msra.mxu0 0
      %962 = vmatprep.subr.bf16.mxu0 0
      %963 = vmatpush1.bf16.msra.mxu0 0
      %964 = vmatprep.subr.bf16.mxu0 0
      %965 = vmatpush1.bf16.msra.mxu0 0
      %966 = vmatprep.subr.bf16.mxu0 0
      %967 = vmatpush1.bf16.msra.mxu0 0
      %968 = vmatprep.subr.bf16.mxu0 0
      %969 = vmatpush1.bf16.msra.mxu0 0
      %970 = vmatprep.subr.bf16.mxu0 0
      %971 = vmatpush1.bf16.msra.mxu0 0
      %972 = vmatprep.subr.bf16.mxu0 0
      %973 = vmatpush1.bf16.msra.mxu0 0
      %974 = vmatprep.subr.bf16.mxu0 0
      %975 = vmatpush1.bf16.msra.mxu0 0
      %976 = vmatprep.mubr.bf16.mxu0 0
      %977 = vmatmul.mubr.bf16.gmra.mrb[0].mxu0 %v875
      %v978 = vpop.f32.mrb[0].mxu0
      %v979 = vadd.f32 0.0, %v978
      %v980 = vpop.f32.mrb[0].mxu0
      %v981 = vpop.f32.mrb[0].mxu0
      %v982 = vadd.f32 0.0, %v981
      %v983 = vpop.f32.mrb[0].mxu0
      %984 = vmatprep.mubr.bf16.mxu0 0
      %985 = vmatmul.mubr.bf16.gmra.mrb[0].mxu0 %v876
      %v986 = vpop.f32.mrb[0].mxu0
      %v987 = vadd.f32 0.0, %v986
      %v988 = vpop.f32.mrb[0].mxu0
      %v989 = vpop.f32.mrb[0].mxu0
      %v990 = vadd.f32 0.0, %v989
      %v991 = vpop.f32.mrb[0].mxu0
      %992 = vmatprep.mubr.bf16.mxu0 0
      %993 = vmatmul.mubr.bf16.gmra.mrb[0].mxu0 %v877
      %v994 = vpop.f32.mrb[0].mxu0
      %v995 = vadd.f32 0.0, %v994
      %v996 = vpop.f32.mrb[0].mxu0
      %v997 = vpop.f32.mrb[0].mxu0
      %v998 = vadd.f32 0.0, %v997
      %v999 = vpop.f32.mrb[0].mxu0
      %1000 = vmatprep.mubr.bf16.mxu0 0
      %1001 = vmatmul.mubr.bf16.gmra.mrb[0].mxu0 %v878
      %v1002 = vpop.f32.mrb[0].mxu0
      %v1003 = vadd.f32 0.0, %v1002
      %v1004 = vpop.f32.mrb[0].mxu0
      %v1005 = vpop.f32.mrb[0].mxu0
      %v1006 = vadd.f32 0.0, %v1005
      %v1007 = vpop.f32.mrb[0].mxu0
      %1008 = vdwg.mxu0
      %v1009 = vadd.f32 %v831, %v979
      %v1010 = vadd.f32 %v832, %v982
      %v1011 = vadd.f32 %v833, %v987
      %v1012 = vadd.f32 %v834, %v990
      %v1013 = vadd.f32 %v835, %v995
      %v1014 = vadd.f32 %v836, %v998
      %v1015 = vadd.f32 %v837, %v1003
      %v1016 = vadd.f32 %v838, %v1006
      %v1033 = vrot.slane %v859, 1
      %v1034 = vrot.slane %v860, 1
      %v1035 = vsel %vm384, %v1033, %v1034
      %v1036 = vrot.slane %v861, 1
      %v1037 = vrot.slane %v862, 1
      %v1038 = vsel %vm384, %v1036, %v1037
      %v1039 = vrot.slane %v863, 1
      %v1040 = vrot.slane %v864, 1
      %v1041 = vsel %vm384, %v1039, %v1040
      %v1042 = vrot.slane %v865, 1
      %v1043 = vrot.slane %v866, 1
      %v1044 = vsel %vm384, %v1042, %v1043
      %v1045 = vrot.slane %v867, 1
      %v1046 = vrot.slane %v868, 1
      %v1047 = vsel %vm384, %v1045, %v1046
      %v1048 = vrot.slane %v869, 1
      %v1049 = vrot.slane %v870, 1
      %v1050 = vsel %vm384, %v1048, %v1049
      %v1051 = vrot.slane %v871, 1
      %v1052 = vrot.slane %v872, 1
      %v1053 = vsel %vm384, %v1051, %v1052
      %v1054 = vrot.slane %v873, 1
      %v1055 = vrot.slane %v874, 1
      %v1056 = vsel %vm384, %v1054, %v1055
      %v1065 = vpack.c.bf16 %v1038, %v1035
      %v1066 = vpack.c.bf16 %v1044, %v1041
      %v1067 = vpack.c.bf16 %v1050, %v1047
      %v1068 = vpack.c.bf16 %v1056, %v1053
      %s1069 = scalar_lea.vmem %s1, 256
      %v1070 = vld [vmem:[%s1069] sm:$0xf]
      %v1071 = vld [vmem:[%s1069 + $0x4] sm:$0xf]
      %v1072 = vld [vmem:[%s1069 + $0x8] sm:$0xf]
      %v1073 = vld [vmem:[%s1069 + $0xc] sm:$0xf]
      %v1074 = vld [vmem:[%s1069 + $0x10] sm:$0xf]
      %v1075 = vld [vmem:[%s1069 + $0x14] sm:$0xf]
      %v1076 = vld [vmem:[%s1069 + $0x18] sm:$0xf]
      %v1077 = vld [vmem:[%s1069 + $0x1c] sm:$0xf]
      %v1078 = vld [vmem:[%s1069 + $0x20] sm:$0xf]
      %v1079 = vld [vmem:[%s1069 + $0x24] sm:$0xf]
      %v1080 = vld [vmem:[%s1069 + $0x28] sm:$0xf]
      %v1081 = vld [vmem:[%s1069 + $0x2c] sm:$0xf]
      %v1082 = vld [vmem:[%s1069 + $0x30] sm:$0xf]
      %v1083 = vld [vmem:[%s1069 + $0x34] sm:$0xf]
      %v1084 = vld [vmem:[%s1069 + $0x38] sm:$0xf]
      %v1085 = vld [vmem:[%s1069 + $0x3c] sm:$0xf]
      %v1102 = vunpack.c.l.b16 %v1070
      %v1103 = vunpack.c.l.b16 %v1071
      %v1104 = vunpack.c.l.b16 %v1072
      %v1105 = vunpack.c.l.b16 %v1073
      %v1106 = vunpack.c.l.b16 %v1074
      %v1107 = vunpack.c.l.b16 %v1075
      %v1108 = vunpack.c.l.b16 %v1076
      %v1109 = vunpack.c.l.b16 %v1077
      %v1110 = vunpack.c.l.b16 %v1078
      %v1111 = vunpack.c.l.b16 %v1079
      %v1112 = vunpack.c.l.b16 %v1080
      %v1113 = vunpack.c.l.b16 %v1081
      %v1114 = vunpack.c.l.b16 %v1082
      %v1115 = vunpack.c.l.b16 %v1083
      %v1116 = vunpack.c.l.b16 %v1084
      %v1117 = vunpack.c.l.b16 %v1085
      %v1118 = vpack.c.b16 %v1103, %v1102
      %v1119 = vpack.c.b16 %v1105, %v1104
      %v1120 = vpack.c.b16 %v1107, %v1106
      %v1121 = vpack.c.b16 %v1109, %v1108
      %v1122 = vpack.c.b16 %v1111, %v1110
      %v1123 = vpack.c.b16 %v1113, %v1112
      %v1124 = vpack.c.b16 %v1115, %v1114
      %v1125 = vpack.c.b16 %v1117, %v1116
      %1134 = vmatprep.subr.bf16.mxu0 0
      %1135 = vmatpush1.bf16.msra.mxu0 %v1118
      %1136 = vmatprep.subr.bf16.mxu0 0
      %1137 = vmatpush1.bf16.msra.mxu0 %v1119
      %1138 = vmatprep.subr.bf16.mxu0 0
      %1139 = vmatpush1.bf16.msra.mxu0 %v1120
      %1140 = vmatprep.subr.bf16.mxu0 0
      %1141 = vmatpush1.bf16.msra.mxu0 %v1121
      %1142 = vmatprep.subr.bf16.mxu0 0
      %1143 = vmatpush1.bf16.msra.mxu0 %v1122
      %1144 = vmatprep.subr.bf16.mxu0 0
      %1145 = vmatpush1.bf16.msra.mxu0 %v1123
      %1146 = vmatprep.subr.bf16.mxu0 0
      %1147 = vmatpush1.bf16.msra.mxu0 %v1124
      %1148 = vmatprep.subr.bf16.mxu0 0
      %1149 = vmatpush1.bf16.msra.mxu0 %v1125
      %1150 = vmatprep.subr.bf16.mxu0 0
      %1151 = vmatpush1.bf16.msra.mxu0 0
      %1152 = vmatprep.subr.bf16.mxu0 0
      %1153 = vmatpush1.bf16.msra.mxu0 0
      %1154 = vmatprep.subr.bf16.mxu0 0
      %1155 = vmatpush1.bf16.msra.mxu0 0
      %1156 = vmatprep.subr.bf16.mxu0 0
      %1157 = vmatpush1.bf16.msra.mxu0 0
      %1158 = vmatprep.subr.bf16.mxu0 0
      %1159 = vmatpush1.bf16.msra.mxu0 0
      %1160 = vmatprep.subr.bf16.mxu0 0
      %1161 = vmatpush1.bf16.msra.mxu0 0
      %1162 = vmatprep.subr.bf16.mxu0 0
      %1163 = vmatpush1.bf16.msra.mxu0 0
      %1164 = vmatprep.subr.bf16.mxu0 0
      %1165 = vmatpush1.bf16.msra.mxu0 0
      %1166 = vmatprep.mubr.bf16.mxu0 0
      %1167 = vmatmul.mubr.bf16.gmra.mrb[0].mxu0 %v1065
      %v1168 = vpop.f32.mrb[0].mxu0
      %v1169 = vadd.f32 0.0, %v1168
      %v1170 = vpop.f32.mrb[0].mxu0
      %v1171 = vpop.f32.mrb[0].mxu0
      %v1172 = vadd.f32 0.0, %v1171
      %v1173 = vpop.f32.mrb[0].mxu0
      %1174 = vmatprep.mubr.bf16.mxu0 0
      %1175 = vmatmul.mubr.bf16.gmra.mrb[0].mxu0 %v1066
      %v1176 = vpop.f32.mrb[0].mxu0
      %v1177 = vadd.f32 0.0, %v1176
      %v1178 = vpop.f32.mrb[0].mxu0
      %v1179 = vpop.f32.mrb[0].mxu0
      %v1180 = vadd.f32 0.0, %v1179
      %v1181 = vpop.f32.mrb[0].mxu0
      %1182 = vmatprep.mubr.bf16.mxu0 0
      %1183 = vmatmul.mubr.bf16.gmra.mrb[0].mxu0 %v1067
      %v1184 = vpop.f32.mrb[0].mxu0
      %v1185 = vadd.f32 0.0, %v1184
      %v1186 = vpop.f32.mrb[0].mxu0
      %v1187 = vpop.f32.mrb[0].mxu0
      %v1188 = vadd.f32 0.0, %v1187
      %v1189 = vpop.f32.mrb[0].mxu0
      %1190 = vmatprep.mubr.bf16.mxu0 0
      %1191 = vmatmul.mubr.bf16.gmra.mrb[0].mxu0 %v1068
      %v1192 = vpop.f32.mrb[0].mxu0
      %v1193 = vadd.f32 0.0, %v1192
      %v1194 = vpop.f32.mrb[0].mxu0
      %v1195 = vpop.f32.mrb[0].mxu0
      %v1196 = vadd.f32 0.0, %v1195
      %v1197 = vpop.f32.mrb[0].mxu0
      %1198 = vdwg.mxu0
      %v1199 = vadd.f32 %v1009, %v1169
      %v1200 = vadd.f32 %v1010, %v1172
      %v1201 = vadd.f32 %v1011, %v1177
      %v1202 = vadd.f32 %v1012, %v1180
      %v1203 = vadd.f32 %v1013, %v1185
      %v1204 = vadd.f32 %v1014, %v1188
      %v1205 = vadd.f32 %v1015, %v1193
      %v1206 = vadd.f32 %v1016, %v1196
      %v1207 = vrot.slane %v859, 2
      %v1208 = vrot.slane %v860, 2
      %v1209 = vsel %vm664, %v1207, %v1208
      %v1210 = vrot.slane %v861, 2
      %v1211 = vrot.slane %v862, 2
      %v1212 = vsel %vm664, %v1210, %v1211
      %v1213 = vrot.slane %v863, 2
      %v1214 = vrot.slane %v864, 2
      %v1215 = vsel %vm664, %v1213, %v1214
      %v1216 = vrot.slane %v865, 2
      %v1217 = vrot.slane %v866, 2
      %v1218 = vsel %vm664, %v1216, %v1217
      %v1219 = vrot.slane %v867, 2
      %v1220 = vrot.slane %v868, 2
      %v1221 = vsel %vm664, %v1219, %v1220
      %v1222 = vrot.slane %v869, 2
      %v1223 = vrot.slane %v870, 2
      %v1224 = vsel %vm664, %v1222, %v1223
      %v1225 = vrot.slane %v871, 2
      %v1226 = vrot.slane %v872, 2
      %v1227 = vsel %vm664, %v1225, %v1226
      %v1228 = vrot.slane %v873, 2
      %v1229 = vrot.slane %v874, 2
      %v1230 = vsel %vm664, %v1228, %v1229
      %v1239 = vpack.c.bf16 %v1212, %v1209
      %v1240 = vpack.c.bf16 %v1218, %v1215
      %v1241 = vpack.c.bf16 %v1224, %v1221
      %v1242 = vpack.c.bf16 %v1230, %v1227
      %s1243 = scalar_lea.vmem %s1, 320
      %v1244 = vld [vmem:[%s1243] sm:$0xf]
      %v1245 = vld [vmem:[%s1243 + $0x4] sm:$0xf]
      %v1246 = vld [vmem:[%s1243 + $0x8] sm:$0xf]
      %v1247 = vld [vmem:[%s1243 + $0xc] sm:$0xf]
      %v1248 = vld [vmem:[%s1243 + $0x10] sm:$0xf]
      %v1249 = vld [vmem:[%s1243 + $0x14] sm:$0xf]
      %v1250 = vld [vmem:[%s1243 + $0x18] sm:$0xf]
      %v1251 = vld [vmem:[%s1243 + $0x1c] sm:$0xf]
      %v1252 = vld [vmem:[%s1243 + $0x20] sm:$0xf]
      %v1253 = vld [vmem:[%s1243 + $0x24] sm:$0xf]
      %v1254 = vld [vmem:[%s1243 + $0x28] sm:$0xf]
      %v1255 = vld [vmem:[%s1243 + $0x2c] sm:$0xf]
      %v1256 = vld [vmem:[%s1243 + $0x30] sm:$0xf]
      %v1257 = vld [vmem:[%s1243 + $0x34] sm:$0xf]
      %v1258 = vld [vmem:[%s1243 + $0x38] sm:$0xf]
      %v1259 = vld [vmem:[%s1243 + $0x3c] sm:$0xf]
      %v1276 = vunpack.c.l.b16 %v1244
      %v1277 = vunpack.c.l.b16 %v1245
      %v1278 = vunpack.c.l.b16 %v1246
      %v1279 = vunpack.c.l.b16 %v1247
      %v1280 = vunpack.c.l.b16 %v1248
      %v1281 = vunpack.c.l.b16 %v1249
      %v1282 = vunpack.c.l.b16 %v1250
      %v1283 = vunpack.c.l.b16 %v1251
      %v1284 = vunpack.c.l.b16 %v1252
      %v1285 = vunpack.c.l.b16 %v1253
      %v1286 = vunpack.c.l.b16 %v1254
      %v1287 = vunpack.c.l.b16 %v1255
      %v1288 = vunpack.c.l.b16 %v1256
      %v1289 = vunpack.c.l.b16 %v1257
      %v1290 = vunpack.c.l.b16 %v1258
      %v1291 = vunpack.c.l.b16 %v1259
      %v1292 = vpack.c.b16 %v1277, %v1276
      %v1293 = vpack.c.b16 %v1279, %v1278
      %v1294 = vpack.c.b16 %v1281, %v1280
      %v1295 = vpack.c.b16 %v1283, %v1282
      %v1296 = vpack.c.b16 %v1285, %v1284
      %v1297 = vpack.c.b16 %v1287, %v1286
      %v1298 = vpack.c.b16 %v1289, %v1288
      %v1299 = vpack.c.b16 %v1291, %v1290
      %1308 = vmatprep.subr.bf16.mxu0 0
      %1309 = vmatpush1.bf16.msra.mxu0 %v1292
      %1310 = vmatprep.subr.bf16.mxu0 0
      %1311 = vmatpush1.bf16.msra.mxu0 %v1293
      %1312 = vmatprep.subr.bf16.mxu0 0
      %1313 = vmatpush1.bf16.msra.mxu0 %v1294
      %1314 = vmatprep.subr.bf16.mxu0 0
      %1315 = vmatpush1.bf16.msra.mxu0 %v1295
      %1316 = vmatprep.subr.bf16.mxu0 0
      %1317 = vmatpush1.bf16.msra.mxu0 %v1296
      %1318 = vmatprep.subr.bf16.mxu0 0
      %1319 = vmatpush1.bf16.msra.mxu0 %v1297
      %1320 = vmatprep.subr.bf16.mxu0 0
      %1321 = vmatpush1.bf16.msra.mxu0 %v1298
      %1322 = vmatprep.subr.bf16.mxu0 0
      %1323 = vmatpush1.bf16.msra.mxu0 %v1299
      %1324 = vmatprep.subr.bf16.mxu0 0
      %1325 = vmatpush1.bf16.msra.mxu0 0
      %1326 = vmatprep.subr.bf16.mxu0 0
      %1327 = vmatpush1.bf16.msra.mxu0 0
      %1328 = vmatprep.subr.bf16.mxu0 0
      %1329 = vmatpush1.bf16.msra.mxu0 0
      %1330 = vmatprep.subr.bf16.mxu0 0
      %1331 = vmatpush1.bf16.msra.mxu0 0
      %1332 = vmatprep.subr.bf16.mxu0 0
      %1333 = vmatpush1.bf16.msra.mxu0 0
      %1334 = vmatprep.subr.bf16.mxu0 0
      %1335 = vmatpush1.bf16.msra.mxu0 0
      %1336 = vmatprep.subr.bf16.mxu0 0
      %1337 = vmatpush1.bf16.msra.mxu0 0
      %1338 = vmatprep.subr.bf16.mxu0 0
      %1339 = vmatpush1.bf16.msra.mxu0 0
      %1340 = vmatprep.mubr.bf16.mxu0 0
      %1341 = vmatmul.mubr.bf16.gmra.mrb[0].mxu0 %v1239
      %v1342 = vpop.f32.mrb[0].mxu0
      %v1343 = vadd.f32 0.0, %v1342
      %v1344 = vpop.f32.mrb[0].mxu0
      %v1345 = vpop.f32.mrb[0].mxu0
      %v1346 = vadd.f32 0.0, %v1345
      %v1347 = vpop.f32.mrb[0].mxu0
      %1348 = vmatprep.mubr.bf16.mxu0 0
      %1349 = vmatmul.mubr.bf16.gmra.mrb[0].mxu0 %v1240
      %v1350 = vpop.f32.mrb[0].mxu0
      %v1351 = vadd.f32 0.0, %v1350
      %v1352 = vpop.f32.mrb[0].mxu0
      %v1353 = vpop.f32.mrb[0].mxu0
      %v1354 = vadd.f32 0.0, %v1353
      %v1355 = vpop.f32.mrb[0].mxu0
      %1356 = vmatprep.mubr.bf16.mxu0 0
      %1357 = vmatmul.mubr.bf16.gmra.mrb[0].mxu0 %v1241
      %v1358 = vpop.f32.mrb[0].mxu0
      %v1359 = vadd.f32 0.0, %v1358
      %v1360 = vpop.f32.mrb[0].mxu0
      %v1361 = vpop.f32.mrb[0].mxu0
      %v1362 = vadd.f32 0.0, %v1361
      %v1363 = vpop.f32.mrb[0].mxu0
      %1364 = vmatprep.mubr.bf16.mxu0 0
      %1365 = vmatmul.mubr.bf16.gmra.mrb[0].mxu0 %v1242
      %v1366 = vpop.f32.mrb[0].mxu0
      %v1367 = vadd.f32 0.0, %v1366
      %v1368 = vpop.f32.mrb[0].mxu0
      %v1369 = vpop.f32.mrb[0].mxu0
      %v1370 = vadd.f32 0.0, %v1369
      %v1371 = vpop.f32.mrb[0].mxu0
      %1372 = vdwg.mxu0
      %v1373 = vadd.f32 %v1199, %v1343
      %v1374 = vadd.f32 %v1200, %v1346
      %v1375 = vadd.f32 %v1201, %v1351
      %v1376 = vadd.f32 %v1202, %v1354
      %v1377 = vadd.f32 %v1203, %v1359
      %v1378 = vadd.f32 %v1204, %v1362
      %v1379 = vadd.f32 %v1205, %v1367
      %v1380 = vadd.f32 %v1206, %v1370
      %s1381 = sadd.s32 %s312, 2
      %s1382 = smul.u32 %s1381, 2
      %s1383 = smul.addr %s1382, 4
      %s1384 = scalar_lea.vmem %s290, %s1383
      %v1385 = vld [vmem:[%s1384] sm:$0xf]
      %v1386 = vld [vmem:[%s1384 + $0x4] sm:$0x1]
      %v1387 = vld [vmem:[%s1384 + $0x8] sm:$0xf]
      %v1388 = vld [vmem:[%s1384 + $0xc] sm:$0x1]
      %v1389 = vld [vmem:[%s1384 + $0x10] sm:$0xf]
      %v1390 = vld [vmem:[%s1384 + $0x14] sm:$0x1]
      %v1391 = vld [vmem:[%s1384 + $0x18] sm:$0xf]
      %v1392 = vld [vmem:[%s1384 + $0x1c] sm:$0x1]
      %v1393 = vld [vmem:[%s1384 + $0x20] sm:$0xf]
      %v1394 = vld [vmem:[%s1384 + $0x24] sm:$0x1]
      %v1395 = vld [vmem:[%s1384 + $0x28] sm:$0xf]
      %v1396 = vld [vmem:[%s1384 + $0x2c] sm:$0x1]
      %v1397 = vld [vmem:[%s1384 + $0x30] sm:$0xf]
      %v1398 = vld [vmem:[%s1384 + $0x34] sm:$0x1]
      %v1399 = vld [vmem:[%s1384 + $0x38] sm:$0xf]
      %v1400 = vld [vmem:[%s1384 + $0x3c] sm:$0x1]
      %v1401 = vunpack.c.l.bf16 %v1385
      %v1402 = vunpack.c.l.bf16 %v1386
      %v1403 = vunpack.c.l.bf16 %v1387
      %v1404 = vunpack.c.l.bf16 %v1388
      %v1405 = vunpack.c.l.bf16 %v1389
      %v1406 = vunpack.c.l.bf16 %v1390
      %v1407 = vunpack.c.l.bf16 %v1391
      %v1408 = vunpack.c.l.bf16 %v1392
      %v1409 = vunpack.c.l.bf16 %v1393
      %v1410 = vunpack.c.l.bf16 %v1394
      %v1411 = vunpack.c.l.bf16 %v1395
      %v1412 = vunpack.c.l.bf16 %v1396
      %v1413 = vunpack.c.l.bf16 %v1397
      %v1414 = vunpack.c.l.bf16 %v1398
      %v1415 = vunpack.c.l.bf16 %v1399
      %v1416 = vunpack.c.l.bf16 %v1400
      %v1417 = vpack.c.bf16 %v1403, %v1401
      %v1418 = vpack.c.bf16 %v1407, %v1405
      %v1419 = vpack.c.bf16 %v1411, %v1409
      %v1420 = vpack.c.bf16 %v1415, %v1413
      %s1421 = scalar_lea.vmem %s1, 384
      %v1422 = vld [vmem:[%s1421] sm:$0xf]
      %v1423 = vld [vmem:[%s1421 + $0x4] sm:$0xf]
      %v1424 = vld [vmem:[%s1421 + $0x8] sm:$0xf]
      %v1425 = vld [vmem:[%s1421 + $0xc] sm:$0xf]
      %v1426 = vld [vmem:[%s1421 + $0x10] sm:$0xf]
      %v1427 = vld [vmem:[%s1421 + $0x14] sm:$0xf]
      %v1428 = vld [vmem:[%s1421 + $0x18] sm:$0xf]
      %v1429 = vld [vmem:[%s1421 + $0x1c] sm:$0xf]
      %v1430 = vld [vmem:[%s1421 + $0x20] sm:$0xf]
      %v1431 = vld [vmem:[%s1421 + $0x24] sm:$0xf]
      %v1432 = vld [vmem:[%s1421 + $0x28] sm:$0xf]
      %v1433 = vld [vmem:[%s1421 + $0x2c] sm:$0xf]
      %v1434 = vld [vmem:[%s1421 + $0x30] sm:$0xf]
      %v1435 = vld [vmem:[%s1421 + $0x34] sm:$0xf]
      %v1436 = vld [vmem:[%s1421 + $0x38] sm:$0xf]
      %v1437 = vld [vmem:[%s1421 + $0x3c] sm:$0xf]
      %v1454 = vunpack.c.l.b16 %v1422
      %v1455 = vunpack.c.l.b16 %v1423
      %v1456 = vunpack.c.l.b16 %v1424
      %v1457 = vunpack.c.l.b16 %v1425
      %v1458 = vunpack.c.l.b16 %v1426
      %v1459 = vunpack.c.l.b16 %v1427
      %v1460 = vunpack.c.l.b16 %v1428
      %v1461 = vunpack.c.l.b16 %v1429
      %v1462 = vunpack.c.l.b16 %v1430
      %v1463 = vunpack.c.l.b16 %v1431
      %v1464 = vunpack.c.l.b16 %v1432
      %v1465 = vunpack.c.l.b16 %v1433
      %v1466 = vunpack.c.l.b16 %v1434
      %v1467 = vunpack.c.l.b16 %v1435
      %v1468 = vunpack.c.l.b16 %v1436
      %v1469 = vunpack.c.l.b16 %v1437
      %v1470 = vpack.c.b16 %v1455, %v1454
      %v1471 = vpack.c.b16 %v1457, %v1456
      %v1472 = vpack.c.b16 %v1459, %v1458
      %v1473 = vpack.c.b16 %v1461, %v1460
      %v1474 = vpack.c.b16 %v1463, %v1462
      %v1475 = vpack.c.b16 %v1465, %v1464
      %v1476 = vpack.c.b16 %v1467, %v1466
      %v1477 = vpack.c.b16 %v1469, %v1468
      %1486 = vmatprep.subr.bf16.mxu0 0
      %1487 = vmatpush1.bf16.msra.mxu0 %v1470
      %1488 = vmatprep.subr.bf16.mxu0 0
      %1489 = vmatpush1.bf16.msra.mxu0 %v1471
      %1490 = vmatprep.subr.bf16.mxu0 0
      %1491 = vmatpush1.bf16.msra.mxu0 %v1472
      %1492 = vmatprep.subr.bf16.mxu0 0
      %1493 = vmatpush1.bf16.msra.mxu0 %v1473
      %1494 = vmatprep.subr.bf16.mxu0 0
      %1495 = vmatpush1.bf16.msra.mxu0 %v1474
      %1496 = vmatprep.subr.bf16.mxu0 0
      %1497 = vmatpush1.bf16.msra.mxu0 %v1475
      %1498 = vmatprep.subr.bf16.mxu0 0
      %1499 = vmatpush1.bf16.msra.mxu0 %v1476
      %1500 = vmatprep.subr.bf16.mxu0 0
      %1501 = vmatpush1.bf16.msra.mxu0 %v1477
      %1502 = vmatprep.subr.bf16.mxu0 0
      %1503 = vmatpush1.bf16.msra.mxu0 0
      %1504 = vmatprep.subr.bf16.mxu0 0
      %1505 = vmatpush1.bf16.msra.mxu0 0
      %1506 = vmatprep.subr.bf16.mxu0 0
      %1507 = vmatpush1.bf16.msra.mxu0 0
      %1508 = vmatprep.subr.bf16.mxu0 0
      %1509 = vmatpush1.bf16.msra.mxu0 0
      %1510 = vmatprep.subr.bf16.mxu0 0
      %1511 = vmatpush1.bf16.msra.mxu0 0
      %1512 = vmatprep.subr.bf16.mxu0 0
      %1513 = vmatpush1.bf16.msra.mxu0 0
      %1514 = vmatprep.subr.bf16.mxu0 0
      %1515 = vmatpush1.bf16.msra.mxu0 0
      %1516 = vmatprep.subr.bf16.mxu0 0
      %1517 = vmatpush1.bf16.msra.mxu0 0
      %1518 = vmatprep.mubr.bf16.mxu0 0
      %1519 = vmatmul.mubr.bf16.gmra.mrb[0].mxu0 %v1417
      %v1520 = vpop.f32.mrb[0].mxu0
      %v1521 = vadd.f32 0.0, %v1520
      %v1522 = vpop.f32.mrb[0].mxu0
      %v1523 = vpop.f32.mrb[0].mxu0
      %v1524 = vadd.f32 0.0, %v1523
      %v1525 = vpop.f32.mrb[0].mxu0
      %1526 = vmatprep.mubr.bf16.mxu0 0
      %1527 = vmatmul.mubr.bf16.gmra.mrb[0].mxu0 %v1418
      %v1528 = vpop.f32.mrb[0].mxu0
      %v1529 = vadd.f32 0.0, %v1528
      %v1530 = vpop.f32.mrb[0].mxu0
      %v1531 = vpop.f32.mrb[0].mxu0
      %v1532 = vadd.f32 0.0, %v1531
      %v1533 = vpop.f32.mrb[0].mxu0
      %1534 = vmatprep.mubr.bf16.mxu0 0
      %1535 = vmatmul.mubr.bf16.gmra.mrb[0].mxu0 %v1419
      %v1536 = vpop.f32.mrb[0].mxu0
      %v1537 = vadd.f32 0.0, %v1536
      %v1538 = vpop.f32.mrb[0].mxu0
      %v1539 = vpop.f32.mrb[0].mxu0
      %v1540 = vadd.f32 0.0, %v1539
      %v1541 = vpop.f32.mrb[0].mxu0
      %1542 = vmatprep.mubr.bf16.mxu0 0
      %1543 = vmatmul.mubr.bf16.gmra.mrb[0].mxu0 %v1420
      %v1544 = vpop.f32.mrb[0].mxu0
      %v1545 = vadd.f32 0.0, %v1544
      %v1546 = vpop.f32.mrb[0].mxu0
      %v1547 = vpop.f32.mrb[0].mxu0
      %v1548 = vadd.f32 0.0, %v1547
      %v1549 = vpop.f32.mrb[0].mxu0
      %1550 = vdwg.mxu0
      %v1551 = vadd.f32 %v1373, %v1521
      %v1552 = vadd.f32 %v1374, %v1524
      %v1553 = vadd.f32 %v1375, %v1529
      %v1554 = vadd.f32 %v1376, %v1532
      %v1555 = vadd.f32 %v1377, %v1537
      %v1556 = vadd.f32 %v1378, %v1540
      %v1557 = vadd.f32 %v1379, %v1545
      %v1558 = vadd.f32 %v1380, %v1548
      %v1575 = vrot.slane %v1401, 1
      %v1576 = vrot.slane %v1402, 1
      %v1577 = vsel %vm384, %v1575, %v1576
      %v1578 = vrot.slane %v1403, 1
      %v1579 = vrot.slane %v1404, 1
      %v1580 = vsel %vm384, %v1578, %v1579
      %v1581 = vrot.slane %v1405, 1
      %v1582 = vrot.slane %v1406, 1
      %v1583 = vsel %vm384, %v1581, %v1582
      %v1584 = vrot.slane %v1407, 1
      %v1585 = vrot.slane %v1408, 1
      %v1586 = vsel %vm384, %v1584, %v1585
      %v1587 = vrot.slane %v1409, 1
      %v1588 = vrot.slane %v1410, 1
      %v1589 = vsel %vm384, %v1587, %v1588
      %v1590 = vrot.slane %v1411, 1
      %v1591 = vrot.slane %v1412, 1
      %v1592 = vsel %vm384, %v1590, %v1591
      %v1593 = vrot.slane %v1413, 1
      %v1594 = vrot.slane %v1414, 1
      %v1595 = vsel %vm384, %v1593, %v1594
      %v1596 = vrot.slane %v1415, 1
      %v1597 = vrot.slane %v1416, 1
      %v1598 = vsel %vm384, %v1596, %v1597
      %v1607 = vpack.c.bf16 %v1580, %v1577
      %v1608 = vpack.c.bf16 %v1586, %v1583
      %v1609 = vpack.c.bf16 %v1592, %v1589
      %v1610 = vpack.c.bf16 %v1598, %v1595
      %s1611 = scalar_lea.vmem %s1, 448
      %v1612 = vld [vmem:[%s1611] sm:$0xf]
      %v1613 = vld [vmem:[%s1611 + $0x4] sm:$0xf]
      %v1614 = vld [vmem:[%s1611 + $0x8] sm:$0xf]
      %v1615 = vld [vmem:[%s1611 + $0xc] sm:$0xf]
      %v1616 = vld [vmem:[%s1611 + $0x10] sm:$0xf]
      %v1617 = vld [vmem:[%s1611 + $0x14] sm:$0xf]
      %v1618 = vld [vmem:[%s1611 + $0x18] sm:$0xf]
      %v1619 = vld [vmem:[%s1611 + $0x1c] sm:$0xf]
      %v1620 = vld [vmem:[%s1611 + $0x20] sm:$0xf]
      %v1621 = vld [vmem:[%s1611 + $0x24] sm:$0xf]
      %v1622 = vld [vmem:[%s1611 + $0x28] sm:$0xf]
      %v1623 = vld [vmem:[%s1611 + $0x2c] sm:$0xf]
      %v1624 = vld [vmem:[%s1611 + $0x30] sm:$0xf]
      %v1625 = vld [vmem:[%s1611 + $0x34] sm:$0xf]
      %v1626 = vld [vmem:[%s1611 + $0x38] sm:$0xf]
      %v1627 = vld [vmem:[%s1611 + $0x3c] sm:$0xf]
      %v1644 = vunpack.c.l.b16 %v1612
      %v1645 = vunpack.c.l.b16 %v1613
      %v1646 = vunpack.c.l.b16 %v1614
      %v1647 = vunpack.c.l.b16 %v1615
      %v1648 = vunpack.c.l.b16 %v1616
      %v1649 = vunpack.c.l.b16 %v1617
      %v1650 = vunpack.c.l.b16 %v1618
      %v1651 = vunpack.c.l.b16 %v1619
      %v1652 = vunpack.c.l.b16 %v1620
      %v1653 = vunpack.c.l.b16 %v1621
      %v1654 = vunpack.c.l.b16 %v1622
      %v1655 = vunpack.c.l.b16 %v1623
      %v1656 = vunpack.c.l.b16 %v1624
      %v1657 = vunpack.c.l.b16 %v1625
      %v1658 = vunpack.c.l.b16 %v1626
      %v1659 = vunpack.c.l.b16 %v1627
      %v1660 = vpack.c.b16 %v1645, %v1644
      %v1661 = vpack.c.b16 %v1647, %v1646
      %v1662 = vpack.c.b16 %v1649, %v1648
      %v1663 = vpack.c.b16 %v1651, %v1650
      %v1664 = vpack.c.b16 %v1653, %v1652
      %v1665 = vpack.c.b16 %v1655, %v1654
      %v1666 = vpack.c.b16 %v1657, %v1656
      %v1667 = vpack.c.b16 %v1659, %v1658
      %1676 = vmatprep.subr.bf16.mxu0 0
      %1677 = vmatpush1.bf16.msra.mxu0 %v1660
      %1678 = vmatprep.subr.bf16.mxu0 0
      %1679 = vmatpush1.bf16.msra.mxu0 %v1661
      %1680 = vmatprep.subr.bf16.mxu0 0
      %1681 = vmatpush1.bf16.msra.mxu0 %v1662
      %1682 = vmatprep.subr.bf16.mxu0 0
      %1683 = vmatpush1.bf16.msra.mxu0 %v1663
      %1684 = vmatprep.subr.bf16.mxu0 0
      %1685 = vmatpush1.bf16.msra.mxu0 %v1664
      %1686 = vmatprep.subr.bf16.mxu0 0
      %1687 = vmatpush1.bf16.msra.mxu0 %v1665
      %1688 = vmatprep.subr.bf16.mxu0 0
      %1689 = vmatpush1.bf16.msra.mxu0 %v1666
      %1690 = vmatprep.subr.bf16.mxu0 0
      %1691 = vmatpush1.bf16.msra.mxu0 %v1667
      %1692 = vmatprep.subr.bf16.mxu0 0
      %1693 = vmatpush1.bf16.msra.mxu0 0
      %1694 = vmatprep.subr.bf16.mxu0 0
      %1695 = vmatpush1.bf16.msra.mxu0 0
      %1696 = vmatprep.subr.bf16.mxu0 0
      %1697 = vmatpush1.bf16.msra.mxu0 0
      %1698 = vmatprep.subr.bf16.mxu0 0
      %1699 = vmatpush1.bf16.msra.mxu0 0
      %1700 = vmatprep.subr.bf16.mxu0 0
      %1701 = vmatpush1.bf16.msra.mxu0 0
      %1702 = vmatprep.subr.bf16.mxu0 0
      %1703 = vmatpush1.bf16.msra.mxu0 0
      %1704 = vmatprep.subr.bf16.mxu0 0
      %1705 = vmatpush1.bf16.msra.mxu0 0
      %1706 = vmatprep.subr.bf16.mxu0 0
      %1707 = vmatpush1.bf16.msra.mxu0 0
      %1708 = vmatprep.mubr.bf16.mxu0 0
      %1709 = vmatmul.mubr.bf16.gmra.mrb[0].mxu0 %v1607
      %v1710 = vpop.f32.mrb[0].mxu0
      %v1711 = vadd.f32 0.0, %v1710
      %v1712 = vpop.f32.mrb[0].mxu0
      %v1713 = vpop.f32.mrb[0].mxu0
      %v1714 = vadd.f32 0.0, %v1713
      %v1715 = vpop.f32.mrb[0].mxu0
      %1716 = vmatprep.mubr.bf16.mxu0 0
      %1717 = vmatmul.mubr.bf16.gmra.mrb[0].mxu0 %v1608
      %v1718 = vpop.f32.mrb[0].mxu0
      %v1719 = vadd.f32 0.0, %v1718
      %v1720 = vpop.f32.mrb[0].mxu0
      %v1721 = vpop.f32.mrb[0].mxu0
      %v1722 = vadd.f32 0.0, %v1721
      %v1723 = vpop.f32.mrb[0].mxu0
      %1724 = vmatprep.mubr.bf16.mxu0 0
      %1725 = vmatmul.mubr.bf16.gmra.mrb[0].mxu0 %v1609
      %v1726 = vpop.f32.mrb[0].mxu0
      %v1727 = vadd.f32 0.0, %v1726
      %v1728 = vpop.f32.mrb[0].mxu0
      %v1729 = vpop.f32.mrb[0].mxu0
      %v1730 = vadd.f32 0.0, %v1729
      %v1731 = vpop.f32.mrb[0].mxu0
      %1732 = vmatprep.mubr.bf16.mxu0 0
      %1733 = vmatmul.mubr.bf16.gmra.mrb[0].mxu0 %v1610
      %v1734 = vpop.f32.mrb[0].mxu0
      %v1735 = vadd.f32 0.0, %v1734
      %v1736 = vpop.f32.mrb[0].mxu0
      %v1737 = vpop.f32.mrb[0].mxu0
      %v1738 = vadd.f32 0.0, %v1737
      %v1739 = vpop.f32.mrb[0].mxu0
      %1740 = vdwg.mxu0
      %v1741 = vadd.f32 %v1551, %v1711
      %v1742 = vadd.f32 %v1552, %v1714
      %v1743 = vadd.f32 %v1553, %v1719
      %v1744 = vadd.f32 %v1554, %v1722
      %v1745 = vadd.f32 %v1555, %v1727
      %v1746 = vadd.f32 %v1556, %v1730
      %v1747 = vadd.f32 %v1557, %v1735
      %v1748 = vadd.f32 %v1558, %v1738
      %v1749 = vrot.slane %v1401, 2
      %v1750 = vrot.slane %v1402, 2
      %v1751 = vsel %vm664, %v1749, %v1750
      %v1752 = vrot.slane %v1403, 2
      %v1753 = vrot.slane %v1404, 2
      %v1754 = vsel %vm664, %v1752, %v1753
      %v1755 = vrot.slane %v1405, 2
      %v1756 = vrot.slane %v1406, 2
      %v1757 = vsel %vm664, %v1755, %v1756
      %v1758 = vrot.slane %v1407, 2
      %v1759 = vrot.slane %v1408, 2
      %v1760 = vsel %vm664, %v1758, %v1759
      %v1761 = vrot.slane %v1409, 2
      %v1762 = vrot.slane %v1410, 2
      %v1763 = vsel %vm664, %v1761, %v1762
      %v1764 = vrot.slane %v1411, 2
      %v1765 = vrot.slane %v1412, 2
      %v1766 = vsel %vm664, %v1764, %v1765
      %v1767 = vrot.slane %v1413, 2
      %v1768 = vrot.slane %v1414, 2
      %v1769 = vsel %vm664, %v1767, %v1768
      %v1770 = vrot.slane %v1415, 2
      %v1771 = vrot.slane %v1416, 2
      %v1772 = vsel %vm664, %v1770, %v1771
      %v1781 = vpack.c.bf16 %v1754, %v1751
      %v1782 = vpack.c.bf16 %v1760, %v1757
      %v1783 = vpack.c.bf16 %v1766, %v1763
      %v1784 = vpack.c.bf16 %v1772, %v1769
      %s1785 = scalar_lea.vmem %s1, 512
      %v1786 = vld [vmem:[%s1785] sm:$0xf]
      %v1787 = vld [vmem:[%s1785 + $0x4] sm:$0xf]
      %v1788 = vld [vmem:[%s1785 + $0x8] sm:$0xf]
      %v1789 = vld [vmem:[%s1785 + $0xc] sm:$0xf]
      %v1790 = vld [vmem:[%s1785 + $0x10] sm:$0xf]
      %v1791 = vld [vmem:[%s1785 + $0x14] sm:$0xf]
      %v1792 = vld [vmem:[%s1785 + $0x18] sm:$0xf]
      %v1793 = vld [vmem:[%s1785 + $0x1c] sm:$0xf]
      %v1794 = vld [vmem:[%s1785 + $0x20] sm:$0xf]
      %v1795 = vld [vmem:[%s1785 + $0x24] sm:$0xf]
      %v1796 = vld [vmem:[%s1785 + $0x28] sm:$0xf]
      %v1797 = vld [vmem:[%s1785 + $0x2c] sm:$0xf]
      %v1798 = vld [vmem:[%s1785 + $0x30] sm:$0xf]
      %v1799 = vld [vmem:[%s1785 + $0x34] sm:$0xf]
      %v1800 = vld [vmem:[%s1785 + $0x38] sm:$0xf]
      %v1801 = vld [vmem:[%s1785 + $0x3c] sm:$0xf]
      %v1818 = vunpack.c.l.b16 %v1786
      %v1819 = vunpack.c.l.b16 %v1787
      %v1820 = vunpack.c.l.b16 %v1788
      %v1821 = vunpack.c.l.b16 %v1789
      %v1822 = vunpack.c.l.b16 %v1790
      %v1823 = vunpack.c.l.b16 %v1791
      %v1824 = vunpack.c.l.b16 %v1792
      %v1825 = vunpack.c.l.b16 %v1793
      %v1826 = vunpack.c.l.b16 %v1794
      %v1827 = vunpack.c.l.b16 %v1795
      %v1828 = vunpack.c.l.b16 %v1796
      %v1829 = vunpack.c.l.b16 %v1797
      %v1830 = vunpack.c.l.b16 %v1798
      %v1831 = vunpack.c.l.b16 %v1799
      %v1832 = vunpack.c.l.b16 %v1800
      %v1833 = vunpack.c.l.b16 %v1801
      %v1834 = vpack.c.b16 %v1819, %v1818
      %v1835 = vpack.c.b16 %v1821, %v1820
      %v1836 = vpack.c.b16 %v1823, %v1822
      %v1837 = vpack.c.b16 %v1825, %v1824
      %v1838 = vpack.c.b16 %v1827, %v1826
      %v1839 = vpack.c.b16 %v1829, %v1828
      %v1840 = vpack.c.b16 %v1831, %v1830
      %v1841 = vpack.c.b16 %v1833, %v1832
      %1850 = vmatprep.subr.bf16.mxu0 0
      %1851 = vmatpush1.bf16.msra.mxu0 %v1834
      %1852 = vmatprep.subr.bf16.mxu0 0
      %1853 = vmatpush1.bf16.msra.mxu0 %v1835
      %1854 = vmatprep.subr.bf16.mxu0 0
      %1855 = vmatpush1.bf16.msra.mxu0 %v1836
      %1856 = vmatprep.subr.bf16.mxu0 0
      %1857 = vmatpush1.bf16.msra.mxu0 %v1837
      %1858 = vmatprep.subr.bf16.mxu0 0
      %1859 = vmatpush1.bf16.msra.mxu0 %v1838
      %1860 = vmatprep.subr.bf16.mxu0 0
      %1861 = vmatpush1.bf16.msra.mxu0 %v1839
      %1862 = vmatprep.subr.bf16.mxu0 0
      %1863 = vmatpush1.bf16.msra.mxu0 %v1840
      %1864 = vmatprep.subr.bf16.mxu0 0
      %1865 = vmatpush1.bf16.msra.mxu0 %v1841
      %1866 = vmatprep.subr.bf16.mxu0 0
      %1867 = vmatpush1.bf16.msra.mxu0 0
      %1868 = vmatprep.subr.bf16.mxu0 0
      %1869 = vmatpush1.bf16.msra.mxu0 0
      %1870 = vmatprep.subr.bf16.mxu0 0
      %1871 = vmatpush1.bf16.msra.mxu0 0
      %1872 = vmatprep.subr.bf16.mxu0 0
      %1873 = vmatpush1.bf16.msra.mxu0 0
      %1874 = vmatprep.subr.bf16.mxu0 0
      %1875 = vmatpush1.bf16.msra.mxu0 0
      %1876 = vmatprep.subr.bf16.mxu0 0
      %1877 = vmatpush1.bf16.msra.mxu0 0
      %1878 = vmatprep.subr.bf16.mxu0 0
      %1879 = vmatpush1.bf16.msra.mxu0 0
      %1880 = vmatprep.subr.bf16.mxu0 0
      %1881 = vmatpush1.bf16.msra.mxu0 0
      %1882 = vmatprep.mubr.bf16.mxu0 0
      %1883 = vmatmul.mubr.bf16.gmra.mrb[0].mxu0 %v1781
      %v1884 = vpop.f32.mrb[0].mxu0
      %v1885 = vadd.f32 0.0, %v1884
      %v1886 = vpop.f32.mrb[0].mxu0
      %v1887 = vpop.f32.mrb[0].mxu0
      %v1888 = vadd.f32 0.0, %v1887
      %v1889 = vpop.f32.mrb[0].mxu0
      %1890 = vmatprep.mubr.bf16.mxu0 0
      %1891 = vmatmul.mubr.bf16.gmra.mrb[0].mxu0 %v1782
      %v1892 = vpop.f32.mrb[0].mxu0
      %v1893 = vadd.f32 0.0, %v1892
      %v1894 = vpop.f32.mrb[0].mxu0
      %v1895 = vpop.f32.mrb[0].mxu0
      %v1896 = vadd.f32 0.0, %v1895
      %v1897 = vpop.f32.mrb[0].mxu0
      %1898 = vmatprep.mubr.bf16.mxu0 0
      %1899 = vmatmul.mubr.bf16.gmra.mrb[0].mxu0 %v1783
      %v1900 = vpop.f32.mrb[0].mxu0
      %v1901 = vadd.f32 0.0, %v1900
      %v1902 = vpop.f32.mrb[0].mxu0
      %v1903 = vpop.f32.mrb[0].mxu0
      %v1904 = vadd.f32 0.0, %v1903
      %v1905 = vpop.f32.mrb[0].mxu0
      %1906 = vmatprep.mubr.bf16.mxu0 0
      %1907 = vmatmul.mubr.bf16.gmra.mrb[0].mxu0 %v1784
      %v1908 = vpop.f32.mrb[0].mxu0
      %v1909 = vadd.f32 0.0, %v1908
      %v1910 = vpop.f32.mrb[0].mxu0
      %v1911 = vpop.f32.mrb[0].mxu0
      %v1912 = vadd.f32 0.0, %v1911
      %v1913 = vpop.f32.mrb[0].mxu0
      %1914 = vdwg.mxu0
      %v1915 = vadd.f32 %v1741, %v1885
      %v1916 = vadd.f32 %v1742, %v1888
      %v1917 = vadd.f32 %v1743, %v1893
      %v1918 = vadd.f32 %v1744, %v1896
      %v1919 = vadd.f32 %v1745, %v1901
      %v1920 = vadd.f32 %v1746, %v1904
      %v1921 = vadd.f32 %v1747, %v1909
      %v1922 = vadd.f32 %v1748, %v1912
      %v1923 = vld [vmem:[%s2] sm:$0x1]
      %v1925 = vlaneseq
      %v1926 = vshrl.u32 %v1925, 7
      %v1927 = vsub.s32 0, %v1926
      %v1928 = vrot.slane %v1923, %v1927
      %v1930 = vadd.f32 %v1915, %v1928
      %v1931 = vadd.f32 %v1916, %v1928
      %v1932 = vadd.f32 %v1917, %v1928
      %v1933 = vadd.f32 %v1918, %v1928
      %v1934 = vadd.f32 %v1919, %v1928
      %v1935 = vadd.f32 %v1920, %v1928
      %v1936 = vadd.f32 %v1921, %v1928
      %v1937 = vadd.f32 %v1922, %v1928
      %v1938 = vld [vmem:[%s299] sm:$0xf]
      %v1939 = vld [vmem:[%s299 + $0x4] sm:$0xf]
      %v1940 = vld [vmem:[%s299 + $0x8] sm:$0xf]
      %v1941 = vld [vmem:[%s299 + $0xc] sm:$0xf]
      %v1942 = vld [vmem:[%s299 + $0x10] sm:$0xf]
      %v1943 = vld [vmem:[%s299 + $0x14] sm:$0xf]
      %v1944 = vld [vmem:[%s299 + $0x18] sm:$0xf]
      %v1945 = vld [vmem:[%s299 + $0x1c] sm:$0xf]
      %v1946 = vunpack.c.l.bf16 %v1938
      %v1947 = vunpack.c.l.bf16 %v1939
      %v1948 = vunpack.c.l.bf16 %v1940
      %v1949 = vunpack.c.l.bf16 %v1941
      %v1950 = vunpack.c.l.bf16 %v1942
      %v1951 = vunpack.c.l.bf16 %v1943
      %v1952 = vunpack.c.l.bf16 %v1944
      %v1953 = vunpack.c.l.bf16 %v1945
      %v1954 = vpack.c.bf16 %v1947, %v1946
      %v1955 = vpack.c.bf16 %v1949, %v1948
      %v1956 = vpack.c.bf16 %v1951, %v1950
      %v1957 = vpack.c.bf16 %v1953, %v1952
      %v1958 = vld [vmem:[%s4] sm:$0xf]
      %v1959 = vld [vmem:[%s4 + $0x4] sm:$0xf]
      %v1960 = vld [vmem:[%s4 + $0x8] sm:$0xf]
      %v1961 = vld [vmem:[%s4 + $0xc] sm:$0xf]
      %v1962 = vld [vmem:[%s4 + $0x10] sm:$0xf]
      %v1963 = vld [vmem:[%s4 + $0x14] sm:$0xf]
      %v1964 = vld [vmem:[%s4 + $0x18] sm:$0xf]
      %v1965 = vld [vmem:[%s4 + $0x1c] sm:$0xf]
      %v1966 = vld [vmem:[%s4 + $0x20] sm:$0xf]
      %v1967 = vld [vmem:[%s4 + $0x24] sm:$0xf]
      %v1968 = vld [vmem:[%s4 + $0x28] sm:$0xf]
      %v1969 = vld [vmem:[%s4 + $0x2c] sm:$0xf]
      %v1970 = vld [vmem:[%s4 + $0x30] sm:$0xf]
      %v1971 = vld [vmem:[%s4 + $0x34] sm:$0xf]
      %v1972 = vld [vmem:[%s4 + $0x38] sm:$0xf]
      %v1973 = vld [vmem:[%s4 + $0x3c] sm:$0xf]
      %v1990 = vunpack.c.l.b16 %v1958
      %v1991 = vunpack.c.l.b16 %v1959
      %v1992 = vunpack.c.l.b16 %v1960
      %v1993 = vunpack.c.l.b16 %v1961
      %v1994 = vunpack.c.l.b16 %v1962
      %v1995 = vunpack.c.l.b16 %v1963
      %v1996 = vunpack.c.l.b16 %v1964
      %v1997 = vunpack.c.l.b16 %v1965
      %v1998 = vunpack.c.l.b16 %v1966
      %v1999 = vunpack.c.l.b16 %v1967
      %v2000 = vunpack.c.l.b16 %v1968
      %v2001 = vunpack.c.l.b16 %v1969
      %v2002 = vunpack.c.l.b16 %v1970
      %v2003 = vunpack.c.l.b16 %v1971
      %v2004 = vunpack.c.l.b16 %v1972
      %v2005 = vunpack.c.l.b16 %v1973
      %v2006 = vpack.c.b16 %v1991, %v1990
      %v2007 = vpack.c.b16 %v1993, %v1992
      %v2008 = vpack.c.b16 %v1995, %v1994
      %v2009 = vpack.c.b16 %v1997, %v1996
      %v2010 = vpack.c.b16 %v1999, %v1998
      %v2011 = vpack.c.b16 %v2001, %v2000
      %v2012 = vpack.c.b16 %v2003, %v2002
      %v2013 = vpack.c.b16 %v2005, %v2004
      %2022 = vmatprep.subr.bf16.mxu0 0
      %2023 = vmatpush1.bf16.msra.mxu0 %v2006
      %2024 = vmatprep.subr.bf16.mxu0 0
      %2025 = vmatpush1.bf16.msra.mxu0 %v2007
      %2026 = vmatprep.subr.bf16.mxu0 0
      %2027 = vmatpush1.bf16.msra.mxu0 %v2008
      %2028 = vmatprep.subr.bf16.mxu0 0
      %2029 = vmatpush1.bf16.msra.mxu0 %v2009
      %2030 = vmatprep.subr.bf16.mxu0 0
      %2031 = vmatpush1.bf16.msra.mxu0 %v2010
      %2032 = vmatprep.subr.bf16.mxu0 0
      %2033 = vmatpush1.bf16.msra.mxu0 %v2011
      %2034 = vmatprep.subr.bf16.mxu0 0
      %2035 = vmatpush1.bf16.msra.mxu0 %v2012
      %2036 = vmatprep.subr.bf16.mxu0 0
      %2037 = vmatpush1.bf16.msra.mxu0 %v2013
      %2038 = vmatprep.subr.bf16.mxu0 0
      %2039 = vmatpush1.bf16.msra.mxu0 0
      %2040 = vmatprep.subr.bf16.mxu0 0
      %2041 = vmatpush1.bf16.msra.mxu0 0
      %2042 = vmatprep.subr.bf16.mxu0 0
      %2043 = vmatpush1.bf16.msra.mxu0 0
      %2044 = vmatprep.subr.bf16.mxu0 0
      %2045 = vmatpush1.bf16.msra.mxu0 0
      %2046 = vmatprep.subr.bf16.mxu0 0
      %2047 = vmatpush1.bf16.msra.mxu0 0
      %2048 = vmatprep.subr.bf16.mxu0 0
      %2049 = vmatpush1.bf16.msra.mxu0 0
      %2050 = vmatprep.subr.bf16.mxu0 0
      %2051 = vmatpush1.bf16.msra.mxu0 0
      %2052 = vmatprep.subr.bf16.mxu0 0
      %2053 = vmatpush1.bf16.msra.mxu0 0
      %2054 = vmatprep.mubr.bf16.mxu0 0
      %2055 = vmatmul.mubr.bf16.gmra.mrb[0].mxu0 %v1954
      %v2056 = vpop.f32.mrb[0].mxu0
      %v2057 = vadd.f32 0.0, %v2056
      %v2058 = vpop.f32.mrb[0].mxu0
      %v2059 = vpop.f32.mrb[0].mxu0
      %v2060 = vadd.f32 0.0, %v2059
      %v2061 = vpop.f32.mrb[0].mxu0
      %2062 = vmatprep.mubr.bf16.mxu0 0
      %2063 = vmatmul.mubr.bf16.gmra.mrb[0].mxu0 %v1955
      %v2064 = vpop.f32.mrb[0].mxu0
      %v2065 = vadd.f32 0.0, %v2064
      %v2066 = vpop.f32.mrb[0].mxu0
      %v2067 = vpop.f32.mrb[0].mxu0
      %v2068 = vadd.f32 0.0, %v2067
      %v2069 = vpop.f32.mrb[0].mxu0
      %2070 = vmatprep.mubr.bf16.mxu0 0
      %2071 = vmatmul.mubr.bf16.gmra.mrb[0].mxu0 %v1956
      %v2072 = vpop.f32.mrb[0].mxu0
      %v2073 = vadd.f32 0.0, %v2072
      %v2074 = vpop.f32.mrb[0].mxu0
      %v2075 = vpop.f32.mrb[0].mxu0
      %v2076 = vadd.f32 0.0, %v2075
      %v2077 = vpop.f32.mrb[0].mxu0
      %2078 = vmatprep.mubr.bf16.mxu0 0
      %2079 = vmatmul.mubr.bf16.gmra.mrb[0].mxu0 %v1957
      %v2080 = vpop.f32.mrb[0].mxu0
      %v2081 = vadd.f32 0.0, %v2080
      %v2082 = vpop.f32.mrb[0].mxu0
      %v2083 = vpop.f32.mrb[0].mxu0
      %v2084 = vadd.f32 0.0, %v2083
      %v2085 = vpop.f32.mrb[0].mxu0
      %2086 = vdwg.mxu0
      %v2087 = vadd.f32 %v1930, %v2057
      %v2088 = vadd.f32 %v1931, %v2060
      %v2089 = vadd.f32 %v1932, %v2065
      %v2090 = vadd.f32 %v1933, %v2068
      %v2091 = vadd.f32 %v1934, %v2073
      %v2092 = vadd.f32 %v1935, %v2076
      %v2093 = vadd.f32 %v1936, %v2081
      %v2094 = vadd.f32 %v1937, %v2084
      %v2095 = vld [vmem:[%s5] sm:$0x1]
      %v2097 = vlaneseq
      %v2098 = vshrl.u32 %v2097, 7
      %v2099 = vsub.s32 0, %v2098
      %v2100 = vrot.slane %v2095, %v2099
      %v2102 = vadd.f32 %v2087, %v2100
      %v2103 = vadd.f32 %v2088, %v2100
      %v2104 = vadd.f32 %v2089, %v2100
      %v2105 = vadd.f32 %v2090, %v2100
      %v2106 = vadd.f32 %v2091, %v2100
      %v2107 = vadd.f32 %v2092, %v2100
      %v2108 = vadd.f32 %v2093, %v2100
      %v2109 = vadd.f32 %v2094, %v2100
      %v2110 = vmax.f32 %v2102, 0.0
      %v2111 = vmax.f32 %v2103, 0.0
      %v2112 = vmax.f32 %v2104, 0.0
      %v2113 = vmax.f32 %v2105, 0.0
      %v2114 = vmax.f32 %v2106, 0.0
      %v2115 = vmax.f32 %v2107, 0.0
      %v2116 = vmax.f32 %v2108, 0.0
      %v2117 = vmax.f32 %v2109, 0.0
      %2118 = vst [vmem:[%s309] sm:$0xff] %v2110
      %2119 = vst [vmem:[%s309 + $0x8] sm:$0xff] %v2111
      %2120 = vst [vmem:[%s309 + $0x10] sm:$0xff] %v2112
      %2121 = vst [vmem:[%s309 + $0x18] sm:$0xff] %v2113
      %2122 = vst [vmem:[%s309 + $0x20] sm:$0xff] %v2114
      %2123 = vst [vmem:[%s309 + $0x28] sm:$0xff] %v2115
      %2124 = vst [vmem:[%s309 + $0x30] sm:$0xff] %v2116
      %2125 = vst [vmem:[%s309 + $0x38] sm:$0xff] %v2117
      %s2126 = smul.u32 8, %s22
      %p2127 = scmp.lt.s32.totalorder %s21, 1
      %s2128 = scalar_select %p2127, %s21, 1
      %p2129 = scmp.lt.s32.totalorder %s2126, 7
      %s2130 = scalar_select %p2129, %s2126, 7
      %s2131 = smul.addr %s2128, 8
      %s2132 = sadd.s32 %s2130, %s2131
      %s2133 = smul.addr %s2132, 8
      %s2134 = scalar_lea.vmem %s6, %s2133
      // Predicated region
      $region45: #{basic_block_forward.3} parent=43 // pred_check
        %p2135 = pneg %p187
      $region46: #{basic_block_forward.3} parent=43 // pred_check_branch
        %2137 = sbr.rel (%p2135) target = $region48
      $region47: #{basic_block_forward.3} parent=43 // pred_region
        %s2138 = smul.u32 8, %s22
      $region48: #{basic_block_forward.3} parent=43 // pred_fallthru
        _
    $region44: #{basic_block_forward.3} parent=5 // pred_fallthru
      _
    %p2139 = scmp.le.s32.totalorder 2, %s12
    // Predicated region
    $region49: #{basic_block_forward.3} parent=5 // pred_check
      %p2140 = pneg %p2139
    $region50: #{basic_block_forward.3} parent=5 // pred_check_branch
      %2142 = sbr.rel (%p2140) target = $region52
    $region51: #{basic_block_forward.3} parent=5 // pred_region
      %s2143 = ssub.s32 %s12, 2
      // Predicated region
      $region53: #{basic_block_forward.3} parent=51 // pred_check
        %p2144 = pneg %p193
      $region54: #{basic_block_forward.3} parent=51 // pred_check_branch
        %2146 = sbr.rel (%p2144) target = $region56
      $region55: #{basic_block_forward.3} parent=51 // pred_region
        %s2147 = smul.u32 8, %s24
        %p2148 = scmp.lt.s32.totalorder %s23, 1
        %s2149 = scalar_select %p2148, %s23, 1
        %p2150 = scmp.lt.s32.totalorder %s2147, 7
        %s2151 = scalar_select %p2150, %s2147, 7
        %s2152 = smul.addr %s2149, 8
        %s2153 = sadd.s32 %s2151, %s2152
        %s2154 = smul.addr %s2153, 8
        %s2155 = scalar_lea.vmem %s6, %s2154
      $region56: #{basic_block_forward.3} parent=51 // pred_fallthru
        _
    $region52: #{basic_block_forward.3} parent=5 // pred_fallthru
      _
  $region6: #{basic_block_forward.3} parent=0 // loop_footer
    %s16 = sadd.s32 1, %s12
  $region7: #{basic_block_forward.3} parent=0 // loop_footer_branch
    %11 = sbr.rel target = $region3
  $region8: #{basic_block_forward.3} parent=0 // loop_exit
    _

</llo_original>
